<compile_context>
chip_gen: v6e
topology: v6e:2x2x1
jax: 0.10.0
libtpu: 0.0.40
codegen_flags: <defaults>
</compile_context>

<pallas_src>
import functools

import jax
import jax.numpy as jnp
from jax import lax
from jax.experimental import pallas as pl
from jax.experimental.pallas import tpu as pltpu


# ----------------------------------------------------------------------------
# Pallas kernel: one LSTM layer (fwd [+ bwd]), time-chunked grid, carries in VMEM scratch.
#   inputs : gih_d (Tc, B, 4H) per direction  (x @ W_ih^T + b_ih + b_hh, hoisted),
#            whh_d (H, 4H) per direction      (W_hh^T)
#   outputs: hseq_d (Tc, B, H) per direction (only if need_seq), hlast (dirs, B, H)
#   scratch: h_scr, c_scr  (dirs, B, H) f32   (persist across grid steps)
# ----------------------------------------------------------------------------
def _lstm_layer_kernel(*refs, hidden, dirs, need_seq, time_chunk):
    gih_refs = refs[:dirs]
    whh_refs = refs[dirs:2 * dirs]
    n_seq = dirs if need_seq else 0
    hseq_refs = refs[2 * dirs:2 * dirs + n_seq]
    hlast_ref = refs[2 * dirs + n_seq]
    h_scr = refs[2 * dirs + n_seq + 1]
    c_scr = refs[2 * dirs + n_seq + 2]

    H = hidden
    Tc = time_chunk
    k = pl.program_id(0)
    nk = pl.num_programs(0)

    # Initialize the persistent carries on the first time chunk only.
    @pl.when(k == 0)
    def _():
        h_scr[...] = jnp.zeros_like(h_scr)
        c_scr[...] = jnp.zeros_like(c_scr)

    def cell(gates, c_prev):
        # NOTE: with H=32 these are sub-128-lane slices; at production keep H a multiple
        # of 128 so each gate slice is a whole-vreg operand.
        i = jax.nn.sigmoid(gates[:, 0 * H:1 * H])
        f = jax.nn.sigmoid(gates[:, 1 * H:2 * H])
        g = jnp.tanh(gates[:, 2 * H:3 * H])
        o = jax.nn.sigmoid(gates[:, 3 * H:4 * H])
        c_new = f * c_prev + i * g
        h_new = o * jnp.tanh(c_new)
        return h_new, c_new

    def step(s, carry):
        hs, cs = carry  # tuples of per-direction (B, H) f32 values (kept in vregs)
        new_h, new_c = [], []
        for d in range(dirs):
            # fwd reads local index s; bwd reads Tc-1-s (its chunk is the time-reversed
            # chunk via the BlockSpec index_map), so the reversal costs no data movement.
            s_loc = s if d == 0 else Tc - 1 - s
            rec = jnp.dot(hs[d].astype(whh_refs[d].dtype), whh_refs[d][...],
                          preferred_element_type=jnp.float32)          # (B, 4H)
            gates = rec + gih_refs[d][s_loc]
            h_new, c_new = cell(gates, cs[d])
            if need_seq:
                hseq_refs[d][s_loc] = h_new
            new_h.append(h_new)
            new_c.append(c_new)
        return tuple(new_h), tuple(new_c)

    carry0 = (tuple(h_scr[d] for d in range(dirs)),
              tuple(c_scr[d] for d in range(dirs)))
    if Tc <= 16:
        # Toy / tiny chunks: full static unroll (max scheduler visibility, no reg pressure).
        carry = carry0
        for s in range(Tc):
            carry = step(s, carry)
    else:
        # Production chunks: bounded live ranges + moderate unroll for LLO visibility.
        carry = lax.fori_loop(0, Tc, step, carry0, unroll=8)

    hs, cs = carry
    for d in range(dirs):
        h_scr[d] = hs[d]
        c_scr[d] = cs[d]

    # Final hidden state written exactly once, on the last time chunk.
    @pl.when(k == nk - 1)
    def _():
        for d in range(dirs):
            hlast_ref[d] = hs[d]


def _choose_time_chunk(T, B, H, dirs, need_seq, budget_bytes):
    """Largest divisor of T whose double-buffered per-chunk footprint fits the budget."""
    bytes_per_t = dirs * B * 4 * H * 4                    # gih (f32)
    if need_seq:
        bytes_per_t += dirs * B * H * 4                   # hseq
    bytes_per_t *= 2                                      # BlockSpec double-buffering
    max_tc = max(1, budget_bytes // max(bytes_per_t, 1))
    tc = 1
    for cand in range(1, T + 1):
        if T % cand == 0 and cand <= max_tc:
            tc = cand
    # TODO(synk): for T with no good divisor (e.g. prime), pad/mask a ragged last chunk
    # instead of falling back to tiny chunks.
    return tc


def lstm_layer_fused(gih_list, whh_list, *, hidden, need_seq, budget_bytes):
    """One LSTM layer (fwd [+ bwd]) as a single time-chunked pallas_call."""
    dirs = len(gih_list)
    T, B, _ = gih_list[0].shape
    H = hidden
    Tc = _choose_time_chunk(T, B, H, dirs, need_seq, budget_bytes)
    nk = T // Tc

    in_specs = []
    for d in range(dirs):
        if d == 0:
            in_specs.append(pl.BlockSpec((Tc, B, 4 * H), lambda k: (k, 0, 0)))
        else:  # backward direction walks the time chunks in reverse
            in_specs.append(pl.BlockSpec((Tc, B, 4 * H),
                                         lambda k, n=nk: (n - 1 - k, 0, 0)))
    for _ in range(dirs):
        in_specs.append(pl.BlockSpec((H, 4 * H), lambda k: (0, 0)))

    out_shape, out_specs = [], []
    if need_seq:
        out_shape.append(jax.ShapeDtypeStruct((T, B, H), jnp.float32))
        out_specs.append(pl.BlockSpec((Tc, B, H), lambda k: (k, 0, 0)))
        if dirs == 2:
            out_shape.append(jax.ShapeDtypeStruct((T, B, H), jnp.float32))
            out_specs.append(pl.BlockSpec((Tc, B, H),
                                          lambda k, n=nk: (n - 1 - k, 0, 0)))
    out_shape.append(jax.ShapeDtypeStruct((dirs, B, H), jnp.float32))
    out_specs.append(pl.BlockSpec((dirs, B, H), lambda k: (0, 0, 0)))

    w_itemsize = jnp.dtype(whh_list[0].dtype).itemsize
    vmem_use = (2 * dirs * Tc * B * 4 * H * 4                       # gih (dbl-buffered)
                + (2 * dirs * Tc * B * H * 4 if need_seq else 0)    # hseq (dbl-buffered)
                + 2 * dirs * H * 4 * H * w_itemsize                 # whh
                + 2 * dirs * B * H * 4                              # hlast
                + 2 * dirs * B * H * 4)                             # carries
    # 1.5x headroom for compiler temporaries; raise the budget on v5e/v6e (128 MiB VMEM),
    # keep it conservative for v7x (64 MiB).
    vmem_limit = min(100 * 1024 * 1024,
                     max(32 * 1024 * 1024, int(vmem_use * 1.5) + (1 << 20)))

    kernel = functools.partial(_lstm_layer_kernel, hidden=H, dirs=dirs,
                               need_seq=need_seq, time_chunk=Tc)
    outs = pl.pallas_call(
        kernel,
        out_shape=tuple(out_shape),
        grid=(nk,),
        in_specs=in_specs,
        out_specs=tuple(out_specs),
        scratch_shapes=[pltpu.VMEM((dirs, B, H), jnp.float32),
                        pltpu.VMEM((dirs, B, H), jnp.float32)],
        compiler_params=pltpu.CompilerParams(
            dimension_semantics=("arbitrary",),          # time is a serial recurrence
            vmem_limit_bytes=vmem_limit),
    )(*gih_list, *whh_list)
    if not isinstance(outs, (tuple, list)):
        outs = (outs,)
    return outs


# ----------------------------------------------------------------------------
# Input projection, hoisted out of the recurrence (one big MXU-friendly matmul in XLA).
# `parts` are arrays whose concat along the last dim is the layer input; projecting each
# part separately avoids materializing the concatenated (T, B, dirs*H) intermediate.
# ----------------------------------------------------------------------------
def _input_projection(parts, w_ih, bias, matmul_dtype):
    off = 0
    acc = None
    for p in parts:
        w_slice = w_ih[:, off:off + p.shape[-1]]          # (4H, Din_part)
        term = jnp.einsum("tbd,gd->tbg",
                          p.astype(matmul_dtype), w_slice.astype(matmul_dtype),
                          preferred_element_type=jnp.float32)
        acc = term if acc is None else acc + term
        off += p.shape[-1]
    return acc + bias


# ----------------------------------------------------------------------------
# Full forward pass (mirrors VariableLSTMNet.forward with zero-initialized h0/c0)
# ----------------------------------------------------------------------------
def variable_lstm_net_forward(x, params, *, num_layers, bidirectional, hidden_size,
                              matmul_dtype=jnp.float32,
                              time_chunk_budget_bytes=32 * 1024 * 1024):
    """x: (B, T, input_size), batch_first like the PyTorch module.

    matmul_dtype: bf16 is safe on every generation's MXU and halves gih/W DMA at
    production sizes; cell/elementwise math always stays in f32. Validate tolerances at
    long T before enabling bf16 by default.
    """
    dirs = 2 if bidirectional else 1
    H = hidden_size
    B0 = x.shape[0]
    x_t = jnp.transpose(x, (1, 0, 2)).astype(jnp.float32)     # time-major (T, B, Din)

    # Pad batch to a multiple of 8 (f32 sublanes); keep it padded through the whole stack.
    B = ((B0 + 7) // 8) * 8
    if B != B0:
        x_t = jnp.pad(x_t, ((0, 0), (0, B - B0), (0, 0)))

    layer_parts = [x_t]           # per-direction pieces of the current layer input
    hn_rows = []
    for l in range(num_layers):
        need_seq = l < num_layers - 1       # the module only uses h_n from the last layer
        gih_list, whh_list = [], []
        for d in range(dirs):
            w_ih, w_hh, b_ih, b_hh = params["lstm"][(l, d)]
            bias = (b_ih + b_hh).reshape(1, 1, 4 * H)
            gih_list.append(_input_projection(layer_parts, w_ih, bias, matmul_dtype))
            whh_list.append(w_hh.T.astype(matmul_dtype))

        outs = lstm_layer_fused(gih_list, whh_list, hidden=H, need_seq=need_seq,
                                budget_bytes=time_chunk_budget_bytes)
        hlast = outs[-1]                                      # (dirs, B, H)
        if need_seq:
            layer_parts = list(outs[:dirs])                   # [hseq_fwd, hseq_bwd]
        for d in range(dirs):                                 # PyTorch h_n ordering
            hn_rows.append(hlast[d, :B0, :])

    hn = jnp.stack(hn_rows, axis=0)              # (dirs*L, B, H), like PyTorch h_n
    hn_view = hn.reshape(-1, dirs * H)           # faithful to the module's hn.view(...)

    # Head: relu -> fc -> softmax(dim=1). Tiny (rows x 10); left to XLA per the perf review.
    logits = jnp.maximum(hn_view, 0.0) @ params["fc_w"].T + params["fc_b"]
    return jax.nn.softmax(logits, axis=1)


# ----------------------------------------------------------------------------
# Pure-JAX reference (lax.scan) for a correctness check
# ----------------------------------------------------------------------------
def _ref_lstm_layer_dir(x_tmajor, w_ih, w_hh, b_ih, b_hh):
    H = w_hh.shape[1]
    B = x_tmajor.shape[1]
    wih_t, whh_t, b = w_ih.T, w_hh.T, (b_ih + b_hh)

    def step(carry, x_t):
        h, c = carry
        gates = x_t @ wih_t + h @ whh_t + b
        i = jax.nn.sigmoid(gates[:, 0 * H:1 * H])
        f = jax.nn.sigmoid(gates[:, 1 * H:2 * H])
        g = jnp.tanh(gates[:, 2 * H:3 * H])
        o = jax.nn.sigmoid(gates[:, 3 * H:4 * H])
        c = f * c + i * g
        h = o * jnp.tanh(c)
        return (h, c), h

    (h, _), hseq = lax.scan(step, (jnp.zeros((B, H)), jnp.zeros((B, H))), x_tmajor)
    return hseq, h


def reference_forward(x, params, *, num_layers, bidirectional, hidden_size):
    dirs = 2 if bidirectional else 1
    layer_in = jnp.transpose(x, (1, 0, 2)).astype(jnp.float32)
    hn_list = []
    for l in range(num_layers):
        dir_outs = []
        for d in range(dirs):
            w_ih, w_hh, b_ih, b_hh = params["lstm"][(l, d)]
            xin = layer_in if d == 0 else jnp.flip(layer_in, axis=0)
            hseq, hlast = _ref_lstm_layer_dir(xin, w_ih, w_hh, b_ih, b_hh)
            if d == 1:
                hseq = jnp.flip(hseq, axis=0)
            dir_outs.append(hseq)
            hn_list.append(hlast)
        layer_in = dir_outs[0] if dirs == 1 else jnp.concatenate(dir_outs, axis=-1)
    hn = jnp.stack(hn_list, axis=0)
    hn_view = hn.reshape(-1, dirs * hidden_size)
    out = jnp.maximum(hn_view, 0.0) @ params["fc_w"].T + params["fc_b"]
    return jax.nn.softmax(out, axis=1)


# ----------------------------------------------------------------------------
# Deterministic parameter init (same shapes as nn.LSTM / nn.Linear)
# ----------------------------------------------------------------------------
def init_params(key, *, n_classes, input_size, hidden_size, num_layers, bidirectional):
    dirs = 2 if bidirectional else 1
    k = 1.0 / jnp.sqrt(hidden_size)
    params = {"lstm": {}}
    for l in range(num_layers):
        d_in = input_size if l == 0 else dirs * hidden_size
        for d in range(dirs):
            key, k1, k2, k3, k4 = jax.random.split(key, 5)
            params["lstm"][(l, d)] = (
                jax.random.uniform(k1, (4 * hidden_size, d_in), jnp.float32, -k, k),
                jax.random.uniform(k2, (4 * hidden_size, hidden_size), jnp.float32, -k, k),
                jax.random.uniform(k3, (4 * hidden_size,), jnp.float32, -k, k),
                jax.random.uniform(k4, (4 * hidden_size,), jnp.float32, -k, k),
            )
    feat = dirs * hidden_size
    kf = 1.0 / jnp.sqrt(feat)
    key, k1, k2 = jax.random.split(key, 3)
    params["fc_w"] = jax.random.uniform(k1, (n_classes, feat), jnp.float32, -kf, kf)
    params["fc_b"] = jax.random.uniform(k2, (n_classes,), jnp.float32, -kf, kf)
    return params


if __name__ == "__main__":
    # Small config consistent with the module's forward
    N_CLASSES = 10
    INPUT_SIZE = 16
    HIDDEN_SIZE = 32
    NUM_LAYERS = 2
    BIDIRECTIONAL = True
    BATCH = 2
    SEQ = 8

    key = jax.random.PRNGKey(0)
    key, kx = jax.random.split(key)
    x = jax.random.normal(kx, (BATCH, SEQ, INPUT_SIZE), dtype=jnp.float32)

    params = init_params(key, n_classes=N_CLASSES, input_size=INPUT_SIZE,
                         hidden_size=HIDDEN_SIZE, num_layers=NUM_LAYERS,
                         bidirectional=BIDIRECTIONAL)

    fwd = functools.partial(variable_lstm_net_forward,
                            num_layers=NUM_LAYERS,
                            bidirectional=BIDIRECTIONAL,
                            hidden_size=HIDDEN_SIZE)
    out = jax.jit(fwd)(x, params)
    out = jax.block_until_ready(out)

    ref = reference_forward(x, params, num_layers=NUM_LAYERS,
                            bidirectional=BIDIRECTIONAL, hidden_size=HIDDEN_SIZE)
    ref = jax.block_until_ready(ref)

    assert out.shape == (NUM_LAYERS * BATCH, N_CLASSES), out.shape
    assert jnp.allclose(out, ref, rtol=1e-2, atol=1e-2), "mismatch vs reference"
    print("KERNEL_OK")
</pallas_src>

<mosaic_0001>
module attributes {stable_mosaic.version = 11 : i64} {
  func.func @_lstm_layer_kernel(%arg0: i32, %arg1: memref<8x8x128xf32, #tpu.memory_space<vmem>>, %arg2: memref<8x8x128xf32, #tpu.memory_space<vmem>>, %arg3: memref<32x128xf32, #tpu.memory_space<vmem>>, %arg4: memref<32x128xf32, #tpu.memory_space<vmem>>, %arg5: memref<8x8x32xf32, #tpu.memory_space<vmem>>, %arg6: memref<8x8x32xf32, #tpu.memory_space<vmem>>, %arg7: memref<2x8x32xf32, #tpu.memory_space<vmem>>, %arg8: memref<2x8x32xf32, #tpu.memory_space<vmem>>, %arg9: memref<2x8x32xf32, #tpu.memory_space<vmem>>) attributes {dimension_semantics = [#tpu.dimension_semantics<arbitrary>], iteration_bounds = array<i64: 1>, scalar_prefetch = 0 : i64, scratch_operands = 2 : i64, tpu.core_type = #tpu.core_type<tc>, window_params = [{transform_indices = @transform_0, window_bounds = array<i64: 8, 8, 128>}, {transform_indices = @transform_1, window_bounds = array<i64: 8, 8, 128>}, {pipeline_mode = #tpu.pipeline_mode<synchronous>, transform_indices = @transform_2, window_bounds = array<i64: 32, 128>}, {pipeline_mode = #tpu.pipeline_mode<synchronous>, transform_indices = @transform_3, window_bounds = array<i64: 32, 128>}, {transform_indices = @transform_4, window_bounds = array<i64: 8, 8, 32>}, {transform_indices = @transform_5, window_bounds = array<i64: 8, 8, 32>}, {pipeline_mode = #tpu.pipeline_mode<synchronous>, transform_indices = @transform_6, window_bounds = array<i64: 2, 8, 32>}]} {
    %c0_i32 = arith.constant 0 : i32
    %0 = arith.cmpi eq, %arg0, %c0_i32 : i32
    %1 = arith.extui %0 : i1 to i32
    %c0_i32_0 = arith.constant 0 : i32
    %2 = arith.cmpi ne, %1, %c0_i32_0 : i32
    scf.if %2 {
      %cst_210 = arith.constant 0.000000e+00 : f32
      %554 = vector.broadcast %cst_210 : f32 to vector<2x8x32xf32>
      %c0_211 = arith.constant 0 : index
      %c0_212 = arith.constant 0 : index
      %c0_213 = arith.constant 0 : index
      %555 = vector.load %arg8[%c0_211, %c0_212, %c0_213] : memref<2x8x32xf32, #tpu.memory_space<vmem>>, vector<2x8x32xf32>
      tpu.vector_store %arg8[%c0_211, %c0_212, %c0_213], %554 {strides = array<i32>} : memref<2x8x32xf32, #tpu.memory_space<vmem>>, vector<2x8x32xf32>,
      %cst_214 = arith.constant 0.000000e+00 : f32
      %556 = vector.broadcast %cst_214 : f32 to vector<2x8x32xf32>
      %c0_215 = arith.constant 0 : index
      %c0_216 = arith.constant 0 : index
      %c0_217 = arith.constant 0 : index
      %557 = vector.load %arg9[%c0_215, %c0_216, %c0_217] : memref<2x8x32xf32, #tpu.memory_space<vmem>>, vector<2x8x32xf32>
      tpu.vector_store %arg9[%c0_215, %c0_216, %c0_217], %556 {strides = array<i32>} : memref<2x8x32xf32, #tpu.memory_space<vmem>>, vector<2x8x32xf32>,
    } else {
    }
    %c0 = arith.constant 0 : index
    %c0_1 = arith.constant 0 : index
    %c0_2 = arith.constant 0 : index
    %3 = vector.load %arg8[%c0, %c0_1, %c0_2] : memref<2x8x32xf32, #tpu.memory_space<vmem>>, vector<1x8x32xf32>
    %4 = vector.shape_cast %3 : vector<1x8x32xf32> to vector<8x32xf32>
    %c1 = arith.constant 1 : index
    %c0_3 = arith.constant 0 : index
    %c0_4 = arith.constant 0 : index
    %5 = vector.load %arg8[%c1, %c0_3, %c0_4] : memref<2x8x32xf32, #tpu.memory_space<vmem>>, vector<1x8x32xf32>
    %6 = vector.shape_cast %5 : vector<1x8x32xf32> to vector<8x32xf32>
    %c0_5 = arith.constant 0 : index
    %c0_6 = arith.constant 0 : index
    %c0_7 = arith.constant 0 : index
    %7 = vector.load %arg9[%c0_5, %c0_6, %c0_7] : memref<2x8x32xf32, #tpu.memory_space<vmem>>, vector<1x8x32xf32>
    %8 = vector.shape_cast %7 : vector<1x8x32xf32> to vector<8x32xf32>
    %c1_8 = arith.constant 1 : index
    %c0_9 = arith.constant 0 : index
    %c0_10 = arith.constant 0 : index
    %9 = vector.load %arg9[%c1_8, %c0_9, %c0_10] : memref<2x8x32xf32, #tpu.memory_space<vmem>>, vector<1x8x32xf32>
    %10 = vector.shape_cast %9 : vector<1x8x32xf32> to vector<8x32xf32>
    %c0_11 = arith.constant 0 : index
    %c0_12 = arith.constant 0 : index
    %11 = vector.load %arg3[%c0_11, %c0_12] : memref<32x128xf32, #tpu.memory_space<vmem>>, vector<32x128xf32>
    %cst = arith.constant dense<0.000000e+00> : vector<8x128xf32>
    %12 = tpu.matmul %4, %11, %cst {dimension_numbers = #tpu.dot_dimension_numbers<[1], [0], [0], [1], [0, 0, 1, 1], [], []>} : vector<8x32xf32>, vector<32x128xf32>, vector<8x128xf32> -> vector<8x128xf32>
    %c0_13 = arith.constant 0 : index
    %c0_14 = arith.constant 0 : index
    %c0_15 = arith.constant 0 : index
    %13 = vector.load %arg1[%c0_13, %c0_14, %c0_15] : memref<8x8x128xf32, #tpu.memory_space<vmem>>, vector<1x8x128xf32>
    %14 = vector.shape_cast %13 : vector<1x8x128xf32> to vector<8x128xf32>
    %15 = arith.addf %12, %14 : vector<8x128xf32>
    %16 = vector.extract_strided_slice %15 {offsets = [0, 0], sizes = [8, 32], strides = [1, 1]} : vector<8x128xf32> to vector<8x32xf32>
    %17 = arith.negf %16 : vector<8x32xf32>
    %18 = math.exp %17 : vector<8x32xf32>
    %cst_16 = arith.constant 1.000000e+00 : f32
    %19 = vector.broadcast %cst_16 : f32 to vector<8x32xf32>
    %20 = arith.addf %19, %18 : vector<8x32xf32>
    %21 = arith.divf %19, %20 : vector<8x32xf32>
    %22 = vector.extract_strided_slice %15 {offsets = [0, 32], sizes = [8, 32], strides = [1, 1]} : vector<8x128xf32> to vector<8x32xf32>
    %23 = arith.negf %22 : vector<8x32xf32>
    %24 = math.exp %23 : vector<8x32xf32>
    %cst_17 = arith.constant 1.000000e+00 : f32
    %25 = vector.broadcast %cst_17 : f32 to vector<8x32xf32>
    %26 = arith.addf %25, %24 : vector<8x32xf32>
    %27 = arith.divf %25, %26 : vector<8x32xf32>
    %28 = vector.extract_strided_slice %15 {offsets = [0, 64], sizes = [8, 32], strides = [1, 1]} : vector<8x128xf32> to vector<8x32xf32>
    %29 = math.tanh %28 : vector<8x32xf32>
    %30 = vector.extract_strided_slice %15 {offsets = [0, 96], sizes = [8, 32], strides = [1, 1]} : vector<8x128xf32> to vector<8x32xf32>
    %31 = arith.negf %30 : vector<8x32xf32>
    %32 = math.exp %31 : vector<8x32xf32>
    %cst_18 = arith.constant 1.000000e+00 : f32
    %33 = vector.broadcast %cst_18 : f32 to vector<8x32xf32>
    %34 = arith.addf %33, %32 : vector<8x32xf32>
    %35 = arith.divf %33, %34 : vector<8x32xf32>
    %36 = arith.mulf %27, %8 : vector<8x32xf32>
    %37 = arith.mulf %21, %29 : vector<8x32xf32>
    %38 = arith.addf %36, %37 : vector<8x32xf32>
    %39 = math.tanh %38 : vector<8x32xf32>
    %40 = arith.mulf %35, %39 : vector<8x32xf32>
    %c0_19 = arith.constant 0 : index
    %c0_20 = arith.constant 0 : index
    %c0_21 = arith.constant 0 : index
    %41 = vector.load %arg5[%c0_19, %c0_20, %c0_21] : memref<8x8x32xf32, #tpu.memory_space<vmem>>, vector<1x8x32xf32>
    %42 = vector.shape_cast %41 : vector<1x8x32xf32> to vector<8x32xf32>
    %43 = vector.shape_cast %40 : vector<8x32xf32> to vector<1x8x32xf32>
    tpu.vector_store %arg5[%c0_19, %c0_20, %c0_21], %43 {strides = array<i32>} : memref<8x8x32xf32, #tpu.memory_space<vmem>>, vector<1x8x32xf32>,
    %c0_22 = arith.constant 0 : index
    %c0_23 = arith.constant 0 : index
    %44 = vector.load %arg4[%c0_22, %c0_23] : memref<32x128xf32, #tpu.memory_space<vmem>>, vector<32x128xf32>
    %cst_24 = arith.constant dense<0.000000e+00> : vector<8x128xf32>
    %45 = tpu.matmul %6, %44, %cst_24 {dimension_numbers = #tpu.dot_dimension_numbers<[1], [0], [0], [1], [0, 0, 1, 1], [], []>} : vector<8x32xf32>, vector<32x128xf32>, vector<8x128xf32> -> vector<8x128xf32>
    %c7 = arith.constant 7 : index
    %c0_25 = arith.constant 0 : index
    %c0_26 = arith.constant 0 : index
    %46 = vector.load %arg2[%c7, %c0_25, %c0_26] : memref<8x8x128xf32, #tpu.memory_space<vmem>>, vector<1x8x128xf32>
    %47 = vector.shape_cast %46 : vector<1x8x128xf32> to vector<8x128xf32>
    %48 = arith.addf %45, %47 : vector<8x128xf32>
    %49 = vector.extract_strided_slice %48 {offsets = [0, 0], sizes = [8, 32], strides = [1, 1]} : vector<8x128xf32> to vector<8x32xf32>
    %50 = arith.negf %49 : vector<8x32xf32>
    %51 = math.exp %50 : vector<8x32xf32>
    %cst_27 = arith.constant 1.000000e+00 : f32
    %52 = vector.broadcast %cst_27 : f32 to vector<8x32xf32>
    %53 = arith.addf %52, %51 : vector<8x32xf32>
    %54 = arith.divf %52, %53 : vector<8x32xf32>
    %55 = vector.extract_strided_slice %48 {offsets = [0, 32], sizes = [8, 32], strides = [1, 1]} : vector<8x128xf32> to vector<8x32xf32>
    %56 = arith.negf %55 : vector<8x32xf32>
    %57 = math.exp %56 : vector<8x32xf32>
    %cst_28 = arith.constant 1.000000e+00 : f32
    %58 = vector.broadcast %cst_28 : f32 to vector<8x32xf32>
    %59 = arith.addf %58, %57 : vector<8x32xf32>
    %60 = arith.divf %58, %59 : vector<8x32xf32>
    %61 = vector.extract_strided_slice %48 {offsets = [0, 64], sizes = [8, 32], strides = [1, 1]} : vector<8x128xf32> to vector<8x32xf32>
    %62 = math.tanh %61 : vector<8x32xf32>
    %63 = vector.extract_strided_slice %48 {offsets = [0, 96], sizes = [8, 32], strides = [1, 1]} : vector<8x128xf32> to vector<8x32xf32>
    %64 = arith.negf %63 : vector<8x32xf32>
    %65 = math.exp %64 : vector<8x32xf32>
    %cst_29 = arith.constant 1.000000e+00 : f32
    %66 = vector.broadcast %cst_29 : f32 to vector<8x32xf32>
    %67 = arith.addf %66, %65 : vector<8x32xf32>
    %68 = arith.divf %66, %67 : vector<8x32xf32>
    %69 = arith.mulf %60, %10 : vector<8x32xf32>
    %70 = arith.mulf %54, %62 : vector<8x32xf32>
    %71 = arith.addf %69, %70 : vector<8x32xf32>
    %72 = math.tanh %71 : vector<8x32xf32>
    %73 = arith.mulf %68, %72 : vector<8x32xf32>
    %c7_30 = arith.constant 7 : index
    %c0_31 = arith.constant 0 : index
    %c0_32 = arith.constant 0 : index
    %74 = vector.load %arg6[%c7_30, %c0_31, %c0_32] : memref<8x8x32xf32, #tpu.memory_space<vmem>>, vector<1x8x32xf32>
    %75 = vector.shape_cast %74 : vector<1x8x32xf32> to vector<8x32xf32>
    %76 = vector.shape_cast %73 : vector<8x32xf32> to vector<1x8x32xf32>
    tpu.vector_store %arg6[%c7_30, %c0_31, %c0_32], %76 {strides = array<i32>} : memref<8x8x32xf32, #tpu.memory_space<vmem>>, vector<1x8x32xf32>,
    %c0_33 = arith.constant 0 : index
    %c0_34 = arith.constant 0 : index
    %77 = vector.load %arg3[%c0_33, %c0_34] : memref<32x128xf32, #tpu.memory_space<vmem>>, vector<32x128xf32>
    %cst_35 = arith.constant dense<0.000000e+00> : vector<8x128xf32>
    %78 = tpu.matmul %40, %77, %cst_35 {dimension_numbers = #tpu.dot_dimension_numbers<[1], [0], [0], [1], [0, 0, 1, 1], [], []>} : vector<8x32xf32>, vector<32x128xf32>, vector<8x128xf32> -> vector<8x128xf32>
    %c1_36 = arith.constant 1 : index
    %c0_37 = arith.constant 0 : index
    %c0_38 = arith.constant 0 : index
    %79 = vector.load %arg1[%c1_36, %c0_37, %c0_38] : memref<8x8x128xf32, #tpu.memory_space<vmem>>, vector<1x8x128xf32>
    %80 = vector.shape_cast %79 : vector<1x8x128xf32> to vector<8x128xf32>
    %81 = arith.addf %78, %80 : vector<8x128xf32>
    %82 = vector.extract_strided_slice %81 {offsets = [0, 0], sizes = [8, 32], strides = [1, 1]} : vector<8x128xf32> to vector<8x32xf32>
    %83 = arith.negf %82 : vector<8x32xf32>
    %84 = math.exp %83 : vector<8x32xf32>
    %cst_39 = arith.constant 1.000000e+00 : f32
    %85 = vector.broadcast %cst_39 : f32 to vector<8x32xf32>
    %86 = arith.addf %85, %84 : vector<8x32xf32>
    %87 = arith.divf %85, %86 : vector<8x32xf32>
    %88 = vector.extract_strided_slice %81 {offsets = [0, 32], sizes = [8, 32], strides = [1, 1]} : vector<8x128xf32> to vector<8x32xf32>
    %89 = arith.negf %88 : vector<8x32xf32>
    %90 = math.exp %89 : vector<8x32xf32>
    %cst_40 = arith.constant 1.000000e+00 : f32
    %91 = vector.broadcast %cst_40 : f32 to vector<8x32xf32>
    %92 = arith.addf %91, %90 : vector<8x32xf32>
    %93 = arith.divf %91, %92 : vector<8x32xf32>
    %94 = vector.extract_strided_slice %81 {offsets = [0, 64], sizes = [8, 32], strides = [1, 1]} : vector<8x128xf32> to vector<8x32xf32>
    %95 = math.tanh %94 : vector<8x32xf32>
    %96 = vector.extract_strided_slice %81 {offsets = [0, 96], sizes = [8, 32], strides = [1, 1]} : vector<8x128xf32> to vector<8x32xf32>
    %97 = arith.negf %96 : vector<8x32xf32>
    %98 = math.exp %97 : vector<8x32xf32>
    %cst_41 = arith.constant 1.000000e+00 : f32
    %99 = vector.broadcast %cst_41 : f32 to vector<8x32xf32>
    %100 = arith.addf %99, %98 : vector<8x32xf32>
    %101 = arith.divf %99, %100 : vector<8x32xf32>
    %102 = arith.mulf %93, %38 : vector<8x32xf32>
    %103 = arith.mulf %87, %95 : vector<8x32xf32>
    %104 = arith.addf %102, %103 : vector<8x32xf32>
    %105 = math.tanh %104 : vector<8x32xf32>
    %106 = arith.mulf %101, %105 : vector<8x32xf32>
    %c1_42 = arith.constant 1 : index
    %c0_43 = arith.constant 0 : index
    %c0_44 = arith.constant 0 : index
    %107 = vector.load %arg5[%c1_42, %c0_43, %c0_44] : memref<8x8x32xf32, #tpu.memory_space<vmem>>, vector<1x8x32xf32>
    %108 = vector.shape_cast %107 : vector<1x8x32xf32> to vector<8x32xf32>
    %109 = vector.shape_cast %106 : vector<8x32xf32> to vector<1x8x32xf32>
    tpu.vector_store %arg5[%c1_42, %c0_43, %c0_44], %109 {strides = array<i32>} : memref<8x8x32xf32, #tpu.memory_space<vmem>>, vector<1x8x32xf32>,
    %c0_45 = arith.constant 0 : index
    %c0_46 = arith.constant 0 : index
    %110 = vector.load %arg4[%c0_45, %c0_46] : memref<32x128xf32, #tpu.memory_space<vmem>>, vector<32x128xf32>
    %cst_47 = arith.constant dense<0.000000e+00> : vector<8x128xf32>
    %111 = tpu.matmul %73, %110, %cst_47 {dimension_numbers = #tpu.dot_dimension_numbers<[1], [0], [0], [1], [0, 0, 1, 1], [], []>} : vector<8x32xf32>, vector<32x128xf32>, vector<8x128xf32> -> vector<8x128xf32>
    %c6 = arith.constant 6 : index
    %c0_48 = arith.constant 0 : index
    %c0_49 = arith.constant 0 : index
    %112 = vector.load %arg2[%c6, %c0_48, %c0_49] : memref<8x8x128xf32, #tpu.memory_space<vmem>>, vector<1x8x128xf32>
    %113 = vector.shape_cast %112 : vector<1x8x128xf32> to vector<8x128xf32>
    %114 = arith.addf %111, %113 : vector<8x128xf32>
    %115 = vector.extract_strided_slice %114 {offsets = [0, 0], sizes = [8, 32], strides = [1, 1]} : vector<8x128xf32> to vector<8x32xf32>
    %116 = arith.negf %115 : vector<8x32xf32>
    %117 = math.exp %116 : vector<8x32xf32>
    %cst_50 = arith.constant 1.000000e+00 : f32
    %118 = vector.broadcast %cst_50 : f32 to vector<8x32xf32>
    %119 = arith.addf %118, %117 : vector<8x32xf32>
    %120 = arith.divf %118, %119 : vector<8x32xf32>
    %121 = vector.extract_strided_slice %114 {offsets = [0, 32], sizes = [8, 32], strides = [1, 1]} : vector<8x128xf32> to vector<8x32xf32>
    %122 = arith.negf %121 : vector<8x32xf32>
    %123 = math.exp %122 : vector<8x32xf32>
    %cst_51 = arith.constant 1.000000e+00 : f32
    %124 = vector.broadcast %cst_51 : f32 to vector<8x32xf32>
    %125 = arith.addf %124, %123 : vector<8x32xf32>
    %126 = arith.divf %124, %125 : vector<8x32xf32>
    %127 = vector.extract_strided_slice %114 {offsets = [0, 64], sizes = [8, 32], strides = [1, 1]} : vector<8x128xf32> to vector<8x32xf32>
    %128 = math.tanh %127 : vector<8x32xf32>
    %129 = vector.extract_strided_slice %114 {offsets = [0, 96], sizes = [8, 32], strides = [1, 1]} : vector<8x128xf32> to vector<8x32xf32>
    %130 = arith.negf %129 : vector<8x32xf32>
    %131 = math.exp %130 : vector<8x32xf32>
    %cst_52 = arith.constant 1.000000e+00 : f32
    %132 = vector.broadcast %cst_52 : f32 to vector<8x32xf32>
    %133 = arith.addf %132, %131 : vector<8x32xf32>
    %134 = arith.divf %132, %133 : vector<8x32xf32>
    %135 = arith.mulf %126, %71 : vector<8x32xf32>
    %136 = arith.mulf %120, %128 : vector<8x32xf32>
    %137 = arith.addf %135, %136 : vector<8x32xf32>
    %138 = math.tanh %137 : vector<8x32xf32>
    %139 = arith.mulf %134, %138 : vector<8x32xf32>
    %c6_53 = arith.constant 6 : index
    %c0_54 = arith.constant 0 : index
    %c0_55 = arith.constant 0 : index
    %140 = vector.load %arg6[%c6_53, %c0_54, %c0_55] : memref<8x8x32xf32, #tpu.memory_space<vmem>>, vector<1x8x32xf32>
    %141 = vector.shape_cast %140 : vector<1x8x32xf32> to vector<8x32xf32>
    %142 = vector.shape_cast %139 : vector<8x32xf32> to vector<1x8x32xf32>
    tpu.vector_store %arg6[%c6_53, %c0_54, %c0_55], %142 {strides = array<i32>} : memref<8x8x32xf32, #tpu.memory_space<vmem>>, vector<1x8x32xf32>,
    %c0_56 = arith.constant 0 : index
    %c0_57 = arith.constant 0 : index
    %143 = vector.load %arg3[%c0_56, %c0_57] : memref<32x128xf32, #tpu.memory_space<vmem>>, vector<32x128xf32>
    %cst_58 = arith.constant dense<0.000000e+00> : vector<8x128xf32>
    %144 = tpu.matmul %106, %143, %cst_58 {dimension_numbers = #tpu.dot_dimension_numbers<[1], [0], [0], [1], [0, 0, 1, 1], [], []>} : vector<8x32xf32>, vector<32x128xf32>, vector<8x128xf32> -> vector<8x128xf32>
    %c2 = arith.constant 2 : index
    %c0_59 = arith.constant 0 : index
    %c0_60 = arith.constant 0 : index
    %145 = vector.load %arg1[%c2, %c0_59, %c0_60] : memref<8x8x128xf32, #tpu.memory_space<vmem>>, vector<1x8x128xf32>
    %146 = vector.shape_cast %145 : vector<1x8x128xf32> to vector<8x128xf32>
    %147 = arith.addf %144, %146 : vector<8x128xf32>
    %148 = vector.extract_strided_slice %147 {offsets = [0, 0], sizes = [8, 32], strides = [1, 1]} : vector<8x128xf32> to vector<8x32xf32>
    %149 = arith.negf %148 : vector<8x32xf32>
    %150 = math.exp %149 : vector<8x32xf32>
    %cst_61 = arith.constant 1.000000e+00 : f32
    %151 = vector.broadcast %cst_61 : f32 to vector<8x32xf32>
    %152 = arith.addf %151, %150 : vector<8x32xf32>
    %153 = arith.divf %151, %152 : vector<8x32xf32>
    %154 = vector.extract_strided_slice %147 {offsets = [0, 32], sizes = [8, 32], strides = [1, 1]} : vector<8x128xf32> to vector<8x32xf32>
    %155 = arith.negf %154 : vector<8x32xf32>
    %156 = math.exp %155 : vector<8x32xf32>
    %cst_62 = arith.constant 1.000000e+00 : f32
    %157 = vector.broadcast %cst_62 : f32 to vector<8x32xf32>
    %158 = arith.addf %157, %156 : vector<8x32xf32>
    %159 = arith.divf %157, %158 : vector<8x32xf32>
    %160 = vector.extract_strided_slice %147 {offsets = [0, 64], sizes = [8, 32], strides = [1, 1]} : vector<8x128xf32> to vector<8x32xf32>
    %161 = math.tanh %160 : vector<8x32xf32>
    %162 = vector.extract_strided_slice %147 {offsets = [0, 96], sizes = [8, 32], strides = [1, 1]} : vector<8x128xf32> to vector<8x32xf32>
    %163 = arith.negf %162 : vector<8x32xf32>
    %164 = math.exp %163 : vector<8x32xf32>
    %cst_63 = arith.constant 1.000000e+00 : f32
    %165 = vector.broadcast %cst_63 : f32 to vector<8x32xf32>
    %166 = arith.addf %165, %164 : vector<8x32xf32>
    %167 = arith.divf %165, %166 : vector<8x32xf32>
    %168 = arith.mulf %159, %104 : vector<8x32xf32>
    %169 = arith.mulf %153, %161 : vector<8x32xf32>
    %170 = arith.addf %168, %169 : vector<8x32xf32>
    %171 = math.tanh %170 : vector<8x32xf32>
    %172 = arith.mulf %167, %171 : vector<8x32xf32>
    %c2_64 = arith.constant 2 : index
    %c0_65 = arith.constant 0 : index
    %c0_66 = arith.constant 0 : index
    %173 = vector.load %arg5[%c2_64, %c0_65, %c0_66] : memref<8x8x32xf32, #tpu.memory_space<vmem>>, vector<1x8x32xf32>
    %174 = vector.shape_cast %173 : vector<1x8x32xf32> to vector<8x32xf32>
    %175 = vector.shape_cast %172 : vector<8x32xf32> to vector<1x8x32xf32>
    tpu.vector_store %arg5[%c2_64, %c0_65, %c0_66], %175 {strides = array<i32>} : memref<8x8x32xf32, #tpu.memory_space<vmem>>, vector<1x8x32xf32>,
    %c0_67 = arith.constant 0 : index
    %c0_68 = arith.constant 0 : index
    %176 = vector.load %arg4[%c0_67, %c0_68] : memref<32x128xf32, #tpu.memory_space<vmem>>, vector<32x128xf32>
    %cst_69 = arith.constant dense<0.000000e+00> : vector<8x128xf32>
    %177 = tpu.matmul %139, %176, %cst_69 {dimension_numbers = #tpu.dot_dimension_numbers<[1], [0], [0], [1], [0, 0, 1, 1], [], []>} : vector<8x32xf32>, vector<32x128xf32>, vector<8x128xf32> -> vector<8x128xf32>
    %c5 = arith.constant 5 : index
    %c0_70 = arith.constant 0 : index
    %c0_71 = arith.constant 0 : index
    %178 = vector.load %arg2[%c5, %c0_70, %c0_71] : memref<8x8x128xf32, #tpu.memory_space<vmem>>, vector<1x8x128xf32>
    %179 = vector.shape_cast %178 : vector<1x8x128xf32> to vector<8x128xf32>
    %180 = arith.addf %177, %179 : vector<8x128xf32>
    %181 = vector.extract_strided_slice %180 {offsets = [0, 0], sizes = [8, 32], strides = [1, 1]} : vector<8x128xf32> to vector<8x32xf32>
    %182 = arith.negf %181 : vector<8x32xf32>
    %183 = math.exp %182 : vector<8x32xf32>
    %cst_72 = arith.constant 1.000000e+00 : f32
    %184 = vector.broadcast %cst_72 : f32 to vector<8x32xf32>
    %185 = arith.addf %184, %183 : vector<8x32xf32>
    %186 = arith.divf %184, %185 : vector<8x32xf32>
    %187 = vector.extract_strided_slice %180 {offsets = [0, 32], sizes = [8, 32], strides = [1, 1]} : vector<8x128xf32> to vector<8x32xf32>
    %188 = arith.negf %187 : vector<8x32xf32>
    %189 = math.exp %188 : vector<8x32xf32>
    %cst_73 = arith.constant 1.000000e+00 : f32
    %190 = vector.broadcast %cst_73 : f32 to vector<8x32xf32>
    %191 = arith.addf %190, %189 : vector<8x32xf32>
    %192 = arith.divf %190, %191 : vector<8x32xf32>
    %193 = vector.extract_strided_slice %180 {offsets = [0, 64], sizes = [8, 32], strides = [1, 1]} : vector<8x128xf32> to vector<8x32xf32>
    %194 = math.tanh %193 : vector<8x32xf32>
    %195 = vector.extract_strided_slice %180 {offsets = [0, 96], sizes = [8, 32], strides = [1, 1]} : vector<8x128xf32> to vector<8x32xf32>
    %196 = arith.negf %195 : vector<8x32xf32>
    %197 = math.exp %196 : vector<8x32xf32>
    %cst_74 = arith.constant 1.000000e+00 : f32
    %198 = vector.broadcast %cst_74 : f32 to vector<8x32xf32>
    %199 = arith.addf %198, %197 : vector<8x32xf32>
    %200 = arith.divf %198, %199 : vector<8x32xf32>
    %201 = arith.mulf %192, %137 : vector<8x32xf32>
    %202 = arith.mulf %186, %194 : vector<8x32xf32>
    %203 = arith.addf %201, %202 : vector<8x32xf32>
    %204 = math.tanh %203 : vector<8x32xf32>
    %205 = arith.mulf %200, %204 : vector<8x32xf32>
    %c5_75 = arith.constant 5 : index
    %c0_76 = arith.constant 0 : index
    %c0_77 = arith.constant 0 : index
    %206 = vector.load %arg6[%c5_75, %c0_76, %c0_77] : memref<8x8x32xf32, #tpu.memory_space<vmem>>, vector<1x8x32xf32>
    %207 = vector.shape_cast %206 : vector<1x8x32xf32> to vector<8x32xf32>
    %208 = vector.shape_cast %205 : vector<8x32xf32> to vector<1x8x32xf32>
    tpu.vector_store %arg6[%c5_75, %c0_76, %c0_77], %208 {strides = array<i32>} : memref<8x8x32xf32, #tpu.memory_space<vmem>>, vector<1x8x32xf32>,
    %c0_78 = arith.constant 0 : index
    %c0_79 = arith.constant 0 : index
    %209 = vector.load %arg3[%c0_78, %c0_79] : memref<32x128xf32, #tpu.memory_space<vmem>>, vector<32x128xf32>
    %cst_80 = arith.constant dense<0.000000e+00> : vector<8x128xf32>
    %210 = tpu.matmul %172, %209, %cst_80 {dimension_numbers = #tpu.dot_dimension_numbers<[1], [0], [0], [1], [0, 0, 1, 1], [], []>} : vector<8x32xf32>, vector<32x128xf32>, vector<8x128xf32> -> vector<8x128xf32>
    %c3 = arith.constant 3 : index
    %c0_81 = arith.constant 0 : index
    %c0_82 = arith.constant 0 : index
    %211 = vector.load %arg1[%c3, %c0_81, %c0_82] : memref<8x8x128xf32, #tpu.memory_space<vmem>>, vector<1x8x128xf32>
    %212 = vector.shape_cast %211 : vector<1x8x128xf32> to vector<8x128xf32>
    %213 = arith.addf %210, %212 : vector<8x128xf32>
    %214 = vector.extract_strided_slice %213 {offsets = [0, 0], sizes = [8, 32], strides = [1, 1]} : vector<8x128xf32> to vector<8x32xf32>
    %215 = arith.negf %214 : vector<8x32xf32>
    %216 = math.exp %215 : vector<8x32xf32>
    %cst_83 = arith.constant 1.000000e+00 : f32
    %217 = vector.broadcast %cst_83 : f32 to vector<8x32xf32>
    %218 = arith.addf %217, %216 : vector<8x32xf32>
    %219 = arith.divf %217, %218 : vector<8x32xf32>
    %220 = vector.extract_strided_slice %213 {offsets = [0, 32], sizes = [8, 32], strides = [1, 1]} : vector<8x128xf32> to vector<8x32xf32>
    %221 = arith.negf %220 : vector<8x32xf32>
    %222 = math.exp %221 : vector<8x32xf32>
    %cst_84 = arith.constant 1.000000e+00 : f32
    %223 = vector.broadcast %cst_84 : f32 to vector<8x32xf32>
    %224 = arith.addf %223, %222 : vector<8x32xf32>
    %225 = arith.divf %223, %224 : vector<8x32xf32>
    %226 = vector.extract_strided_slice %213 {offsets = [0, 64], sizes = [8, 32], strides = [1, 1]} : vector<8x128xf32> to vector<8x32xf32>
    %227 = math.tanh %226 : vector<8x32xf32>
    %228 = vector.extract_strided_slice %213 {offsets = [0, 96], sizes = [8, 32], strides = [1, 1]} : vector<8x128xf32> to vector<8x32xf32>
    %229 = arith.negf %228 : vector<8x32xf32>
    %230 = math.exp %229 : vector<8x32xf32>
    %cst_85 = arith.constant 1.000000e+00 : f32
    %231 = vector.broadcast %cst_85 : f32 to vector<8x32xf32>
    %232 = arith.addf %231, %230 : vector<8x32xf32>
    %233 = arith.divf %231, %232 : vector<8x32xf32>
    %234 = arith.mulf %225, %170 : vector<8x32xf32>
    %235 = arith.mulf %219, %227 : vector<8x32xf32>
    %236 = arith.addf %234, %235 : vector<8x32xf32>
    %237 = math.tanh %236 : vector<8x32xf32>
    %238 = arith.mulf %233, %237 : vector<8x32xf32>
    %c3_86 = arith.constant 3 : index
    %c0_87 = arith.constant 0 : index
    %c0_88 = arith.constant 0 : index
    %239 = vector.load %arg5[%c3_86, %c0_87, %c0_88] : memref<8x8x32xf32, #tpu.memory_space<vmem>>, vector<1x8x32xf32>
    %240 = vector.shape_cast %239 : vector<1x8x32xf32> to vector<8x32xf32>
    %241 = vector.shape_cast %238 : vector<8x32xf32> to vector<1x8x32xf32>
    tpu.vector_store %arg5[%c3_86, %c0_87, %c0_88], %241 {strides = array<i32>} : memref<8x8x32xf32, #tpu.memory_space<vmem>>, vector<1x8x32xf32>,
    %c0_89 = arith.constant 0 : index
    %c0_90 = arith.constant 0 : index
    %242 = vector.load %arg4[%c0_89, %c0_90] : memref<32x128xf32, #tpu.memory_space<vmem>>, vector<32x128xf32>
    %cst_91 = arith.constant dense<0.000000e+00> : vector<8x128xf32>
    %243 = tpu.matmul %205, %242, %cst_91 {dimension_numbers = #tpu.dot_dimension_numbers<[1], [0], [0], [1], [0, 0, 1, 1], [], []>} : vector<8x32xf32>, vector<32x128xf32>, vector<8x128xf32> -> vector<8x128xf32>
    %c4 = arith.constant 4 : index
    %c0_92 = arith.constant 0 : index
    %c0_93 = arith.constant 0 : index
    %244 = vector.load %arg2[%c4, %c0_92, %c0_93] : memref<8x8x128xf32, #tpu.memory_space<vmem>>, vector<1x8x128xf32>
    %245 = vector.shape_cast %244 : vector<1x8x128xf32> to vector<8x128xf32>
    %246 = arith.addf %243, %245 : vector<8x128xf32>
    %247 = vector.extract_strided_slice %246 {offsets = [0, 0], sizes = [8, 32], strides = [1, 1]} : vector<8x128xf32> to vector<8x32xf32>
    %248 = arith.negf %247 : vector<8x32xf32>
    %249 = math.exp %248 : vector<8x32xf32>
    %cst_94 = arith.constant 1.000000e+00 : f32
    %250 = vector.broadcast %cst_94 : f32 to vector<8x32xf32>
    %251 = arith.addf %250, %249 : vector<8x32xf32>
    %252 = arith.divf %250, %251 : vector<8x32xf32>
    %253 = vector.extract_strided_slice %246 {offsets = [0, 32], sizes = [8, 32], strides = [1, 1]} : vector<8x128xf32> to vector<8x32xf32>
    %254 = arith.negf %253 : vector<8x32xf32>
    %255 = math.exp %254 : vector<8x32xf32>
    %cst_95 = arith.constant 1.000000e+00 : f32
    %256 = vector.broadcast %cst_95 : f32 to vector<8x32xf32>
    %257 = arith.addf %256, %255 : vector<8x32xf32>
    %258 = arith.divf %256, %257 : vector<8x32xf32>
    %259 = vector.extract_strided_slice %246 {offsets = [0, 64], sizes = [8, 32], strides = [1, 1]} : vector<8x128xf32> to vector<8x32xf32>
    %260 = math.tanh %259 : vector<8x32xf32>
    %261 = vector.extract_strided_slice %246 {offsets = [0, 96], sizes = [8, 32], strides = [1, 1]} : vector<8x128xf32> to vector<8x32xf32>
    %262 = arith.negf %261 : vector<8x32xf32>
    %263 = math.exp %262 : vector<8x32xf32>
    %cst_96 = arith.constant 1.000000e+00 : f32
    %264 = vector.broadcast %cst_96 : f32 to vector<8x32xf32>
    %265 = arith.addf %264, %263 : vector<8x32xf32>
    %266 = arith.divf %264, %265 : vector<8x32xf32>
    %267 = arith.mulf %258, %203 : vector<8x32xf32>
    %268 = arith.mulf %252, %260 : vector<8x32xf32>
    %269 = arith.addf %267, %268 : vector<8x32xf32>
    %270 = math.tanh %269 : vector<8x32xf32>
    %271 = arith.mulf %266, %270 : vector<8x32xf32>
    %c4_97 = arith.constant 4 : index
    %c0_98 = arith.constant 0 : index
    %c0_99 = arith.constant 0 : index
    %272 = vector.load %arg6[%c4_97, %c0_98, %c0_99] : memref<8x8x32xf32, #tpu.memory_space<vmem>>, vector<1x8x32xf32>
    %273 = vector.shape_cast %272 : vector<1x8x32xf32> to vector<8x32xf32>
    %274 = vector.shape_cast %271 : vector<8x32xf32> to vector<1x8x32xf32>
    tpu.vector_store %arg6[%c4_97, %c0_98, %c0_99], %274 {strides = array<i32>} : memref<8x8x32xf32, #tpu.memory_space<vmem>>, vector<1x8x32xf32>,
    %c0_100 = arith.constant 0 : index
    %c0_101 = arith.constant 0 : index
    %275 = vector.load %arg3[%c0_100, %c0_101] : memref<32x128xf32, #tpu.memory_space<vmem>>, vector<32x128xf32>
    %cst_102 = arith.constant dense<0.000000e+00> : vector<8x128xf32>
    %276 = tpu.matmul %238, %275, %cst_102 {dimension_numbers = #tpu.dot_dimension_numbers<[1], [0], [0], [1], [0, 0, 1, 1], [], []>} : vector<8x32xf32>, vector<32x128xf32>, vector<8x128xf32> -> vector<8x128xf32>
    %c4_103 = arith.constant 4 : index
    %c0_104 = arith.constant 0 : index
    %c0_105 = arith.constant 0 : index
    %277 = vector.load %arg1[%c4_103, %c0_104, %c0_105] : memref<8x8x128xf32, #tpu.memory_space<vmem>>, vector<1x8x128xf32>
    %278 = vector.shape_cast %277 : vector<1x8x128xf32> to vector<8x128xf32>
    %279 = arith.addf %276, %278 : vector<8x128xf32>
    %280 = vector.extract_strided_slice %279 {offsets = [0, 0], sizes = [8, 32], strides = [1, 1]} : vector<8x128xf32> to vector<8x32xf32>
    %281 = arith.negf %280 : vector<8x32xf32>
    %282 = math.exp %281 : vector<8x32xf32>
    %cst_106 = arith.constant 1.000000e+00 : f32
    %283 = vector.broadcast %cst_106 : f32 to vector<8x32xf32>
    %284 = arith.addf %283, %282 : vector<8x32xf32>
    %285 = arith.divf %283, %284 : vector<8x32xf32>
    %286 = vector.extract_strided_slice %279 {offsets = [0, 32], sizes = [8, 32], strides = [1, 1]} : vector<8x128xf32> to vector<8x32xf32>
    %287 = arith.negf %286 : vector<8x32xf32>
    %288 = math.exp %287 : vector<8x32xf32>
    %cst_107 = arith.constant 1.000000e+00 : f32
    %289 = vector.broadcast %cst_107 : f32 to vector<8x32xf32>
    %290 = arith.addf %289, %288 : vector<8x32xf32>
    %291 = arith.divf %289, %290 : vector<8x32xf32>
    %292 = vector.extract_strided_slice %279 {offsets = [0, 64], sizes = [8, 32], strides = [1, 1]} : vector<8x128xf32> to vector<8x32xf32>
    %293 = math.tanh %292 : vector<8x32xf32>
    %294 = vector.extract_strided_slice %279 {offsets = [0, 96], sizes = [8, 32], strides = [1, 1]} : vector<8x128xf32> to vector<8x32xf32>
    %295 = arith.negf %294 : vector<8x32xf32>
    %296 = math.exp %295 : vector<8x32xf32>
    %cst_108 = arith.constant 1.000000e+00 : f32
    %297 = vector.broadcast %cst_108 : f32 to vector<8x32xf32>
    %298 = arith.addf %297, %296 : vector<8x32xf32>
    %299 = arith.divf %297, %298 : vector<8x32xf32>
    %300 = arith.mulf %291, %236 : vector<8x32xf32>
    %301 = arith.mulf %285, %293 : vector<8x32xf32>
    %302 = arith.addf %300, %301 : vector<8x32xf32>
    %303 = math.tanh %302 : vector<8x32xf32>
    %304 = arith.mulf %299, %303 : vector<8x32xf32>
    %c4_109 = arith.constant 4 : index
    %c0_110 = arith.constant 0 : index
    %c0_111 = arith.constant 0 : index
    %305 = vector.load %arg5[%c4_109, %c0_110, %c0_111] : memref<8x8x32xf32, #tpu.memory_space<vmem>>, vector<1x8x32xf32>
    %306 = vector.shape_cast %305 : vector<1x8x32xf32> to vector<8x32xf32>
    %307 = vector.shape_cast %304 : vector<8x32xf32> to vector<1x8x32xf32>
    tpu.vector_store %arg5[%c4_109, %c0_110, %c0_111], %307 {strides = array<i32>} : memref<8x8x32xf32, #tpu.memory_space<vmem>>, vector<1x8x32xf32>,
    %c0_112 = arith.constant 0 : index
    %c0_113 = arith.constant 0 : index
    %308 = vector.load %arg4[%c0_112, %c0_113] : memref<32x128xf32, #tpu.memory_space<vmem>>, vector<32x128xf32>
    %cst_114 = arith.constant dense<0.000000e+00> : vector<8x128xf32>
    %309 = tpu.matmul %271, %308, %cst_114 {dimension_numbers = #tpu.dot_dimension_numbers<[1], [0], [0], [1], [0, 0, 1, 1], [], []>} : vector<8x32xf32>, vector<32x128xf32>, vector<8x128xf32> -> vector<8x128xf32>
    %c3_115 = arith.constant 3 : index
    %c0_116 = arith.constant 0 : index
    %c0_117 = arith.constant 0 : index
    %310 = vector.load %arg2[%c3_115, %c0_116, %c0_117] : memref<8x8x128xf32, #tpu.memory_space<vmem>>, vector<1x8x128xf32>
    %311 = vector.shape_cast %310 : vector<1x8x128xf32> to vector<8x128xf32>
    %312 = arith.addf %309, %311 : vector<8x128xf32>
    %313 = vector.extract_strided_slice %312 {offsets = [0, 0], sizes = [8, 32], strides = [1, 1]} : vector<8x128xf32> to vector<8x32xf32>
    %314 = arith.negf %313 : vector<8x32xf32>
    %315 = math.exp %314 : vector<8x32xf32>
    %cst_118 = arith.constant 1.000000e+00 : f32
    %316 = vector.broadcast %cst_118 : f32 to vector<8x32xf32>
    %317 = arith.addf %316, %315 : vector<8x32xf32>
    %318 = arith.divf %316, %317 : vector<8x32xf32>
    %319 = vector.extract_strided_slice %312 {offsets = [0, 32], sizes = [8, 32], strides = [1, 1]} : vector<8x128xf32> to vector<8x32xf32>
    %320 = arith.negf %319 : vector<8x32xf32>
    %321 = math.exp %320 : vector<8x32xf32>
    %cst_119 = arith.constant 1.000000e+00 : f32
    %322 = vector.broadcast %cst_119 : f32 to vector<8x32xf32>
    %323 = arith.addf %322, %321 : vector<8x32xf32>
    %324 = arith.divf %322, %323 : vector<8x32xf32>
    %325 = vector.extract_strided_slice %312 {offsets = [0, 64], sizes = [8, 32], strides = [1, 1]} : vector<8x128xf32> to vector<8x32xf32>
    %326 = math.tanh %325 : vector<8x32xf32>
    %327 = vector.extract_strided_slice %312 {offsets = [0, 96], sizes = [8, 32], strides = [1, 1]} : vector<8x128xf32> to vector<8x32xf32>
    %328 = arith.negf %327 : vector<8x32xf32>
    %329 = math.exp %328 : vector<8x32xf32>
    %cst_120 = arith.constant 1.000000e+00 : f32
    %330 = vector.broadcast %cst_120 : f32 to vector<8x32xf32>
    %331 = arith.addf %330, %329 : vector<8x32xf32>
    %332 = arith.divf %330, %331 : vector<8x32xf32>
    %333 = arith.mulf %324, %269 : vector<8x32xf32>
    %334 = arith.mulf %318, %326 : vector<8x32xf32>
    %335 = arith.addf %333, %334 : vector<8x32xf32>
    %336 = math.tanh %335 : vector<8x32xf32>
    %337 = arith.mulf %332, %336 : vector<8x32xf32>
    %c3_121 = arith.constant 3 : index
    %c0_122 = arith.constant 0 : index
    %c0_123 = arith.constant 0 : index
    %338 = vector.load %arg6[%c3_121, %c0_122, %c0_123] : memref<8x8x32xf32, #tpu.memory_space<vmem>>, vector<1x8x32xf32>
    %339 = vector.shape_cast %338 : vector<1x8x32xf32> to vector<8x32xf32>
    %340 = vector.shape_cast %337 : vector<8x32xf32> to vector<1x8x32xf32>
    tpu.vector_store %arg6[%c3_121, %c0_122, %c0_123], %340 {strides = array<i32>} : memref<8x8x32xf32, #tpu.memory_space<vmem>>, vector<1x8x32xf32>,
    %c0_124 = arith.constant 0 : index
    %c0_125 = arith.constant 0 : index
    %341 = vector.load %arg3[%c0_124, %c0_125] : memref<32x128xf32, #tpu.memory_space<vmem>>, vector<32x128xf32>
    %cst_126 = arith.constant dense<0.000000e+00> : vector<8x128xf32>
    %342 = tpu.matmul %304, %341, %cst_126 {dimension_numbers = #tpu.dot_dimension_numbers<[1], [0], [0], [1], [0, 0, 1, 1], [], []>} : vector<8x32xf32>, vector<32x128xf32>, vector<8x128xf32> -> vector<8x128xf32>
    %c5_127 = arith.constant 5 : index
    %c0_128 = arith.constant 0 : index
    %c0_129 = arith.constant 0 : index
    %343 = vector.load %arg1[%c5_127, %c0_128, %c0_129] : memref<8x8x128xf32, #tpu.memory_space<vmem>>, vector<1x8x128xf32>
    %344 = vector.shape_cast %343 : vector<1x8x128xf32> to vector<8x128xf32>
    %345 = arith.addf %342, %344 : vector<8x128xf32>
    %346 = vector.extract_strided_slice %345 {offsets = [0, 0], sizes = [8, 32], strides = [1, 1]} : vector<8x128xf32> to vector<8x32xf32>
    %347 = arith.negf %346 : vector<8x32xf32>
    %348 = math.exp %347 : vector<8x32xf32>
    %cst_130 = arith.constant 1.000000e+00 : f32
    %349 = vector.broadcast %cst_130 : f32 to vector<8x32xf32>
    %350 = arith.addf %349, %348 : vector<8x32xf32>
    %351 = arith.divf %349, %350 : vector<8x32xf32>
    %352 = vector.extract_strided_slice %345 {offsets = [0, 32], sizes = [8, 32], strides = [1, 1]} : vector<8x128xf32> to vector<8x32xf32>
    %353 = arith.negf %352 : vector<8x32xf32>
    %354 = math.exp %353 : vector<8x32xf32>
    %cst_131 = arith.constant 1.000000e+00 : f32
    %355 = vector.broadcast %cst_131 : f32 to vector<8x32xf32>
    %356 = arith.addf %355, %354 : vector<8x32xf32>
    %357 = arith.divf %355, %356 : vector<8x32xf32>
    %358 = vector.extract_strided_slice %345 {offsets = [0, 64], sizes = [8, 32], strides = [1, 1]} : vector<8x128xf32> to vector<8x32xf32>
    %359 = math.tanh %358 : vector<8x32xf32>
    %360 = vector.extract_strided_slice %345 {offsets = [0, 96], sizes = [8, 32], strides = [1, 1]} : vector<8x128xf32> to vector<8x32xf32>
    %361 = arith.negf %360 : vector<8x32xf32>
    %362 = math.exp %361 : vector<8x32xf32>
    %cst_132 = arith.constant 1.000000e+00 : f32
    %363 = vector.broadcast %cst_132 : f32 to vector<8x32xf32>
    %364 = arith.addf %363, %362 : vector<8x32xf32>
    %365 = arith.divf %363, %364 : vector<8x32xf32>
    %366 = arith.mulf %357, %302 : vector<8x32xf32>
    %367 = arith.mulf %351, %359 : vector<8x32xf32>
    %368 = arith.addf %366, %367 : vector<8x32xf32>
    %369 = math.tanh %368 : vector<8x32xf32>
    %370 = arith.mulf %365, %369 : vector<8x32xf32>
    %c5_133 = arith.constant 5 : index
    %c0_134 = arith.constant 0 : index
    %c0_135 = arith.constant 0 : index
    %371 = vector.load %arg5[%c5_133, %c0_134, %c0_135] : memref<8x8x32xf32, #tpu.memory_space<vmem>>, vector<1x8x32xf32>
    %372 = vector.shape_cast %371 : vector<1x8x32xf32> to vector<8x32xf32>
    %373 = vector.shape_cast %370 : vector<8x32xf32> to vector<1x8x32xf32>
    tpu.vector_store %arg5[%c5_133, %c0_134, %c0_135], %373 {strides = array<i32>} : memref<8x8x32xf32, #tpu.memory_space<vmem>>, vector<1x8x32xf32>,
    %c0_136 = arith.constant 0 : index
    %c0_137 = arith.constant 0 : index
    %374 = vector.load %arg4[%c0_136, %c0_137] : memref<32x128xf32, #tpu.memory_space<vmem>>, vector<32x128xf32>
    %cst_138 = arith.constant dense<0.000000e+00> : vector<8x128xf32>
    %375 = tpu.matmul %337, %374, %cst_138 {dimension_numbers = #tpu.dot_dimension_numbers<[1], [0], [0], [1], [0, 0, 1, 1], [], []>} : vector<8x32xf32>, vector<32x128xf32>, vector<8x128xf32> -> vector<8x128xf32>
    %c2_139 = arith.constant 2 : index
    %c0_140 = arith.constant 0 : index
    %c0_141 = arith.constant 0 : index
    %376 = vector.load %arg2[%c2_139, %c0_140, %c0_141] : memref<8x8x128xf32, #tpu.memory_space<vmem>>, vector<1x8x128xf32>
    %377 = vector.shape_cast %376 : vector<1x8x128xf32> to vector<8x128xf32>
    %378 = arith.addf %375, %377 : vector<8x128xf32>
    %379 = vector.extract_strided_slice %378 {offsets = [0, 0], sizes = [8, 32], strides = [1, 1]} : vector<8x128xf32> to vector<8x32xf32>
    %380 = arith.negf %379 : vector<8x32xf32>
    %381 = math.exp %380 : vector<8x32xf32>
    %cst_142 = arith.constant 1.000000e+00 : f32
    %382 = vector.broadcast %cst_142 : f32 to vector<8x32xf32>
    %383 = arith.addf %382, %381 : vector<8x32xf32>
    %384 = arith.divf %382, %383 : vector<8x32xf32>
    %385 = vector.extract_strided_slice %378 {offsets = [0, 32], sizes = [8, 32], strides = [1, 1]} : vector<8x128xf32> to vector<8x32xf32>
    %386 = arith.negf %385 : vector<8x32xf32>
    %387 = math.exp %386 : vector<8x32xf32>
    %cst_143 = arith.constant 1.000000e+00 : f32
    %388 = vector.broadcast %cst_143 : f32 to vector<8x32xf32>
    %389 = arith.addf %388, %387 : vector<8x32xf32>
    %390 = arith.divf %388, %389 : vector<8x32xf32>
    %391 = vector.extract_strided_slice %378 {offsets = [0, 64], sizes = [8, 32], strides = [1, 1]} : vector<8x128xf32> to vector<8x32xf32>
    %392 = math.tanh %391 : vector<8x32xf32>
    %393 = vector.extract_strided_slice %378 {offsets = [0, 96], sizes = [8, 32], strides = [1, 1]} : vector<8x128xf32> to vector<8x32xf32>
    %394 = arith.negf %393 : vector<8x32xf32>
    %395 = math.exp %394 : vector<8x32xf32>
    %cst_144 = arith.constant 1.000000e+00 : f32
    %396 = vector.broadcast %cst_144 : f32 to vector<8x32xf32>
    %397 = arith.addf %396, %395 : vector<8x32xf32>
    %398 = arith.divf %396, %397 : vector<8x32xf32>
    %399 = arith.mulf %390, %335 : vector<8x32xf32>
    %400 = arith.mulf %384, %392 : vector<8x32xf32>
    %401 = arith.addf %399, %400 : vector<8x32xf32>
    %402 = math.tanh %401 : vector<8x32xf32>
    %403 = arith.mulf %398, %402 : vector<8x32xf32>
    %c2_145 = arith.constant 2 : index
    %c0_146 = arith.constant 0 : index
    %c0_147 = arith.constant 0 : index
    %404 = vector.load %arg6[%c2_145, %c0_146, %c0_147] : memref<8x8x32xf32, #tpu.memory_space<vmem>>, vector<1x8x32xf32>
    %405 = vector.shape_cast %404 : vector<1x8x32xf32> to vector<8x32xf32>
    %406 = vector.shape_cast %403 : vector<8x32xf32> to vector<1x8x32xf32>
    tpu.vector_store %arg6[%c2_145, %c0_146, %c0_147], %406 {strides = array<i32>} : memref<8x8x32xf32, #tpu.memory_space<vmem>>, vector<1x8x32xf32>,
    %c0_148 = arith.constant 0 : index
    %c0_149 = arith.constant 0 : index
    %407 = vector.load %arg3[%c0_148, %c0_149] : memref<32x128xf32, #tpu.memory_space<vmem>>, vector<32x128xf32>
    %cst_150 = arith.constant dense<0.000000e+00> : vector<8x128xf32>
    %408 = tpu.matmul %370, %407, %cst_150 {dimension_numbers = #tpu.dot_dimension_numbers<[1], [0], [0], [1], [0, 0, 1, 1], [], []>} : vector<8x32xf32>, vector<32x128xf32>, vector<8x128xf32> -> vector<8x128xf32>
    %c6_151 = arith.constant 6 : index
    %c0_152 = arith.constant 0 : index
    %c0_153 = arith.constant 0 : index
    %409 = vector.load %arg1[%c6_151, %c0_152, %c0_153] : memref<8x8x128xf32, #tpu.memory_space<vmem>>, vector<1x8x128xf32>
    %410 = vector.shape_cast %409 : vector<1x8x128xf32> to vector<8x128xf32>
    %411 = arith.addf %408, %410 : vector<8x128xf32>
    %412 = vector.extract_strided_slice %411 {offsets = [0, 0], sizes = [8, 32], strides = [1, 1]} : vector<8x128xf32> to vector<8x32xf32>
    %413 = arith.negf %412 : vector<8x32xf32>
    %414 = math.exp %413 : vector<8x32xf32>
    %cst_154 = arith.constant 1.000000e+00 : f32
    %415 = vector.broadcast %cst_154 : f32 to vector<8x32xf32>
    %416 = arith.addf %415, %414 : vector<8x32xf32>
    %417 = arith.divf %415, %416 : vector<8x32xf32>
    %418 = vector.extract_strided_slice %411 {offsets = [0, 32], sizes = [8, 32], strides = [1, 1]} : vector<8x128xf32> to vector<8x32xf32>
    %419 = arith.negf %418 : vector<8x32xf32>
    %420 = math.exp %419 : vector<8x32xf32>
    %cst_155 = arith.constant 1.000000e+00 : f32
    %421 = vector.broadcast %cst_155 : f32 to vector<8x32xf32>
    %422 = arith.addf %421, %420 : vector<8x32xf32>
    %423 = arith.divf %421, %422 : vector<8x32xf32>
    %424 = vector.extract_strided_slice %411 {offsets = [0, 64], sizes = [8, 32], strides = [1, 1]} : vector<8x128xf32> to vector<8x32xf32>
    %425 = math.tanh %424 : vector<8x32xf32>
    %426 = vector.extract_strided_slice %411 {offsets = [0, 96], sizes = [8, 32], strides = [1, 1]} : vector<8x128xf32> to vector<8x32xf32>
    %427 = arith.negf %426 : vector<8x32xf32>
    %428 = math.exp %427 : vector<8x32xf32>
    %cst_156 = arith.constant 1.000000e+00 : f32
    %429 = vector.broadcast %cst_156 : f32 to vector<8x32xf32>
    %430 = arith.addf %429, %428 : vector<8x32xf32>
    %431 = arith.divf %429, %430 : vector<8x32xf32>
    %432 = arith.mulf %423, %368 : vector<8x32xf32>
    %433 = arith.mulf %417, %425 : vector<8x32xf32>
    %434 = arith.addf %432, %433 : vector<8x32xf32>
    %435 = math.tanh %434 : vector<8x32xf32>
    %436 = arith.mulf %431, %435 : vector<8x32xf32>
    %c6_157 = arith.constant 6 : index
    %c0_158 = arith.constant 0 : index
    %c0_159 = arith.constant 0 : index
    %437 = vector.load %arg5[%c6_157, %c0_158, %c0_159] : memref<8x8x32xf32, #tpu.memory_space<vmem>>, vector<1x8x32xf32>
    %438 = vector.shape_cast %437 : vector<1x8x32xf32> to vector<8x32xf32>
    %439 = vector.shape_cast %436 : vector<8x32xf32> to vector<1x8x32xf32>
    tpu.vector_store %arg5[%c6_157, %c0_158, %c0_159], %439 {strides = array<i32>} : memref<8x8x32xf32, #tpu.memory_space<vmem>>, vector<1x8x32xf32>,
    %c0_160 = arith.constant 0 : index
    %c0_161 = arith.constant 0 : index
    %440 = vector.load %arg4[%c0_160, %c0_161] : memref<32x128xf32, #tpu.memory_space<vmem>>, vector<32x128xf32>
    %cst_162 = arith.constant dense<0.000000e+00> : vector<8x128xf32>
    %441 = tpu.matmul %403, %440, %cst_162 {dimension_numbers = #tpu.dot_dimension_numbers<[1], [0], [0], [1], [0, 0, 1, 1], [], []>} : vector<8x32xf32>, vector<32x128xf32>, vector<8x128xf32> -> vector<8x128xf32>
    %c1_163 = arith.constant 1 : index
    %c0_164 = arith.constant 0 : index
    %c0_165 = arith.constant 0 : index
    %442 = vector.load %arg2[%c1_163, %c0_164, %c0_165] : memref<8x8x128xf32, #tpu.memory_space<vmem>>, vector<1x8x128xf32>
    %443 = vector.shape_cast %442 : vector<1x8x128xf32> to vector<8x128xf32>
    %444 = arith.addf %441, %443 : vector<8x128xf32>
    %445 = vector.extract_strided_slice %444 {offsets = [0, 0], sizes = [8, 32], strides = [1, 1]} : vector<8x128xf32> to vector<8x32xf32>
    %446 = arith.negf %445 : vector<8x32xf32>
    %447 = math.exp %446 : vector<8x32xf32>
    %cst_166 = arith.constant 1.000000e+00 : f32
    %448 = vector.broadcast %cst_166 : f32 to vector<8x32xf32>
    %449 = arith.addf %448, %447 : vector<8x32xf32>
    %450 = arith.divf %448, %449 : vector<8x32xf32>
    %451 = vector.extract_strided_slice %444 {offsets = [0, 32], sizes = [8, 32], strides = [1, 1]} : vector<8x128xf32> to vector<8x32xf32>
    %452 = arith.negf %451 : vector<8x32xf32>
    %453 = math.exp %452 : vector<8x32xf32>
    %cst_167 = arith.constant 1.000000e+00 : f32
    %454 = vector.broadcast %cst_167 : f32 to vector<8x32xf32>
    %455 = arith.addf %454, %453 : vector<8x32xf32>
    %456 = arith.divf %454, %455 : vector<8x32xf32>
    %457 = vector.extract_strided_slice %444 {offsets = [0, 64], sizes = [8, 32], strides = [1, 1]} : vector<8x128xf32> to vector<8x32xf32>
    %458 = math.tanh %457 : vector<8x32xf32>
    %459 = vector.extract_strided_slice %444 {offsets = [0, 96], sizes = [8, 32], strides = [1, 1]} : vector<8x128xf32> to vector<8x32xf32>
    %460 = arith.negf %459 : vector<8x32xf32>
    %461 = math.exp %460 : vector<8x32xf32>
    %cst_168 = arith.constant 1.000000e+00 : f32
    %462 = vector.broadcast %cst_168 : f32 to vector<8x32xf32>
    %463 = arith.addf %462, %461 : vector<8x32xf32>
    %464 = arith.divf %462, %463 : vector<8x32xf32>
    %465 = arith.mulf %456, %401 : vector<8x32xf32>
    %466 = arith.mulf %450, %458 : vector<8x32xf32>
    %467 = arith.addf %465, %466 : vector<8x32xf32>
    %468 = math.tanh %467 : vector<8x32xf32>
    %469 = arith.mulf %464, %468 : vector<8x32xf32>
    %c1_169 = arith.constant 1 : index
    %c0_170 = arith.constant 0 : index
    %c0_171 = arith.constant 0 : index
    %470 = vector.load %arg6[%c1_169, %c0_170, %c0_171] : memref<8x8x32xf32, #tpu.memory_space<vmem>>, vector<1x8x32xf32>
    %471 = vector.shape_cast %470 : vector<1x8x32xf32> to vector<8x32xf32>
    %472 = vector.shape_cast %469 : vector<8x32xf32> to vector<1x8x32xf32>
    tpu.vector_store %arg6[%c1_169, %c0_170, %c0_171], %472 {strides = array<i32>} : memref<8x8x32xf32, #tpu.memory_space<vmem>>, vector<1x8x32xf32>,
    %c0_172 = arith.constant 0 : index
    %c0_173 = arith.constant 0 : index
    %473 = vector.load %arg3[%c0_172, %c0_173] : memref<32x128xf32, #tpu.memory_space<vmem>>, vector<32x128xf32>
    %cst_174 = arith.constant dense<0.000000e+00> : vector<8x128xf32>
    %474 = tpu.matmul %436, %473, %cst_174 {dimension_numbers = #tpu.dot_dimension_numbers<[1], [0], [0], [1], [0, 0, 1, 1], [], []>} : vector<8x32xf32>, vector<32x128xf32>, vector<8x128xf32> -> vector<8x128xf32>
    %c7_175 = arith.constant 7 : index
    %c0_176 = arith.constant 0 : index
    %c0_177 = arith.constant 0 : index
    %475 = vector.load %arg1[%c7_175, %c0_176, %c0_177] : memref<8x8x128xf32, #tpu.memory_space<vmem>>, vector<1x8x128xf32>
    %476 = vector.shape_cast %475 : vector<1x8x128xf32> to vector<8x128xf32>
    %477 = arith.addf %474, %476 : vector<8x128xf32>
    %478 = vector.extract_strided_slice %477 {offsets = [0, 0], sizes = [8, 32], strides = [1, 1]} : vector<8x128xf32> to vector<8x32xf32>
    %479 = arith.negf %478 : vector<8x32xf32>
    %480 = math.exp %479 : vector<8x32xf32>
    %cst_178 = arith.constant 1.000000e+00 : f32
    %481 = vector.broadcast %cst_178 : f32 to vector<8x32xf32>
    %482 = arith.addf %481, %480 : vector<8x32xf32>
    %483 = arith.divf %481, %482 : vector<8x32xf32>
    %484 = vector.extract_strided_slice %477 {offsets = [0, 32], sizes = [8, 32], strides = [1, 1]} : vector<8x128xf32> to vector<8x32xf32>
    %485 = arith.negf %484 : vector<8x32xf32>
    %486 = math.exp %485 : vector<8x32xf32>
    %cst_179 = arith.constant 1.000000e+00 : f32
    %487 = vector.broadcast %cst_179 : f32 to vector<8x32xf32>
    %488 = arith.addf %487, %486 : vector<8x32xf32>
    %489 = arith.divf %487, %488 : vector<8x32xf32>
    %490 = vector.extract_strided_slice %477 {offsets = [0, 64], sizes = [8, 32], strides = [1, 1]} : vector<8x128xf32> to vector<8x32xf32>
    %491 = math.tanh %490 : vector<8x32xf32>
    %492 = vector.extract_strided_slice %477 {offsets = [0, 96], sizes = [8, 32], strides = [1, 1]} : vector<8x128xf32> to vector<8x32xf32>
    %493 = arith.negf %492 : vector<8x32xf32>
    %494 = math.exp %493 : vector<8x32xf32>
    %cst_180 = arith.constant 1.000000e+00 : f32
    %495 = vector.broadcast %cst_180 : f32 to vector<8x32xf32>
    %496 = arith.addf %495, %494 : vector<8x32xf32>
    %497 = arith.divf %495, %496 : vector<8x32xf32>
    %498 = arith.mulf %489, %434 : vector<8x32xf32>
    %499 = arith.mulf %483, %491 : vector<8x32xf32>
    %500 = arith.addf %498, %499 : vector<8x32xf32>
    %501 = math.tanh %500 : vector<8x32xf32>
    %502 = arith.mulf %497, %501 : vector<8x32xf32>
    %c7_181 = arith.constant 7 : index
    %c0_182 = arith.constant 0 : index
    %c0_183 = arith.constant 0 : index
    %503 = vector.load %arg5[%c7_181, %c0_182, %c0_183] : memref<8x8x32xf32, #tpu.memory_space<vmem>>, vector<1x8x32xf32>
    %504 = vector.shape_cast %503 : vector<1x8x32xf32> to vector<8x32xf32>
    %505 = vector.shape_cast %502 : vector<8x32xf32> to vector<1x8x32xf32>
    tpu.vector_store %arg5[%c7_181, %c0_182, %c0_183], %505 {strides = array<i32>} : memref<8x8x32xf32, #tpu.memory_space<vmem>>, vector<1x8x32xf32>,
    %c0_184 = arith.constant 0 : index
    %c0_185 = arith.constant 0 : index
    %506 = vector.load %arg4[%c0_184, %c0_185] : memref<32x128xf32, #tpu.memory_space<vmem>>, vector<32x128xf32>
    %cst_186 = arith.constant dense<0.000000e+00> : vector<8x128xf32>
    %507 = tpu.matmul %469, %506, %cst_186 {dimension_numbers = #tpu.dot_dimension_numbers<[1], [0], [0], [1], [0, 0, 1, 1], [], []>} : vector<8x32xf32>, vector<32x128xf32>, vector<8x128xf32> -> vector<8x128xf32>
    %c0_187 = arith.constant 0 : index
    %c0_188 = arith.constant 0 : index
    %c0_189 = arith.constant 0 : index
    %508 = vector.load %arg2[%c0_187, %c0_188, %c0_189] : memref<8x8x128xf32, #tpu.memory_space<vmem>>, vector<1x8x128xf32>
    %509 = vector.shape_cast %508 : vector<1x8x128xf32> to vector<8x128xf32>
    %510 = arith.addf %507, %509 : vector<8x128xf32>
    %511 = vector.extract_strided_slice %510 {offsets = [0, 0], sizes = [8, 32], strides = [1, 1]} : vector<8x128xf32> to vector<8x32xf32>
    %512 = arith.negf %511 : vector<8x32xf32>
    %513 = math.exp %512 : vector<8x32xf32>
    %cst_190 = arith.constant 1.000000e+00 : f32
    %514 = vector.broadcast %cst_190 : f32 to vector<8x32xf32>
    %515 = arith.addf %514, %513 : vector<8x32xf32>
    %516 = arith.divf %514, %515 : vector<8x32xf32>
    %517 = vector.extract_strided_slice %510 {offsets = [0, 32], sizes = [8, 32], strides = [1, 1]} : vector<8x128xf32> to vector<8x32xf32>
    %518 = arith.negf %517 : vector<8x32xf32>
    %519 = math.exp %518 : vector<8x32xf32>
    %cst_191 = arith.constant 1.000000e+00 : f32
    %520 = vector.broadcast %cst_191 : f32 to vector<8x32xf32>
    %521 = arith.addf %520, %519 : vector<8x32xf32>
    %522 = arith.divf %520, %521 : vector<8x32xf32>
    %523 = vector.extract_strided_slice %510 {offsets = [0, 64], sizes = [8, 32], strides = [1, 1]} : vector<8x128xf32> to vector<8x32xf32>
    %524 = math.tanh %523 : vector<8x32xf32>
    %525 = vector.extract_strided_slice %510 {offsets = [0, 96], sizes = [8, 32], strides = [1, 1]} : vector<8x128xf32> to vector<8x32xf32>
    %526 = arith.negf %525 : vector<8x32xf32>
    %527 = math.exp %526 : vector<8x32xf32>
    %cst_192 = arith.constant 1.000000e+00 : f32
    %528 = vector.broadcast %cst_192 : f32 to vector<8x32xf32>
    %529 = arith.addf %528, %527 : vector<8x32xf32>
    %530 = arith.divf %528, %529 : vector<8x32xf32>
    %531 = arith.mulf %522, %467 : vector<8x32xf32>
    %532 = arith.mulf %516, %524 : vector<8x32xf32>
    %533 = arith.addf %531, %532 : vector<8x32xf32>
    %534 = math.tanh %533 : vector<8x32xf32>
    %535 = arith.mulf %530, %534 : vector<8x32xf32>
    %c0_193 = arith.constant 0 : index
    %c0_194 = arith.constant 0 : index
    %c0_195 = arith.constant 0 : index
    %536 = vector.load %arg6[%c0_193, %c0_194, %c0_195] : memref<8x8x32xf32, #tpu.memory_space<vmem>>, vector<1x8x32xf32>
    %537 = vector.shape_cast %536 : vector<1x8x32xf32> to vector<8x32xf32>
    %538 = vector.shape_cast %535 : vector<8x32xf32> to vector<1x8x32xf32>
    tpu.vector_store %arg6[%c0_193, %c0_194, %c0_195], %538 {strides = array<i32>} : memref<8x8x32xf32, #tpu.memory_space<vmem>>, vector<1x8x32xf32>,
    %c0_196 = arith.constant 0 : index
    %c0_197 = arith.constant 0 : index
    %c0_198 = arith.constant 0 : index
    %539 = vector.load %arg8[%c0_196, %c0_197, %c0_198] : memref<2x8x32xf32, #tpu.memory_space<vmem>>, vector<1x8x32xf32>
    %540 = vector.shape_cast %539 : vector<1x8x32xf32> to vector<8x32xf32>
    %541 = vector.shape_cast %502 : vector<8x32xf32> to vector<1x8x32xf32>
    tpu.vector_store %arg8[%c0_196, %c0_197, %c0_198], %541 {strides = array<i32>} : memref<2x8x32xf32, #tpu.memory_space<vmem>>, vector<1x8x32xf32>,
    %c0_199 = arith.constant 0 : index
    %c0_200 = arith.constant 0 : index
    %c0_201 = arith.constant 0 : index
    %542 = vector.load %arg9[%c0_199, %c0_200, %c0_201] : memref<2x8x32xf32, #tpu.memory_space<vmem>>, vector<1x8x32xf32>
    %543 = vector.shape_cast %542 : vector<1x8x32xf32> to vector<8x32xf32>
    %544 = vector.shape_cast %500 : vector<8x32xf32> to vector<1x8x32xf32>
    tpu.vector_store %arg9[%c0_199, %c0_200, %c0_201], %544 {strides = array<i32>} : memref<2x8x32xf32, #tpu.memory_space<vmem>>, vector<1x8x32xf32>,
    %c1_202 = arith.constant 1 : index
    %c0_203 = arith.constant 0 : index
    %c0_204 = arith.constant 0 : index
    %545 = vector.load %arg8[%c1_202, %c0_203, %c0_204] : memref<2x8x32xf32, #tpu.memory_space<vmem>>, vector<1x8x32xf32>
    %546 = vector.shape_cast %545 : vector<1x8x32xf32> to vector<8x32xf32>
    %547 = vector.shape_cast %535 : vector<8x32xf32> to vector<1x8x32xf32>
    tpu.vector_store %arg8[%c1_202, %c0_203, %c0_204], %547 {strides = array<i32>} : memref<2x8x32xf32, #tpu.memory_space<vmem>>, vector<1x8x32xf32>,
    %c1_205 = arith.constant 1 : index
    %c0_206 = arith.constant 0 : index
    %c0_207 = arith.constant 0 : index
    %548 = vector.load %arg9[%c1_205, %c0_206, %c0_207] : memref<2x8x32xf32, #tpu.memory_space<vmem>>, vector<1x8x32xf32>
    %549 = vector.shape_cast %548 : vector<1x8x32xf32> to vector<8x32xf32>
    %550 = vector.shape_cast %533 : vector<8x32xf32> to vector<1x8x32xf32>
    tpu.vector_store %arg9[%c1_205, %c0_206, %c0_207], %550 {strides = array<i32>} : memref<2x8x32xf32, #tpu.memory_space<vmem>>, vector<1x8x32xf32>,
    %c0_i32_208 = arith.constant 0 : i32
    %551 = arith.cmpi eq, %arg0, %c0_i32_208 : i32
    %552 = arith.extui %551 : i1 to i32
    %c0_i32_209 = arith.constant 0 : i32
    %553 = arith.cmpi ne, %552, %c0_i32_209 : i32
    scf.if %553 {
      %c0_210 = arith.constant 0 : index
      %c0_211 = arith.constant 0 : index
      %c0_212 = arith.constant 0 : index
      %554 = vector.load %arg7[%c0_210, %c0_211, %c0_212] : memref<2x8x32xf32, #tpu.memory_space<vmem>>, vector<1x8x32xf32>
      %555 = vector.shape_cast %554 : vector<1x8x32xf32> to vector<8x32xf32>
      %556 = vector.shape_cast %502 : vector<8x32xf32> to vector<1x8x32xf32>
      tpu.vector_store %arg7[%c0_210, %c0_211, %c0_212], %556 {strides = array<i32>} : memref<2x8x32xf32, #tpu.memory_space<vmem>>, vector<1x8x32xf32>,
      %c1_213 = arith.constant 1 : index
      %c0_214 = arith.constant 0 : index
      %c0_215 = arith.constant 0 : index
      %557 = vector.load %arg7[%c1_213, %c0_214, %c0_215] : memref<2x8x32xf32, #tpu.memory_space<vmem>>, vector<1x8x32xf32>
      %558 = vector.shape_cast %557 : vector<1x8x32xf32> to vector<8x32xf32>
      %559 = vector.shape_cast %535 : vector<8x32xf32> to vector<1x8x32xf32>
      tpu.vector_store %arg7[%c1_213, %c0_214, %c0_215], %559 {strides = array<i32>} : memref<2x8x32xf32, #tpu.memory_space<vmem>>, vector<1x8x32xf32>,
    } else {
    }
    return
  }
  func.func @transform_0(%arg0: i32) -> (i32, i32, i32) {
    %c0_i32 = arith.constant 0 : i32
    %c0_i32_0 = arith.constant 0 : i32
    %c0_i32_1 = arith.constant 0 : i32
    return %arg0, %c0_i32, %c0_i32_0 : i32, i32, i32
  }
  func.func @transform_1(%arg0: i32) -> (i32, i32, i32) {
    %c0_i32 = arith.constant 0 : i32
    %0 = arith.subi %c0_i32, %arg0 : i32
    %c0_i32_0 = arith.constant 0 : i32
    %c0_i32_1 = arith.constant 0 : i32
    %c0_i32_2 = arith.constant 0 : i32
    return %0, %c0_i32_0, %c0_i32_1 : i32, i32, i32
  }
  func.func @transform_2(%arg0: i32) -> (i32, i32) {
    %c0_i32 = arith.constant 0 : i32
    %c0_i32_0 = arith.constant 0 : i32
    %c0_i32_1 = arith.constant 0 : i32
    return %c0_i32, %c0_i32_0 : i32, i32
  }
  func.func @transform_3(%arg0: i32) -> (i32, i32) {
    %c0_i32 = arith.constant 0 : i32
    %c0_i32_0 = arith.constant 0 : i32
    %c0_i32_1 = arith.constant 0 : i32
    return %c0_i32, %c0_i32_0 : i32, i32
  }
  func.func @transform_4(%arg0: i32) -> (i32, i32, i32) {
    %c0_i32 = arith.constant 0 : i32
    %c0_i32_0 = arith.constant 0 : i32
    %c0_i32_1 = arith.constant 0 : i32
    return %arg0, %c0_i32, %c0_i32_0 : i32, i32, i32
  }
  func.func @transform_5(%arg0: i32) -> (i32, i32, i32) {
    %c0_i32 = arith.constant 0 : i32
    %0 = arith.subi %c0_i32, %arg0 : i32
    %c0_i32_0 = arith.constant 0 : i32
    %c0_i32_1 = arith.constant 0 : i32
    %c0_i32_2 = arith.constant 0 : i32
    return %0, %c0_i32_0, %c0_i32_1 : i32, i32, i32
  }
  func.func @transform_6(%arg0: i32) -> (i32, i32, i32) {
    %c0_i32 = arith.constant 0 : i32
    %c0_i32_0 = arith.constant 0 : i32
    %c0_i32_1 = arith.constant 0 : i32
    %c0_i32_2 = arith.constant 0 : i32
    return %c0_i32, %c0_i32_0, %c0_i32_1 : i32, i32, i32
  }
}

module attributes {stable_mosaic.version = 11 : i64} {
  func.func @_lstm_layer_kernel(%arg0: i32, %arg1: memref<8x8x128xf32, #tpu.memory_space<vmem>>, %arg2: memref<8x8x128xf32, #tpu.memory_space<vmem>>, %arg3: memref<32x128xf32, #tpu.memory_space<vmem>>, %arg4: memref<32x128xf32, #tpu.memory_space<vmem>>, %arg5: memref<2x8x32xf32, #tpu.memory_space<vmem>>, %arg6: memref<2x8x32xf32, #tpu.memory_space<vmem>>, %arg7: memref<2x8x32xf32, #tpu.memory_space<vmem>>) attributes {dimension_semantics = [#tpu.dimension_semantics<arbitrary>], iteration_bounds = array<i64: 1>, scalar_prefetch = 0 : i64, scratch_operands = 2 : i64, tpu.core_type = #tpu.core_type<tc>, window_params = [{transform_indices = @transform_0, window_bounds = array<i64: 8, 8, 128>}, {transform_indices = @transform_1, window_bounds = array<i64: 8, 8, 128>}, {pipeline_mode = #tpu.pipeline_mode<synchronous>, transform_indices = @transform_2, window_bounds = array<i64: 32, 128>}, {pipeline_mode = #tpu.pipeline_mode<synchronous>, transform_indices = @transform_3, window_bounds = array<i64: 32, 128>}, {pipeline_mode = #tpu.pipeline_mode<synchronous>, transform_indices = @transform_4, window_bounds = array<i64: 2, 8, 32>}]} {
    %c0_i32 = arith.constant 0 : i32
    %0 = arith.cmpi eq, %arg0, %c0_i32 : i32
    %1 = arith.extui %0 : i1 to i32
    %c0_i32_0 = arith.constant 0 : i32
    %2 = arith.cmpi ne, %1, %c0_i32_0 : i32
    scf.if %2 {
      %cst_162 = arith.constant 0.000000e+00 : f32
      %506 = vector.broadcast %cst_162 : f32 to vector<2x8x32xf32>
      %c0_163 = arith.constant 0 : index
      %c0_164 = arith.constant 0 : index
      %c0_165 = arith.constant 0 : index
      %507 = vector.load %arg6[%c0_163, %c0_164, %c0_165] : memref<2x8x32xf32, #tpu.memory_space<vmem>>, vector<2x8x32xf32>
      tpu.vector_store %arg6[%c0_163, %c0_164, %c0_165], %506 {strides = array<i32>} : memref<2x8x32xf32, #tpu.memory_space<vmem>>, vector<2x8x32xf32>,
      %cst_166 = arith.constant 0.000000e+00 : f32
      %508 = vector.broadcast %cst_166 : f32 to vector<2x8x32xf32>
      %c0_167 = arith.constant 0 : index
      %c0_168 = arith.constant 0 : index
      %c0_169 = arith.constant 0 : index
      %509 = vector.load %arg7[%c0_167, %c0_168, %c0_169] : memref<2x8x32xf32, #tpu.memory_space<vmem>>, vector<2x8x32xf32>
      tpu.vector_store %arg7[%c0_167, %c0_168, %c0_169], %508 {strides = array<i32>} : memref<2x8x32xf32, #tpu.memory_space<vmem>>, vector<2x8x32xf32>,
    } else {
    }
    %c0 = arith.constant 0 : index
    %c0_1 = arith.constant 0 : index
    %c0_2 = arith.constant 0 : index
    %3 = vector.load %arg6[%c0, %c0_1, %c0_2] : memref<2x8x32xf32, #tpu.memory_space<vmem>>, vector<1x8x32xf32>
    %4 = vector.shape_cast %3 : vector<1x8x32xf32> to vector<8x32xf32>
    %c1 = arith.constant 1 : index
    %c0_3 = arith.constant 0 : index
    %c0_4 = arith.constant 0 : index
    %5 = vector.load %arg6[%c1, %c0_3, %c0_4] : memref<2x8x32xf32, #tpu.memory_space<vmem>>, vector<1x8x32xf32>
    %6 = vector.shape_cast %5 : vector<1x8x32xf32> to vector<8x32xf32>
    %c0_5 = arith.constant 0 : index
    %c0_6 = arith.constant 0 : index
    %c0_7 = arith.constant 0 : index
    %7 = vector.load %arg7[%c0_5, %c0_6, %c0_7] : memref<2x8x32xf32, #tpu.memory_space<vmem>>, vector<1x8x32xf32>
    %8 = vector.shape_cast %7 : vector<1x8x32xf32> to vector<8x32xf32>
    %c1_8 = arith.constant 1 : index
    %c0_9 = arith.constant 0 : index
    %c0_10 = arith.constant 0 : index
    %9 = vector.load %arg7[%c1_8, %c0_9, %c0_10] : memref<2x8x32xf32, #tpu.memory_space<vmem>>, vector<1x8x32xf32>
    %10 = vector.shape_cast %9 : vector<1x8x32xf32> to vector<8x32xf32>
    %c0_11 = arith.constant 0 : index
    %c0_12 = arith.constant 0 : index
    %11 = vector.load %arg3[%c0_11, %c0_12] : memref<32x128xf32, #tpu.memory_space<vmem>>, vector<32x128xf32>
    %cst = arith.constant dense<0.000000e+00> : vector<8x128xf32>
    %12 = tpu.matmul %4, %11, %cst {dimension_numbers = #tpu.dot_dimension_numbers<[1], [0], [0], [1], [0, 0, 1, 1], [], []>} : vector<8x32xf32>, vector<32x128xf32>, vector<8x128xf32> -> vector<8x128xf32>
    %c0_13 = arith.constant 0 : index
    %c0_14 = arith.constant 0 : index
    %c0_15 = arith.constant 0 : index
    %13 = vector.load %arg1[%c0_13, %c0_14, %c0_15] : memref<8x8x128xf32, #tpu.memory_space<vmem>>, vector<1x8x128xf32>
    %14 = vector.shape_cast %13 : vector<1x8x128xf32> to vector<8x128xf32>
    %15 = arith.addf %12, %14 : vector<8x128xf32>
    %16 = vector.extract_strided_slice %15 {offsets = [0, 0], sizes = [8, 32], strides = [1, 1]} : vector<8x128xf32> to vector<8x32xf32>
    %17 = arith.negf %16 : vector<8x32xf32>
    %18 = math.exp %17 : vector<8x32xf32>
    %cst_16 = arith.constant 1.000000e+00 : f32
    %19 = vector.broadcast %cst_16 : f32 to vector<8x32xf32>
    %20 = arith.addf %19, %18 : vector<8x32xf32>
    %21 = arith.divf %19, %20 : vector<8x32xf32>
    %22 = vector.extract_strided_slice %15 {offsets = [0, 32], sizes = [8, 32], strides = [1, 1]} : vector<8x128xf32> to vector<8x32xf32>
    %23 = arith.negf %22 : vector<8x32xf32>
    %24 = math.exp %23 : vector<8x32xf32>
    %cst_17 = arith.constant 1.000000e+00 : f32
    %25 = vector.broadcast %cst_17 : f32 to vector<8x32xf32>
    %26 = arith.addf %25, %24 : vector<8x32xf32>
    %27 = arith.divf %25, %26 : vector<8x32xf32>
    %28 = vector.extract_strided_slice %15 {offsets = [0, 64], sizes = [8, 32], strides = [1, 1]} : vector<8x128xf32> to vector<8x32xf32>
    %29 = math.tanh %28 : vector<8x32xf32>
    %30 = vector.extract_strided_slice %15 {offsets = [0, 96], sizes = [8, 32], strides = [1, 1]} : vector<8x128xf32> to vector<8x32xf32>
    %31 = arith.negf %30 : vector<8x32xf32>
    %32 = math.exp %31 : vector<8x32xf32>
    %cst_18 = arith.constant 1.000000e+00 : f32
    %33 = vector.broadcast %cst_18 : f32 to vector<8x32xf32>
    %34 = arith.addf %33, %32 : vector<8x32xf32>
    %35 = arith.divf %33, %34 : vector<8x32xf32>
    %36 = arith.mulf %27, %8 : vector<8x32xf32>
    %37 = arith.mulf %21, %29 : vector<8x32xf32>
    %38 = arith.addf %36, %37 : vector<8x32xf32>
    %39 = math.tanh %38 : vector<8x32xf32>
    %40 = arith.mulf %35, %39 : vector<8x32xf32>
    %c0_19 = arith.constant 0 : index
    %c0_20 = arith.constant 0 : index
    %41 = vector.load %arg4[%c0_19, %c0_20] : memref<32x128xf32, #tpu.memory_space<vmem>>, vector<32x128xf32>
    %cst_21 = arith.constant dense<0.000000e+00> : vector<8x128xf32>
    %42 = tpu.matmul %6, %41, %cst_21 {dimension_numbers = #tpu.dot_dimension_numbers<[1], [0], [0], [1], [0, 0, 1, 1], [], []>} : vector<8x32xf32>, vector<32x128xf32>, vector<8x128xf32> -> vector<8x128xf32>
    %c7 = arith.constant 7 : index
    %c0_22 = arith.constant 0 : index
    %c0_23 = arith.constant 0 : index
    %43 = vector.load %arg2[%c7, %c0_22, %c0_23] : memref<8x8x128xf32, #tpu.memory_space<vmem>>, vector<1x8x128xf32>
    %44 = vector.shape_cast %43 : vector<1x8x128xf32> to vector<8x128xf32>
    %45 = arith.addf %42, %44 : vector<8x128xf32>
    %46 = vector.extract_strided_slice %45 {offsets = [0, 0], sizes = [8, 32], strides = [1, 1]} : vector<8x128xf32> to vector<8x32xf32>
    %47 = arith.negf %46 : vector<8x32xf32>
    %48 = math.exp %47 : vector<8x32xf32>
    %cst_24 = arith.constant 1.000000e+00 : f32
    %49 = vector.broadcast %cst_24 : f32 to vector<8x32xf32>
    %50 = arith.addf %49, %48 : vector<8x32xf32>
    %51 = arith.divf %49, %50 : vector<8x32xf32>
    %52 = vector.extract_strided_slice %45 {offsets = [0, 32], sizes = [8, 32], strides = [1, 1]} : vector<8x128xf32> to vector<8x32xf32>
    %53 = arith.negf %52 : vector<8x32xf32>
    %54 = math.exp %53 : vector<8x32xf32>
    %cst_25 = arith.constant 1.000000e+00 : f32
    %55 = vector.broadcast %cst_25 : f32 to vector<8x32xf32>
    %56 = arith.addf %55, %54 : vector<8x32xf32>
    %57 = arith.divf %55, %56 : vector<8x32xf32>
    %58 = vector.extract_strided_slice %45 {offsets = [0, 64], sizes = [8, 32], strides = [1, 1]} : vector<8x128xf32> to vector<8x32xf32>
    %59 = math.tanh %58 : vector<8x32xf32>
    %60 = vector.extract_strided_slice %45 {offsets = [0, 96], sizes = [8, 32], strides = [1, 1]} : vector<8x128xf32> to vector<8x32xf32>
    %61 = arith.negf %60 : vector<8x32xf32>
    %62 = math.exp %61 : vector<8x32xf32>
    %cst_26 = arith.constant 1.000000e+00 : f32
    %63 = vector.broadcast %cst_26 : f32 to vector<8x32xf32>
    %64 = arith.addf %63, %62 : vector<8x32xf32>
    %65 = arith.divf %63, %64 : vector<8x32xf32>
    %66 = arith.mulf %57, %10 : vector<8x32xf32>
    %67 = arith.mulf %51, %59 : vector<8x32xf32>
    %68 = arith.addf %66, %67 : vector<8x32xf32>
    %69 = math.tanh %68 : vector<8x32xf32>
    %70 = arith.mulf %65, %69 : vector<8x32xf32>
    %c0_27 = arith.constant 0 : index
    %c0_28 = arith.constant 0 : index
    %71 = vector.load %arg3[%c0_27, %c0_28] : memref<32x128xf32, #tpu.memory_space<vmem>>, vector<32x128xf32>
    %cst_29 = arith.constant dense<0.000000e+00> : vector<8x128xf32>
    %72 = tpu.matmul %40, %71, %cst_29 {dimension_numbers = #tpu.dot_dimension_numbers<[1], [0], [0], [1], [0, 0, 1, 1], [], []>} : vector<8x32xf32>, vector<32x128xf32>, vector<8x128xf32> -> vector<8x128xf32>
    %c1_30 = arith.constant 1 : index
    %c0_31 = arith.constant 0 : index
    %c0_32 = arith.constant 0 : index
    %73 = vector.load %arg1[%c1_30, %c0_31, %c0_32] : memref<8x8x128xf32, #tpu.memory_space<vmem>>, vector<1x8x128xf32>
    %74 = vector.shape_cast %73 : vector<1x8x128xf32> to vector<8x128xf32>
    %75 = arith.addf %72, %74 : vector<8x128xf32>
    %76 = vector.extract_strided_slice %75 {offsets = [0, 0], sizes = [8, 32], strides = [1, 1]} : vector<8x128xf32> to vector<8x32xf32>
    %77 = arith.negf %76 : vector<8x32xf32>
    %78 = math.exp %77 : vector<8x32xf32>
    %cst_33 = arith.constant 1.000000e+00 : f32
    %79 = vector.broadcast %cst_33 : f32 to vector<8x32xf32>
    %80 = arith.addf %79, %78 : vector<8x32xf32>
    %81 = arith.divf %79, %80 : vector<8x32xf32>
    %82 = vector.extract_strided_slice %75 {offsets = [0, 32], sizes = [8, 32], strides = [1, 1]} : vector<8x128xf32> to vector<8x32xf32>
    %83 = arith.negf %82 : vector<8x32xf32>
    %84 = math.exp %83 : vector<8x32xf32>
    %cst_34 = arith.constant 1.000000e+00 : f32
    %85 = vector.broadcast %cst_34 : f32 to vector<8x32xf32>
    %86 = arith.addf %85, %84 : vector<8x32xf32>
    %87 = arith.divf %85, %86 : vector<8x32xf32>
    %88 = vector.extract_strided_slice %75 {offsets = [0, 64], sizes = [8, 32], strides = [1, 1]} : vector<8x128xf32> to vector<8x32xf32>
    %89 = math.tanh %88 : vector<8x32xf32>
    %90 = vector.extract_strided_slice %75 {offsets = [0, 96], sizes = [8, 32], strides = [1, 1]} : vector<8x128xf32> to vector<8x32xf32>
    %91 = arith.negf %90 : vector<8x32xf32>
    %92 = math.exp %91 : vector<8x32xf32>
    %cst_35 = arith.constant 1.000000e+00 : f32
    %93 = vector.broadcast %cst_35 : f32 to vector<8x32xf32>
    %94 = arith.addf %93, %92 : vector<8x32xf32>
    %95 = arith.divf %93, %94 : vector<8x32xf32>
    %96 = arith.mulf %87, %38 : vector<8x32xf32>
    %97 = arith.mulf %81, %89 : vector<8x32xf32>
    %98 = arith.addf %96, %97 : vector<8x32xf32>
    %99 = math.tanh %98 : vector<8x32xf32>
    %100 = arith.mulf %95, %99 : vector<8x32xf32>
    %c0_36 = arith.constant 0 : index
    %c0_37 = arith.constant 0 : index
    %101 = vector.load %arg4[%c0_36, %c0_37] : memref<32x128xf32, #tpu.memory_space<vmem>>, vector<32x128xf32>
    %cst_38 = arith.constant dense<0.000000e+00> : vector<8x128xf32>
    %102 = tpu.matmul %70, %101, %cst_38 {dimension_numbers = #tpu.dot_dimension_numbers<[1], [0], [0], [1], [0, 0, 1, 1], [], []>} : vector<8x32xf32>, vector<32x128xf32>, vector<8x128xf32> -> vector<8x128xf32>
    %c6 = arith.constant 6 : index
    %c0_39 = arith.constant 0 : index
    %c0_40 = arith.constant 0 : index
    %103 = vector.load %arg2[%c6, %c0_39, %c0_40] : memref<8x8x128xf32, #tpu.memory_space<vmem>>, vector<1x8x128xf32>
    %104 = vector.shape_cast %103 : vector<1x8x128xf32> to vector<8x128xf32>
    %105 = arith.addf %102, %104 : vector<8x128xf32>
    %106 = vector.extract_strided_slice %105 {offsets = [0, 0], sizes = [8, 32], strides = [1, 1]} : vector<8x128xf32> to vector<8x32xf32>
    %107 = arith.negf %106 : vector<8x32xf32>
    %108 = math.exp %107 : vector<8x32xf32>
    %cst_41 = arith.constant 1.000000e+00 : f32
    %109 = vector.broadcast %cst_41 : f32 to vector<8x32xf32>
    %110 = arith.addf %109, %108 : vector<8x32xf32>
    %111 = arith.divf %109, %110 : vector<8x32xf32>
    %112 = vector.extract_strided_slice %105 {offsets = [0, 32], sizes = [8, 32], strides = [1, 1]} : vector<8x128xf32> to vector<8x32xf32>
    %113 = arith.negf %112 : vector<8x32xf32>
    %114 = math.exp %113 : vector<8x32xf32>
    %cst_42 = arith.constant 1.000000e+00 : f32
    %115 = vector.broadcast %cst_42 : f32 to vector<8x32xf32>
    %116 = arith.addf %115, %114 : vector<8x32xf32>
    %117 = arith.divf %115, %116 : vector<8x32xf32>
    %118 = vector.extract_strided_slice %105 {offsets = [0, 64], sizes = [8, 32], strides = [1, 1]} : vector<8x128xf32> to vector<8x32xf32>
    %119 = math.tanh %118 : vector<8x32xf32>
    %120 = vector.extract_strided_slice %105 {offsets = [0, 96], sizes = [8, 32], strides = [1, 1]} : vector<8x128xf32> to vector<8x32xf32>
    %121 = arith.negf %120 : vector<8x32xf32>
    %122 = math.exp %121 : vector<8x32xf32>
    %cst_43 = arith.constant 1.000000e+00 : f32
    %123 = vector.broadcast %cst_43 : f32 to vector<8x32xf32>
    %124 = arith.addf %123, %122 : vector<8x32xf32>
    %125 = arith.divf %123, %124 : vector<8x32xf32>
    %126 = arith.mulf %117, %68 : vector<8x32xf32>
    %127 = arith.mulf %111, %119 : vector<8x32xf32>
    %128 = arith.addf %126, %127 : vector<8x32xf32>
    %129 = math.tanh %128 : vector<8x32xf32>
    %130 = arith.mulf %125, %129 : vector<8x32xf32>
    %c0_44 = arith.constant 0 : index
    %c0_45 = arith.constant 0 : index
    %131 = vector.load %arg3[%c0_44, %c0_45] : memref<32x128xf32, #tpu.memory_space<vmem>>, vector<32x128xf32>
    %cst_46 = arith.constant dense<0.000000e+00> : vector<8x128xf32>
    %132 = tpu.matmul %100, %131, %cst_46 {dimension_numbers = #tpu.dot_dimension_numbers<[1], [0], [0], [1], [0, 0, 1, 1], [], []>} : vector<8x32xf32>, vector<32x128xf32>, vector<8x128xf32> -> vector<8x128xf32>
    %c2 = arith.constant 2 : index
    %c0_47 = arith.constant 0 : index
    %c0_48 = arith.constant 0 : index
    %133 = vector.load %arg1[%c2, %c0_47, %c0_48] : memref<8x8x128xf32, #tpu.memory_space<vmem>>, vector<1x8x128xf32>
    %134 = vector.shape_cast %133 : vector<1x8x128xf32> to vector<8x128xf32>
    %135 = arith.addf %132, %134 : vector<8x128xf32>
    %136 = vector.extract_strided_slice %135 {offsets = [0, 0], sizes = [8, 32], strides = [1, 1]} : vector<8x128xf32> to vector<8x32xf32>
    %137 = arith.negf %136 : vector<8x32xf32>
    %138 = math.exp %137 : vector<8x32xf32>
    %cst_49 = arith.constant 1.000000e+00 : f32
    %139 = vector.broadcast %cst_49 : f32 to vector<8x32xf32>
    %140 = arith.addf %139, %138 : vector<8x32xf32>
    %141 = arith.divf %139, %140 : vector<8x32xf32>
    %142 = vector.extract_strided_slice %135 {offsets = [0, 32], sizes = [8, 32], strides = [1, 1]} : vector<8x128xf32> to vector<8x32xf32>
    %143 = arith.negf %142 : vector<8x32xf32>
    %144 = math.exp %143 : vector<8x32xf32>
    %cst_50 = arith.constant 1.000000e+00 : f32
    %145 = vector.broadcast %cst_50 : f32 to vector<8x32xf32>
    %146 = arith.addf %145, %144 : vector<8x32xf32>
    %147 = arith.divf %145, %146 : vector<8x32xf32>
    %148 = vector.extract_strided_slice %135 {offsets = [0, 64], sizes = [8, 32], strides = [1, 1]} : vector<8x128xf32> to vector<8x32xf32>
    %149 = math.tanh %148 : vector<8x32xf32>
    %150 = vector.extract_strided_slice %135 {offsets = [0, 96], sizes = [8, 32], strides = [1, 1]} : vector<8x128xf32> to vector<8x32xf32>
    %151 = arith.negf %150 : vector<8x32xf32>
    %152 = math.exp %151 : vector<8x32xf32>
    %cst_51 = arith.constant 1.000000e+00 : f32
    %153 = vector.broadcast %cst_51 : f32 to vector<8x32xf32>
    %154 = arith.addf %153, %152 : vector<8x32xf32>
    %155 = arith.divf %153, %154 : vector<8x32xf32>
    %156 = arith.mulf %147, %98 : vector<8x32xf32>
    %157 = arith.mulf %141, %149 : vector<8x32xf32>
    %158 = arith.addf %156, %157 : vector<8x32xf32>
    %159 = math.tanh %158 : vector<8x32xf32>
    %160 = arith.mulf %155, %159 : vector<8x32xf32>
    %c0_52 = arith.constant 0 : index
    %c0_53 = arith.constant 0 : index
    %161 = vector.load %arg4[%c0_52, %c0_53] : memref<32x128xf32, #tpu.memory_space<vmem>>, vector<32x128xf32>
    %cst_54 = arith.constant dense<0.000000e+00> : vector<8x128xf32>
    %162 = tpu.matmul %130, %161, %cst_54 {dimension_numbers = #tpu.dot_dimension_numbers<[1], [0], [0], [1], [0, 0, 1, 1], [], []>} : vector<8x32xf32>, vector<32x128xf32>, vector<8x128xf32> -> vector<8x128xf32>
    %c5 = arith.constant 5 : index
    %c0_55 = arith.constant 0 : index
    %c0_56 = arith.constant 0 : index
    %163 = vector.load %arg2[%c5, %c0_55, %c0_56] : memref<8x8x128xf32, #tpu.memory_space<vmem>>, vector<1x8x128xf32>
    %164 = vector.shape_cast %163 : vector<1x8x128xf32> to vector<8x128xf32>
    %165 = arith.addf %162, %164 : vector<8x128xf32>
    %166 = vector.extract_strided_slice %165 {offsets = [0, 0], sizes = [8, 32], strides = [1, 1]} : vector<8x128xf32> to vector<8x32xf32>
    %167 = arith.negf %166 : vector<8x32xf32>
    %168 = math.exp %167 : vector<8x32xf32>
    %cst_57 = arith.constant 1.000000e+00 : f32
    %169 = vector.broadcast %cst_57 : f32 to vector<8x32xf32>
    %170 = arith.addf %169, %168 : vector<8x32xf32>
    %171 = arith.divf %169, %170 : vector<8x32xf32>
    %172 = vector.extract_strided_slice %165 {offsets = [0, 32], sizes = [8, 32], strides = [1, 1]} : vector<8x128xf32> to vector<8x32xf32>
    %173 = arith.negf %172 : vector<8x32xf32>
    %174 = math.exp %173 : vector<8x32xf32>
    %cst_58 = arith.constant 1.000000e+00 : f32
    %175 = vector.broadcast %cst_58 : f32 to vector<8x32xf32>
    %176 = arith.addf %175, %174 : vector<8x32xf32>
    %177 = arith.divf %175, %176 : vector<8x32xf32>
    %178 = vector.extract_strided_slice %165 {offsets = [0, 64], sizes = [8, 32], strides = [1, 1]} : vector<8x128xf32> to vector<8x32xf32>
    %179 = math.tanh %178 : vector<8x32xf32>
    %180 = vector.extract_strided_slice %165 {offsets = [0, 96], sizes = [8, 32], strides = [1, 1]} : vector<8x128xf32> to vector<8x32xf32>
    %181 = arith.negf %180 : vector<8x32xf32>
    %182 = math.exp %181 : vector<8x32xf32>
    %cst_59 = arith.constant 1.000000e+00 : f32
    %183 = vector.broadcast %cst_59 : f32 to vector<8x32xf32>
    %184 = arith.addf %183, %182 : vector<8x32xf32>
    %185 = arith.divf %183, %184 : vector<8x32xf32>
    %186 = arith.mulf %177, %128 : vector<8x32xf32>
    %187 = arith.mulf %171, %179 : vector<8x32xf32>
    %188 = arith.addf %186, %187 : vector<8x32xf32>
    %189 = math.tanh %188 : vector<8x32xf32>
    %190 = arith.mulf %185, %189 : vector<8x32xf32>
    %c0_60 = arith.constant 0 : index
    %c0_61 = arith.constant 0 : index
    %191 = vector.load %arg3[%c0_60, %c0_61] : memref<32x128xf32, #tpu.memory_space<vmem>>, vector<32x128xf32>
    %cst_62 = arith.constant dense<0.000000e+00> : vector<8x128xf32>
    %192 = tpu.matmul %160, %191, %cst_62 {dimension_numbers = #tpu.dot_dimension_numbers<[1], [0], [0], [1], [0, 0, 1, 1], [], []>} : vector<8x32xf32>, vector<32x128xf32>, vector<8x128xf32> -> vector<8x128xf32>
    %c3 = arith.constant 3 : index
    %c0_63 = arith.constant 0 : index
    %c0_64 = arith.constant 0 : index
    %193 = vector.load %arg1[%c3, %c0_63, %c0_64] : memref<8x8x128xf32, #tpu.memory_space<vmem>>, vector<1x8x128xf32>
    %194 = vector.shape_cast %193 : vector<1x8x128xf32> to vector<8x128xf32>
    %195 = arith.addf %192, %194 : vector<8x128xf32>
    %196 = vector.extract_strided_slice %195 {offsets = [0, 0], sizes = [8, 32], strides = [1, 1]} : vector<8x128xf32> to vector<8x32xf32>
    %197 = arith.negf %196 : vector<8x32xf32>
    %198 = math.exp %197 : vector<8x32xf32>
    %cst_65 = arith.constant 1.000000e+00 : f32
    %199 = vector.broadcast %cst_65 : f32 to vector<8x32xf32>
    %200 = arith.addf %199, %198 : vector<8x32xf32>
    %201 = arith.divf %199, %200 : vector<8x32xf32>
    %202 = vector.extract_strided_slice %195 {offsets = [0, 32], sizes = [8, 32], strides = [1, 1]} : vector<8x128xf32> to vector<8x32xf32>
    %203 = arith.negf %202 : vector<8x32xf32>
    %204 = math.exp %203 : vector<8x32xf32>
    %cst_66 = arith.constant 1.000000e+00 : f32
    %205 = vector.broadcast %cst_66 : f32 to vector<8x32xf32>
    %206 = arith.addf %205, %204 : vector<8x32xf32>
    %207 = arith.divf %205, %206 : vector<8x32xf32>
    %208 = vector.extract_strided_slice %195 {offsets = [0, 64], sizes = [8, 32], strides = [1, 1]} : vector<8x128xf32> to vector<8x32xf32>
    %209 = math.tanh %208 : vector<8x32xf32>
    %210 = vector.extract_strided_slice %195 {offsets = [0, 96], sizes = [8, 32], strides = [1, 1]} : vector<8x128xf32> to vector<8x32xf32>
    %211 = arith.negf %210 : vector<8x32xf32>
    %212 = math.exp %211 : vector<8x32xf32>
    %cst_67 = arith.constant 1.000000e+00 : f32
    %213 = vector.broadcast %cst_67 : f32 to vector<8x32xf32>
    %214 = arith.addf %213, %212 : vector<8x32xf32>
    %215 = arith.divf %213, %214 : vector<8x32xf32>
    %216 = arith.mulf %207, %158 : vector<8x32xf32>
    %217 = arith.mulf %201, %209 : vector<8x32xf32>
    %218 = arith.addf %216, %217 : vector<8x32xf32>
    %219 = math.tanh %218 : vector<8x32xf32>
    %220 = arith.mulf %215, %219 : vector<8x32xf32>
    %c0_68 = arith.constant 0 : index
    %c0_69 = arith.constant 0 : index
    %221 = vector.load %arg4[%c0_68, %c0_69] : memref<32x128xf32, #tpu.memory_space<vmem>>, vector<32x128xf32>
    %cst_70 = arith.constant dense<0.000000e+00> : vector<8x128xf32>
    %222 = tpu.matmul %190, %221, %cst_70 {dimension_numbers = #tpu.dot_dimension_numbers<[1], [0], [0], [1], [0, 0, 1, 1], [], []>} : vector<8x32xf32>, vector<32x128xf32>, vector<8x128xf32> -> vector<8x128xf32>
    %c4 = arith.constant 4 : index
    %c0_71 = arith.constant 0 : index
    %c0_72 = arith.constant 0 : index
    %223 = vector.load %arg2[%c4, %c0_71, %c0_72] : memref<8x8x128xf32, #tpu.memory_space<vmem>>, vector<1x8x128xf32>
    %224 = vector.shape_cast %223 : vector<1x8x128xf32> to vector<8x128xf32>
    %225 = arith.addf %222, %224 : vector<8x128xf32>
    %226 = vector.extract_strided_slice %225 {offsets = [0, 0], sizes = [8, 32], strides = [1, 1]} : vector<8x128xf32> to vector<8x32xf32>
    %227 = arith.negf %226 : vector<8x32xf32>
    %228 = math.exp %227 : vector<8x32xf32>
    %cst_73 = arith.constant 1.000000e+00 : f32
    %229 = vector.broadcast %cst_73 : f32 to vector<8x32xf32>
    %230 = arith.addf %229, %228 : vector<8x32xf32>
    %231 = arith.divf %229, %230 : vector<8x32xf32>
    %232 = vector.extract_strided_slice %225 {offsets = [0, 32], sizes = [8, 32], strides = [1, 1]} : vector<8x128xf32> to vector<8x32xf32>
    %233 = arith.negf %232 : vector<8x32xf32>
    %234 = math.exp %233 : vector<8x32xf32>
    %cst_74 = arith.constant 1.000000e+00 : f32
    %235 = vector.broadcast %cst_74 : f32 to vector<8x32xf32>
    %236 = arith.addf %235, %234 : vector<8x32xf32>
    %237 = arith.divf %235, %236 : vector<8x32xf32>
    %238 = vector.extract_strided_slice %225 {offsets = [0, 64], sizes = [8, 32], strides = [1, 1]} : vector<8x128xf32> to vector<8x32xf32>
    %239 = math.tanh %238 : vector<8x32xf32>
    %240 = vector.extract_strided_slice %225 {offsets = [0, 96], sizes = [8, 32], strides = [1, 1]} : vector<8x128xf32> to vector<8x32xf32>
    %241 = arith.negf %240 : vector<8x32xf32>
    %242 = math.exp %241 : vector<8x32xf32>
    %cst_75 = arith.constant 1.000000e+00 : f32
    %243 = vector.broadcast %cst_75 : f32 to vector<8x32xf32>
    %244 = arith.addf %243, %242 : vector<8x32xf32>
    %245 = arith.divf %243, %244 : vector<8x32xf32>
    %246 = arith.mulf %237, %188 : vector<8x32xf32>
    %247 = arith.mulf %231, %239 : vector<8x32xf32>
    %248 = arith.addf %246, %247 : vector<8x32xf32>
    %249 = math.tanh %248 : vector<8x32xf32>
    %250 = arith.mulf %245, %249 : vector<8x32xf32>
    %c0_76 = arith.constant 0 : index
    %c0_77 = arith.constant 0 : index
    %251 = vector.load %arg3[%c0_76, %c0_77] : memref<32x128xf32, #tpu.memory_space<vmem>>, vector<32x128xf32>
    %cst_78 = arith.constant dense<0.000000e+00> : vector<8x128xf32>
    %252 = tpu.matmul %220, %251, %cst_78 {dimension_numbers = #tpu.dot_dimension_numbers<[1], [0], [0], [1], [0, 0, 1, 1], [], []>} : vector<8x32xf32>, vector<32x128xf32>, vector<8x128xf32> -> vector<8x128xf32>
    %c4_79 = arith.constant 4 : index
    %c0_80 = arith.constant 0 : index
    %c0_81 = arith.constant 0 : index
    %253 = vector.load %arg1[%c4_79, %c0_80, %c0_81] : memref<8x8x128xf32, #tpu.memory_space<vmem>>, vector<1x8x128xf32>
    %254 = vector.shape_cast %253 : vector<1x8x128xf32> to vector<8x128xf32>
    %255 = arith.addf %252, %254 : vector<8x128xf32>
    %256 = vector.extract_strided_slice %255 {offsets = [0, 0], sizes = [8, 32], strides = [1, 1]} : vector<8x128xf32> to vector<8x32xf32>
    %257 = arith.negf %256 : vector<8x32xf32>
    %258 = math.exp %257 : vector<8x32xf32>
    %cst_82 = arith.constant 1.000000e+00 : f32
    %259 = vector.broadcast %cst_82 : f32 to vector<8x32xf32>
    %260 = arith.addf %259, %258 : vector<8x32xf32>
    %261 = arith.divf %259, %260 : vector<8x32xf32>
    %262 = vector.extract_strided_slice %255 {offsets = [0, 32], sizes = [8, 32], strides = [1, 1]} : vector<8x128xf32> to vector<8x32xf32>
    %263 = arith.negf %262 : vector<8x32xf32>
    %264 = math.exp %263 : vector<8x32xf32>
    %cst_83 = arith.constant 1.000000e+00 : f32
    %265 = vector.broadcast %cst_83 : f32 to vector<8x32xf32>
    %266 = arith.addf %265, %264 : vector<8x32xf32>
    %267 = arith.divf %265, %266 : vector<8x32xf32>
    %268 = vector.extract_strided_slice %255 {offsets = [0, 64], sizes = [8, 32], strides = [1, 1]} : vector<8x128xf32> to vector<8x32xf32>
    %269 = math.tanh %268 : vector<8x32xf32>
    %270 = vector.extract_strided_slice %255 {offsets = [0, 96], sizes = [8, 32], strides = [1, 1]} : vector<8x128xf32> to vector<8x32xf32>
    %271 = arith.negf %270 : vector<8x32xf32>
    %272 = math.exp %271 : vector<8x32xf32>
    %cst_84 = arith.constant 1.000000e+00 : f32
    %273 = vector.broadcast %cst_84 : f32 to vector<8x32xf32>
    %274 = arith.addf %273, %272 : vector<8x32xf32>
    %275 = arith.divf %273, %274 : vector<8x32xf32>
    %276 = arith.mulf %267, %218 : vector<8x32xf32>
    %277 = arith.mulf %261, %269 : vector<8x32xf32>
    %278 = arith.addf %276, %277 : vector<8x32xf32>
    %279 = math.tanh %278 : vector<8x32xf32>
    %280 = arith.mulf %275, %279 : vector<8x32xf32>
    %c0_85 = arith.constant 0 : index
    %c0_86 = arith.constant 0 : index
    %281 = vector.load %arg4[%c0_85, %c0_86] : memref<32x128xf32, #tpu.memory_space<vmem>>, vector<32x128xf32>
    %cst_87 = arith.constant dense<0.000000e+00> : vector<8x128xf32>
    %282 = tpu.matmul %250, %281, %cst_87 {dimension_numbers = #tpu.dot_dimension_numbers<[1], [0], [0], [1], [0, 0, 1, 1], [], []>} : vector<8x32xf32>, vector<32x128xf32>, vector<8x128xf32> -> vector<8x128xf32>
    %c3_88 = arith.constant 3 : index
    %c0_89 = arith.constant 0 : index
    %c0_90 = arith.constant 0 : index
    %283 = vector.load %arg2[%c3_88, %c0_89, %c0_90] : memref<8x8x128xf32, #tpu.memory_space<vmem>>, vector<1x8x128xf32>
    %284 = vector.shape_cast %283 : vector<1x8x128xf32> to vector<8x128xf32>
    %285 = arith.addf %282, %284 : vector<8x128xf32>
    %286 = vector.extract_strided_slice %285 {offsets = [0, 0], sizes = [8, 32], strides = [1, 1]} : vector<8x128xf32> to vector<8x32xf32>
    %287 = arith.negf %286 : vector<8x32xf32>
    %288 = math.exp %287 : vector<8x32xf32>
    %cst_91 = arith.constant 1.000000e+00 : f32
    %289 = vector.broadcast %cst_91 : f32 to vector<8x32xf32>
    %290 = arith.addf %289, %288 : vector<8x32xf32>
    %291 = arith.divf %289, %290 : vector<8x32xf32>
    %292 = vector.extract_strided_slice %285 {offsets = [0, 32], sizes = [8, 32], strides = [1, 1]} : vector<8x128xf32> to vector<8x32xf32>
    %293 = arith.negf %292 : vector<8x32xf32>
    %294 = math.exp %293 : vector<8x32xf32>
    %cst_92 = arith.constant 1.000000e+00 : f32
    %295 = vector.broadcast %cst_92 : f32 to vector<8x32xf32>
    %296 = arith.addf %295, %294 : vector<8x32xf32>
    %297 = arith.divf %295, %296 : vector<8x32xf32>
    %298 = vector.extract_strided_slice %285 {offsets = [0, 64], sizes = [8, 32], strides = [1, 1]} : vector<8x128xf32> to vector<8x32xf32>
    %299 = math.tanh %298 : vector<8x32xf32>
    %300 = vector.extract_strided_slice %285 {offsets = [0, 96], sizes = [8, 32], strides = [1, 1]} : vector<8x128xf32> to vector<8x32xf32>
    %301 = arith.negf %300 : vector<8x32xf32>
    %302 = math.exp %301 : vector<8x32xf32>
    %cst_93 = arith.constant 1.000000e+00 : f32
    %303 = vector.broadcast %cst_93 : f32 to vector<8x32xf32>
    %304 = arith.addf %303, %302 : vector<8x32xf32>
    %305 = arith.divf %303, %304 : vector<8x32xf32>
    %306 = arith.mulf %297, %248 : vector<8x32xf32>
    %307 = arith.mulf %291, %299 : vector<8x32xf32>
    %308 = arith.addf %306, %307 : vector<8x32xf32>
    %309 = math.tanh %308 : vector<8x32xf32>
    %310 = arith.mulf %305, %309 : vector<8x32xf32>
    %c0_94 = arith.constant 0 : index
    %c0_95 = arith.constant 0 : index
    %311 = vector.load %arg3[%c0_94, %c0_95] : memref<32x128xf32, #tpu.memory_space<vmem>>, vector<32x128xf32>
    %cst_96 = arith.constant dense<0.000000e+00> : vector<8x128xf32>
    %312 = tpu.matmul %280, %311, %cst_96 {dimension_numbers = #tpu.dot_dimension_numbers<[1], [0], [0], [1], [0, 0, 1, 1], [], []>} : vector<8x32xf32>, vector<32x128xf32>, vector<8x128xf32> -> vector<8x128xf32>
    %c5_97 = arith.constant 5 : index
    %c0_98 = arith.constant 0 : index
    %c0_99 = arith.constant 0 : index
    %313 = vector.load %arg1[%c5_97, %c0_98, %c0_99] : memref<8x8x128xf32, #tpu.memory_space<vmem>>, vector<1x8x128xf32>
    %314 = vector.shape_cast %313 : vector<1x8x128xf32> to vector<8x128xf32>
    %315 = arith.addf %312, %314 : vector<8x128xf32>
    %316 = vector.extract_strided_slice %315 {offsets = [0, 0], sizes = [8, 32], strides = [1, 1]} : vector<8x128xf32> to vector<8x32xf32>
    %317 = arith.negf %316 : vector<8x32xf32>
    %318 = math.exp %317 : vector<8x32xf32>
    %cst_100 = arith.constant 1.000000e+00 : f32
    %319 = vector.broadcast %cst_100 : f32 to vector<8x32xf32>
    %320 = arith.addf %319, %318 : vector<8x32xf32>
    %321 = arith.divf %319, %320 : vector<8x32xf32>
    %322 = vector.extract_strided_slice %315 {offsets = [0, 32], sizes = [8, 32], strides = [1, 1]} : vector<8x128xf32> to vector<8x32xf32>
    %323 = arith.negf %322 : vector<8x32xf32>
    %324 = math.exp %323 : vector<8x32xf32>
    %cst_101 = arith.constant 1.000000e+00 : f32
    %325 = vector.broadcast %cst_101 : f32 to vector<8x32xf32>
    %326 = arith.addf %325, %324 : vector<8x32xf32>
    %327 = arith.divf %325, %326 : vector<8x32xf32>
    %328 = vector.extract_strided_slice %315 {offsets = [0, 64], sizes = [8, 32], strides = [1, 1]} : vector<8x128xf32> to vector<8x32xf32>
    %329 = math.tanh %328 : vector<8x32xf32>
    %330 = vector.extract_strided_slice %315 {offsets = [0, 96], sizes = [8, 32], strides = [1, 1]} : vector<8x128xf32> to vector<8x32xf32>
    %331 = arith.negf %330 : vector<8x32xf32>
    %332 = math.exp %331 : vector<8x32xf32>
    %cst_102 = arith.constant 1.000000e+00 : f32
    %333 = vector.broadcast %cst_102 : f32 to vector<8x32xf32>
    %334 = arith.addf %333, %332 : vector<8x32xf32>
    %335 = arith.divf %333, %334 : vector<8x32xf32>
    %336 = arith.mulf %327, %278 : vector<8x32xf32>
    %337 = arith.mulf %321, %329 : vector<8x32xf32>
    %338 = arith.addf %336, %337 : vector<8x32xf32>
    %339 = math.tanh %338 : vector<8x32xf32>
    %340 = arith.mulf %335, %339 : vector<8x32xf32>
    %c0_103 = arith.constant 0 : index
    %c0_104 = arith.constant 0 : index
    %341 = vector.load %arg4[%c0_103, %c0_104] : memref<32x128xf32, #tpu.memory_space<vmem>>, vector<32x128xf32>
    %cst_105 = arith.constant dense<0.000000e+00> : vector<8x128xf32>
    %342 = tpu.matmul %310, %341, %cst_105 {dimension_numbers = #tpu.dot_dimension_numbers<[1], [0], [0], [1], [0, 0, 1, 1], [], []>} : vector<8x32xf32>, vector<32x128xf32>, vector<8x128xf32> -> vector<8x128xf32>
    %c2_106 = arith.constant 2 : index
    %c0_107 = arith.constant 0 : index
    %c0_108 = arith.constant 0 : index
    %343 = vector.load %arg2[%c2_106, %c0_107, %c0_108] : memref<8x8x128xf32, #tpu.memory_space<vmem>>, vector<1x8x128xf32>
    %344 = vector.shape_cast %343 : vector<1x8x128xf32> to vector<8x128xf32>
    %345 = arith.addf %342, %344 : vector<8x128xf32>
    %346 = vector.extract_strided_slice %345 {offsets = [0, 0], sizes = [8, 32], strides = [1, 1]} : vector<8x128xf32> to vector<8x32xf32>
    %347 = arith.negf %346 : vector<8x32xf32>
    %348 = math.exp %347 : vector<8x32xf32>
    %cst_109 = arith.constant 1.000000e+00 : f32
    %349 = vector.broadcast %cst_109 : f32 to vector<8x32xf32>
    %350 = arith.addf %349, %348 : vector<8x32xf32>
    %351 = arith.divf %349, %350 : vector<8x32xf32>
    %352 = vector.extract_strided_slice %345 {offsets = [0, 32], sizes = [8, 32], strides = [1, 1]} : vector<8x128xf32> to vector<8x32xf32>
    %353 = arith.negf %352 : vector<8x32xf32>
    %354 = math.exp %353 : vector<8x32xf32>
    %cst_110 = arith.constant 1.000000e+00 : f32
    %355 = vector.broadcast %cst_110 : f32 to vector<8x32xf32>
    %356 = arith.addf %355, %354 : vector<8x32xf32>
    %357 = arith.divf %355, %356 : vector<8x32xf32>
    %358 = vector.extract_strided_slice %345 {offsets = [0, 64], sizes = [8, 32], strides = [1, 1]} : vector<8x128xf32> to vector<8x32xf32>
    %359 = math.tanh %358 : vector<8x32xf32>
    %360 = vector.extract_strided_slice %345 {offsets = [0, 96], sizes = [8, 32], strides = [1, 1]} : vector<8x128xf32> to vector<8x32xf32>
    %361 = arith.negf %360 : vector<8x32xf32>
    %362 = math.exp %361 : vector<8x32xf32>
    %cst_111 = arith.constant 1.000000e+00 : f32
    %363 = vector.broadcast %cst_111 : f32 to vector<8x32xf32>
    %364 = arith.addf %363, %362 : vector<8x32xf32>
    %365 = arith.divf %363, %364 : vector<8x32xf32>
    %366 = arith.mulf %357, %308 : vector<8x32xf32>
    %367 = arith.mulf %351, %359 : vector<8x32xf32>
    %368 = arith.addf %366, %367 : vector<8x32xf32>
    %369 = math.tanh %368 : vector<8x32xf32>
    %370 = arith.mulf %365, %369 : vector<8x32xf32>
    %c0_112 = arith.constant 0 : index
    %c0_113 = arith.constant 0 : index
    %371 = vector.load %arg3[%c0_112, %c0_113] : memref<32x128xf32, #tpu.memory_space<vmem>>, vector<32x128xf32>
    %cst_114 = arith.constant dense<0.000000e+00> : vector<8x128xf32>
    %372 = tpu.matmul %340, %371, %cst_114 {dimension_numbers = #tpu.dot_dimension_numbers<[1], [0], [0], [1], [0, 0, 1, 1], [], []>} : vector<8x32xf32>, vector<32x128xf32>, vector<8x128xf32> -> vector<8x128xf32>
    %c6_115 = arith.constant 6 : index
    %c0_116 = arith.constant 0 : index
    %c0_117 = arith.constant 0 : index
    %373 = vector.load %arg1[%c6_115, %c0_116, %c0_117] : memref<8x8x128xf32, #tpu.memory_space<vmem>>, vector<1x8x128xf32>
    %374 = vector.shape_cast %373 : vector<1x8x128xf32> to vector<8x128xf32>
    %375 = arith.addf %372, %374 : vector<8x128xf32>
    %376 = vector.extract_strided_slice %375 {offsets = [0, 0], sizes = [8, 32], strides = [1, 1]} : vector<8x128xf32> to vector<8x32xf32>
    %377 = arith.negf %376 : vector<8x32xf32>
    %378 = math.exp %377 : vector<8x32xf32>
    %cst_118 = arith.constant 1.000000e+00 : f32
    %379 = vector.broadcast %cst_118 : f32 to vector<8x32xf32>
    %380 = arith.addf %379, %378 : vector<8x32xf32>
    %381 = arith.divf %379, %380 : vector<8x32xf32>
    %382 = vector.extract_strided_slice %375 {offsets = [0, 32], sizes = [8, 32], strides = [1, 1]} : vector<8x128xf32> to vector<8x32xf32>
    %383 = arith.negf %382 : vector<8x32xf32>
    %384 = math.exp %383 : vector<8x32xf32>
    %cst_119 = arith.constant 1.000000e+00 : f32
    %385 = vector.broadcast %cst_119 : f32 to vector<8x32xf32>
    %386 = arith.addf %385, %384 : vector<8x32xf32>
    %387 = arith.divf %385, %386 : vector<8x32xf32>
    %388 = vector.extract_strided_slice %375 {offsets = [0, 64], sizes = [8, 32], strides = [1, 1]} : vector<8x128xf32> to vector<8x32xf32>
    %389 = math.tanh %388 : vector<8x32xf32>
    %390 = vector.extract_strided_slice %375 {offsets = [0, 96], sizes = [8, 32], strides = [1, 1]} : vector<8x128xf32> to vector<8x32xf32>
    %391 = arith.negf %390 : vector<8x32xf32>
    %392 = math.exp %391 : vector<8x32xf32>
    %cst_120 = arith.constant 1.000000e+00 : f32
    %393 = vector.broadcast %cst_120 : f32 to vector<8x32xf32>
    %394 = arith.addf %393, %392 : vector<8x32xf32>
    %395 = arith.divf %393, %394 : vector<8x32xf32>
    %396 = arith.mulf %387, %338 : vector<8x32xf32>
    %397 = arith.mulf %381, %389 : vector<8x32xf32>
    %398 = arith.addf %396, %397 : vector<8x32xf32>
    %399 = math.tanh %398 : vector<8x32xf32>
    %400 = arith.mulf %395, %399 : vector<8x32xf32>
    %c0_121 = arith.constant 0 : index
    %c0_122 = arith.constant 0 : index
    %401 = vector.load %arg4[%c0_121, %c0_122] : memref<32x128xf32, #tpu.memory_space<vmem>>, vector<32x128xf32>
    %cst_123 = arith.constant dense<0.000000e+00> : vector<8x128xf32>
    %402 = tpu.matmul %370, %401, %cst_123 {dimension_numbers = #tpu.dot_dimension_numbers<[1], [0], [0], [1], [0, 0, 1, 1], [], []>} : vector<8x32xf32>, vector<32x128xf32>, vector<8x128xf32> -> vector<8x128xf32>
    %c1_124 = arith.constant 1 : index
    %c0_125 = arith.constant 0 : index
    %c0_126 = arith.constant 0 : index
    %403 = vector.load %arg2[%c1_124, %c0_125, %c0_126] : memref<8x8x128xf32, #tpu.memory_space<vmem>>, vector<1x8x128xf32>
    %404 = vector.shape_cast %403 : vector<1x8x128xf32> to vector<8x128xf32>
    %405 = arith.addf %402, %404 : vector<8x128xf32>
    %406 = vector.extract_strided_slice %405 {offsets = [0, 0], sizes = [8, 32], strides = [1, 1]} : vector<8x128xf32> to vector<8x32xf32>
    %407 = arith.negf %406 : vector<8x32xf32>
    %408 = math.exp %407 : vector<8x32xf32>
    %cst_127 = arith.constant 1.000000e+00 : f32
    %409 = vector.broadcast %cst_127 : f32 to vector<8x32xf32>
    %410 = arith.addf %409, %408 : vector<8x32xf32>
    %411 = arith.divf %409, %410 : vector<8x32xf32>
    %412 = vector.extract_strided_slice %405 {offsets = [0, 32], sizes = [8, 32], strides = [1, 1]} : vector<8x128xf32> to vector<8x32xf32>
    %413 = arith.negf %412 : vector<8x32xf32>
    %414 = math.exp %413 : vector<8x32xf32>
    %cst_128 = arith.constant 1.000000e+00 : f32
    %415 = vector.broadcast %cst_128 : f32 to vector<8x32xf32>
    %416 = arith.addf %415, %414 : vector<8x32xf32>
    %417 = arith.divf %415, %416 : vector<8x32xf32>
    %418 = vector.extract_strided_slice %405 {offsets = [0, 64], sizes = [8, 32], strides = [1, 1]} : vector<8x128xf32> to vector<8x32xf32>
    %419 = math.tanh %418 : vector<8x32xf32>
    %420 = vector.extract_strided_slice %405 {offsets = [0, 96], sizes = [8, 32], strides = [1, 1]} : vector<8x128xf32> to vector<8x32xf32>
    %421 = arith.negf %420 : vector<8x32xf32>
    %422 = math.exp %421 : vector<8x32xf32>
    %cst_129 = arith.constant 1.000000e+00 : f32
    %423 = vector.broadcast %cst_129 : f32 to vector<8x32xf32>
    %424 = arith.addf %423, %422 : vector<8x32xf32>
    %425 = arith.divf %423, %424 : vector<8x32xf32>
    %426 = arith.mulf %417, %368 : vector<8x32xf32>
    %427 = arith.mulf %411, %419 : vector<8x32xf32>
    %428 = arith.addf %426, %427 : vector<8x32xf32>
    %429 = math.tanh %428 : vector<8x32xf32>
    %430 = arith.mulf %425, %429 : vector<8x32xf32>
    %c0_130 = arith.constant 0 : index
    %c0_131 = arith.constant 0 : index
    %431 = vector.load %arg3[%c0_130, %c0_131] : memref<32x128xf32, #tpu.memory_space<vmem>>, vector<32x128xf32>
    %cst_132 = arith.constant dense<0.000000e+00> : vector<8x128xf32>
    %432 = tpu.matmul %400, %431, %cst_132 {dimension_numbers = #tpu.dot_dimension_numbers<[1], [0], [0], [1], [0, 0, 1, 1], [], []>} : vector<8x32xf32>, vector<32x128xf32>, vector<8x128xf32> -> vector<8x128xf32>
    %c7_133 = arith.constant 7 : index
    %c0_134 = arith.constant 0 : index
    %c0_135 = arith.constant 0 : index
    %433 = vector.load %arg1[%c7_133, %c0_134, %c0_135] : memref<8x8x128xf32, #tpu.memory_space<vmem>>, vector<1x8x128xf32>
    %434 = vector.shape_cast %433 : vector<1x8x128xf32> to vector<8x128xf32>
    %435 = arith.addf %432, %434 : vector<8x128xf32>
    %436 = vector.extract_strided_slice %435 {offsets = [0, 0], sizes = [8, 32], strides = [1, 1]} : vector<8x128xf32> to vector<8x32xf32>
    %437 = arith.negf %436 : vector<8x32xf32>
    %438 = math.exp %437 : vector<8x32xf32>
    %cst_136 = arith.constant 1.000000e+00 : f32
    %439 = vector.broadcast %cst_136 : f32 to vector<8x32xf32>
    %440 = arith.addf %439, %438 : vector<8x32xf32>
    %441 = arith.divf %439, %440 : vector<8x32xf32>
    %442 = vector.extract_strided_slice %435 {offsets = [0, 32], sizes = [8, 32], strides = [1, 1]} : vector<8x128xf32> to vector<8x32xf32>
    %443 = arith.negf %442 : vector<8x32xf32>
    %444 = math.exp %443 : vector<8x32xf32>
    %cst_137 = arith.constant 1.000000e+00 : f32
    %445 = vector.broadcast %cst_137 : f32 to vector<8x32xf32>
    %446 = arith.addf %445, %444 : vector<8x32xf32>
    %447 = arith.divf %445, %446 : vector<8x32xf32>
    %448 = vector.extract_strided_slice %435 {offsets = [0, 64], sizes = [8, 32], strides = [1, 1]} : vector<8x128xf32> to vector<8x32xf32>
    %449 = math.tanh %448 : vector<8x32xf32>
    %450 = vector.extract_strided_slice %435 {offsets = [0, 96], sizes = [8, 32], strides = [1, 1]} : vector<8x128xf32> to vector<8x32xf32>
    %451 = arith.negf %450 : vector<8x32xf32>
    %452 = math.exp %451 : vector<8x32xf32>
    %cst_138 = arith.constant 1.000000e+00 : f32
    %453 = vector.broadcast %cst_138 : f32 to vector<8x32xf32>
    %454 = arith.addf %453, %452 : vector<8x32xf32>
    %455 = arith.divf %453, %454 : vector<8x32xf32>
    %456 = arith.mulf %447, %398 : vector<8x32xf32>
    %457 = arith.mulf %441, %449 : vector<8x32xf32>
    %458 = arith.addf %456, %457 : vector<8x32xf32>
    %459 = math.tanh %458 : vector<8x32xf32>
    %460 = arith.mulf %455, %459 : vector<8x32xf32>
    %c0_139 = arith.constant 0 : index
    %c0_140 = arith.constant 0 : index
    %461 = vector.load %arg4[%c0_139, %c0_140] : memref<32x128xf32, #tpu.memory_space<vmem>>, vector<32x128xf32>
    %cst_141 = arith.constant dense<0.000000e+00> : vector<8x128xf32>
    %462 = tpu.matmul %430, %461, %cst_141 {dimension_numbers = #tpu.dot_dimension_numbers<[1], [0], [0], [1], [0, 0, 1, 1], [], []>} : vector<8x32xf32>, vector<32x128xf32>, vector<8x128xf32> -> vector<8x128xf32>
    %c0_142 = arith.constant 0 : index
    %c0_143 = arith.constant 0 : index
    %c0_144 = arith.constant 0 : index
    %463 = vector.load %arg2[%c0_142, %c0_143, %c0_144] : memref<8x8x128xf32, #tpu.memory_space<vmem>>, vector<1x8x128xf32>
    %464 = vector.shape_cast %463 : vector<1x8x128xf32> to vector<8x128xf32>
    %465 = arith.addf %462, %464 : vector<8x128xf32>
    %466 = vector.extract_strided_slice %465 {offsets = [0, 0], sizes = [8, 32], strides = [1, 1]} : vector<8x128xf32> to vector<8x32xf32>
    %467 = arith.negf %466 : vector<8x32xf32>
    %468 = math.exp %467 : vector<8x32xf32>
    %cst_145 = arith.constant 1.000000e+00 : f32
    %469 = vector.broadcast %cst_145 : f32 to vector<8x32xf32>
    %470 = arith.addf %469, %468 : vector<8x32xf32>
    %471 = arith.divf %469, %470 : vector<8x32xf32>
    %472 = vector.extract_strided_slice %465 {offsets = [0, 32], sizes = [8, 32], strides = [1, 1]} : vector<8x128xf32> to vector<8x32xf32>
    %473 = arith.negf %472 : vector<8x32xf32>
    %474 = math.exp %473 : vector<8x32xf32>
    %cst_146 = arith.constant 1.000000e+00 : f32
    %475 = vector.broadcast %cst_146 : f32 to vector<8x32xf32>
    %476 = arith.addf %475, %474 : vector<8x32xf32>
    %477 = arith.divf %475, %476 : vector<8x32xf32>
    %478 = vector.extract_strided_slice %465 {offsets = [0, 64], sizes = [8, 32], strides = [1, 1]} : vector<8x128xf32> to vector<8x32xf32>
    %479 = math.tanh %478 : vector<8x32xf32>
    %480 = vector.extract_strided_slice %465 {offsets = [0, 96], sizes = [8, 32], strides = [1, 1]} : vector<8x128xf32> to vector<8x32xf32>
    %481 = arith.negf %480 : vector<8x32xf32>
    %482 = math.exp %481 : vector<8x32xf32>
    %cst_147 = arith.constant 1.000000e+00 : f32
    %483 = vector.broadcast %cst_147 : f32 to vector<8x32xf32>
    %484 = arith.addf %483, %482 : vector<8x32xf32>
    %485 = arith.divf %483, %484 : vector<8x32xf32>
    %486 = arith.mulf %477, %428 : vector<8x32xf32>
    %487 = arith.mulf %471, %479 : vector<8x32xf32>
    %488 = arith.addf %486, %487 : vector<8x32xf32>
    %489 = math.tanh %488 : vector<8x32xf32>
    %490 = arith.mulf %485, %489 : vector<8x32xf32>
    %c0_148 = arith.constant 0 : index
    %c0_149 = arith.constant 0 : index
    %c0_150 = arith.constant 0 : index
    %491 = vector.load %arg6[%c0_148, %c0_149, %c0_150] : memref<2x8x32xf32, #tpu.memory_space<vmem>>, vector<1x8x32xf32>
    %492 = vector.shape_cast %491 : vector<1x8x32xf32> to vector<8x32xf32>
    %493 = vector.shape_cast %460 : vector<8x32xf32> to vector<1x8x32xf32>
    tpu.vector_store %arg6[%c0_148, %c0_149, %c0_150], %493 {strides = array<i32>} : memref<2x8x32xf32, #tpu.memory_space<vmem>>, vector<1x8x32xf32>,
    %c0_151 = arith.constant 0 : index
    %c0_152 = arith.constant 0 : index
    %c0_153 = arith.constant 0 : index
    %494 = vector.load %arg7[%c0_151, %c0_152, %c0_153] : memref<2x8x32xf32, #tpu.memory_space<vmem>>, vector<1x8x32xf32>
    %495 = vector.shape_cast %494 : vector<1x8x32xf32> to vector<8x32xf32>
    %496 = vector.shape_cast %458 : vector<8x32xf32> to vector<1x8x32xf32>
    tpu.vector_store %arg7[%c0_151, %c0_152, %c0_153], %496 {strides = array<i32>} : memref<2x8x32xf32, #tpu.memory_space<vmem>>, vector<1x8x32xf32>,
    %c1_154 = arith.constant 1 : index
    %c0_155 = arith.constant 0 : index
    %c0_156 = arith.constant 0 : index
    %497 = vector.load %arg6[%c1_154, %c0_155, %c0_156] : memref<2x8x32xf32, #tpu.memory_space<vmem>>, vector<1x8x32xf32>
    %498 = vector.shape_cast %497 : vector<1x8x32xf32> to vector<8x32xf32>
    %499 = vector.shape_cast %490 : vector<8x32xf32> to vector<1x8x32xf32>
    tpu.vector_store %arg6[%c1_154, %c0_155, %c0_156], %499 {strides = array<i32>} : memref<2x8x32xf32, #tpu.memory_space<vmem>>, vector<1x8x32xf32>,
    %c1_157 = arith.constant 1 : index
    %c0_158 = arith.constant 0 : index
    %c0_159 = arith.constant 0 : index
    %500 = vector.load %arg7[%c1_157, %c0_158, %c0_159] : memref<2x8x32xf32, #tpu.memory_space<vmem>>, vector<1x8x32xf32>
    %501 = vector.shape_cast %500 : vector<1x8x32xf32> to vector<8x32xf32>
    %502 = vector.shape_cast %488 : vector<8x32xf32> to vector<1x8x32xf32>
    tpu.vector_store %arg7[%c1_157, %c0_158, %c0_159], %502 {strides = array<i32>} : memref<2x8x32xf32, #tpu.memory_space<vmem>>, vector<1x8x32xf32>,
    %c0_i32_160 = arith.constant 0 : i32
    %503 = arith.cmpi eq, %arg0, %c0_i32_160 : i32
    %504 = arith.extui %503 : i1 to i32
    %c0_i32_161 = arith.constant 0 : i32
    %505 = arith.cmpi ne, %504, %c0_i32_161 : i32
    scf.if %505 {
      %c0_162 = arith.constant 0 : index
      %c0_163 = arith.constant 0 : index
      %c0_164 = arith.constant 0 : index
      %506 = vector.load %arg5[%c0_162, %c0_163, %c0_164] : memref<2x8x32xf32, #tpu.memory_space<vmem>>, vector<1x8x32xf32>
      %507 = vector.shape_cast %506 : vector<1x8x32xf32> to vector<8x32xf32>
      %508 = vector.shape_cast %460 : vector<8x32xf32> to vector<1x8x32xf32>
      tpu.vector_store %arg5[%c0_162, %c0_163, %c0_164], %508 {strides = array<i32>} : memref<2x8x32xf32, #tpu.memory_space<vmem>>, vector<1x8x32xf32>,
      %c1_165 = arith.constant 1 : index
      %c0_166 = arith.constant 0 : index
      %c0_167 = arith.constant 0 : index
      %509 = vector.load %arg5[%c1_165, %c0_166, %c0_167] : memref<2x8x32xf32, #tpu.memory_space<vmem>>, vector<1x8x32xf32>
      %510 = vector.shape_cast %509 : vector<1x8x32xf32> to vector<8x32xf32>
      %511 = vector.shape_cast %490 : vector<8x32xf32> to vector<1x8x32xf32>
      tpu.vector_store %arg5[%c1_165, %c0_166, %c0_167], %511 {strides = array<i32>} : memref<2x8x32xf32, #tpu.memory_space<vmem>>, vector<1x8x32xf32>,
    } else {
    }
    return
  }
  func.func @transform_0(%arg0: i32) -> (i32, i32, i32) {
    %c0_i32 = arith.constant 0 : i32
    %c0_i32_0 = arith.constant 0 : i32
    %c0_i32_1 = arith.constant 0 : i32
    return %arg0, %c0_i32, %c0_i32_0 : i32, i32, i32
  }
  func.func @transform_1(%arg0: i32) -> (i32, i32, i32) {
    %c0_i32 = arith.constant 0 : i32
    %0 = arith.subi %c0_i32, %arg0 : i32
    %c0_i32_0 = arith.constant 0 : i32
    %c0_i32_1 = arith.constant 0 : i32
    %c0_i32_2 = arith.constant 0 : i32
    return %0, %c0_i32_0, %c0_i32_1 : i32, i32, i32
  }
  func.func @transform_2(%arg0: i32) -> (i32, i32) {
    %c0_i32 = arith.constant 0 : i32
    %c0_i32_0 = arith.constant 0 : i32
    %c0_i32_1 = arith.constant 0 : i32
    return %c0_i32, %c0_i32_0 : i32, i32
  }
  func.func @transform_3(%arg0: i32) -> (i32, i32) {
    %c0_i32 = arith.constant 0 : i32
    %c0_i32_0 = arith.constant 0 : i32
    %c0_i32_1 = arith.constant 0 : i32
    return %c0_i32, %c0_i32_0 : i32, i32
  }
  func.func @transform_4(%arg0: i32) -> (i32, i32, i32) {
    %c0_i32 = arith.constant 0 : i32
    %c0_i32_0 = arith.constant 0 : i32
    %c0_i32_1 = arith.constant 0 : i32
    %c0_i32_2 = arith.constant 0 : i32
    return %c0_i32, %c0_i32_0, %c0_i32_1 : i32, i32, i32
  }
}

</mosaic_0001>

<llo_original>
// kernel: variable_lstm_net_forward.3
$region0: #{variable_lstm_net_forward.3}
  #allocation0 [shape = 'u32[]', space=smem, size = 0x4, offset = 0x4, fixed_abs, tag = 'smem constant byte address 0x4 - core index']
  #allocation1 [shape = 'u32[144,128]{1,0:T(1,128)}', space=vmem, size = 0x12000, scoped, tag = 'internal scratch']
  #allocation2 [shape = 'f32[2,8,32]{2,1,0:T(8,128)}', space=vmem, size = 0x2000, scoped, tag = 'scratch operand']
  #allocation3 [shape = 'f32[2,8,32]{2,1,0:T(8,128)}', space=vmem, size = 0x2000, scoped, tag = 'scratch operand']
  %s0 = inlined_call_operand.vmem [shape: f32[8,8,128], index: 0, kind: input, shape index: {}]
  %s1 = inlined_call_operand.vmem [shape: f32[8,8,128], index: 1, kind: input, shape index: {}]
  %s2 = inlined_call_operand.vmem [shape: f32[32,128], index: 2, kind: input, shape index: {}]
  %s3 = inlined_call_operand.vmem [shape: f32[32,128], index: 3, kind: input, shape index: {}]
  %s4 = inlined_call_operand.vmem [shape: f32[2,8,32], index: 4, kind: output, shape index: {}]
  %s5 = sld [smem:[#allocation0]]
  $region34: #{variable_lstm_net_forward.3} parent=0
    _
  %s7 = ssub.s32 1, %s5
  %s8 = scalar_select 0, %s7, %s5
  // Predicated region
  $region2: #{variable_lstm_net_forward.3} parent=0 // pred_check
    _
  $region3: #{variable_lstm_net_forward.3} parent=0 // pred_check_branch
    %10 = sbr.rel (0) target = $region5
  $region4: #{variable_lstm_net_forward.3} parent=0 // pred_region
    _
  $region5: #{variable_lstm_net_forward.3} parent=0 // pred_fallthru
    _
  // Predicated region
  $region6: #{variable_lstm_net_forward.3} parent=0 // pred_check
    _
  $region7: #{variable_lstm_net_forward.3} parent=0 // pred_check_branch
    %12 = sbr.rel (0) target = $region9
  $region8: #{variable_lstm_net_forward.3} parent=0 // pred_region
    %s13 = ssub.s32 0, 0
    %s14 = smul.u32 8, %s13
    %p15 = scmp.lt.s32.totalorder %s14, 7
    %s16 = scalar_select %p15, %s14, 7
    %s17 = smul.addr %s16, 8
    %s18 = scalar_lea.vmem %s1, %s17
    %s19 = ssub.s32 0, 0
    %s20 = smul.u32 8, %s19
  $region9: #{variable_lstm_net_forward.3} parent=0 // pred_fallthru
    _
  // Predicated region
  $region10: #{variable_lstm_net_forward.3} parent=0 // pred_check
    _
  $region11: #{variable_lstm_net_forward.3} parent=0 // pred_check_branch
    %22 = sbr.rel (0) target = $region13
  $region12: #{variable_lstm_net_forward.3} parent=0 // pred_region
    _
  $region13: #{variable_lstm_net_forward.3} parent=0 // pred_fallthru
    _
  // Predicated region
  $region14: #{variable_lstm_net_forward.3} parent=0 // pred_check
    _
  $region15: #{variable_lstm_net_forward.3} parent=0 // pred_check_branch
    %24 = sbr.rel (0) target = $region17
  $region16: #{variable_lstm_net_forward.3} parent=0 // pred_region
    _
  $region17: #{variable_lstm_net_forward.3} parent=0 // pred_fallthru
    _
  %s25 = ssub.s32 0, 0
  %s26 = smul.u32 8, %s25
  %p27 = scmp.lt.s32.totalorder %s26, 7
  %s28 = scalar_select %p27, %s26, 7
  %s29 = smul.addr %s28, 8
  %s30 = scalar_lea.vmem %s1, %s29
  %s31 = ssub.s32 0, 0
  %s32 = smul.u32 8, %s31
  %p33 = scmp.lt.s32.totalorder %s32, 7
  %s34 = scalar_select %p33, %s32, 7
  %s35 = smul.addr %s34, 8
  %s36 = scalar_lea.vmem %s1, %s35
  %s37 = ssub.s32 0, 0
  %s38 = smul.u32 8, %s37
  %p39 = scmp.eq.s32.totalorder 0, 0
  // Predicated region
  $region18: #{variable_lstm_net_forward.3} parent=0 // pred_check
    %p40 = pneg %p39
  $region19: #{variable_lstm_net_forward.3} parent=0 // pred_check_branch
    %42 = sbr.rel (%p40) target = $region21
  $region20: #{variable_lstm_net_forward.3} parent=0 // pred_region
    %vm43 = vcmask 261120
    %44 = vst.msk [vmem:[#allocation2] sm:$0xff] %vm43, 0.0
    %45 = vst.msk [vmem:[#allocation2 + $0x8] sm:$0xff] %vm43, 0.0
    %46 = vst.msk [vmem:[#allocation3] sm:$0xff] %vm43, 0.0
    %47 = vst.msk [vmem:[#allocation3 + $0x8] sm:$0xff] %vm43, 0.0
  $region21: #{variable_lstm_net_forward.3} parent=0 // pred_fallthru
    _
  %v48 = vld [vmem:[#allocation2] sm:$0xff]
  %s49 = scalar_lea.vmem [#allocation2], 8
  %v50 = vld [vmem:[%s49] sm:$0xff]
  %v51 = vld [vmem:[#allocation3] sm:$0xff]
  %s52 = scalar_lea.vmem [#allocation3], 8
  %v53 = vld [vmem:[%s52] sm:$0xff]
  %v54 = vld [vmem:[%s2] sm:$0xff]
  %v55 = vld [vmem:[%s2 + $0x8] sm:$0xff]
  %v56 = vld [vmem:[%s2 + $0x10] sm:$0xff]
  %v57 = vld [vmem:[%s2 + $0x18] sm:$0xff]
  %v58 = vld [vmem:[%s0] sm:$0xff]
  %vm59 = vcmask 261120
  %v61 = vsel %vm59, %v48, 0
  %63 = vmatprep.subr.mxu0 0.0
  %64 = vmatpush1.msra.mxu0 0.0
  %65 = vmatprep.subr.mxu0 0.0
  %66 = vmatpush1.msra.mxu0 0.0
  %67 = vmatprep.subr.mxu0 0.0
  %68 = vmatpush1.msra.mxu0 0.0
  %69 = vmatprep.subr.mxu0 0.0
  %70 = vmatpush1.msra.mxu0 0.0
  %71 = vmatprep.subr.mxu0 0.0
  %72 = vmatpush1.msra.mxu0 0.0
  %73 = vmatprep.subr.mxu0 0.0
  %74 = vmatpush1.msra.mxu0 0.0
  %75 = vmatprep.subr.mxu0 0.0
  %76 = vmatpush1.msra.mxu0 0.0
  %77 = vmatprep.subr.mxu0 0.0
  %78 = vmatpush1.msra.mxu0 0.0
  %79 = vmatprep.subr.mxu0 0.0
  %80 = vmatpush1.msra.mxu0 0.0
  %81 = vmatprep.subr.mxu0 0.0
  %82 = vmatpush1.msra.mxu0 0.0
  %83 = vmatprep.subr.mxu0 0.0
  %84 = vmatpush1.msra.mxu0 0.0
  %85 = vmatprep.subr.mxu0 0.0
  %86 = vmatpush1.msra.mxu0 0.0
  %87 = vmatprep.subr.mxu0 0.0
  %88 = vmatpush1.msra.mxu0 %v57
  %89 = vmatprep.subr.mxu0 0.0
  %90 = vmatpush1.msra.mxu0 %v56
  %91 = vmatprep.subr.mxu0 0.0
  %92 = vmatpush1.msra.mxu0 %v55
  %93 = vmatprep.subr.mxu0 0.0
  %94 = vmatpush1.msra.mxu0 %v54
  %95 = vmatprep.subr.mxu0 0.0
  %96 = vmatpush2.msra.mxu0 0.0
  %97 = vmatprep.subr.mxu0 0.0
  %98 = vmatpush2.msra.mxu0 0.0
  %99 = vmatprep.subr.mxu0 0.0
  %100 = vmatpush2.msra.mxu0 0.0
  %101 = vmatprep.subr.mxu0 0.0
  %102 = vmatpush2.msra.mxu0 0.0
  %103 = vmatprep.subr.mxu0 0.0
  %104 = vmatpush2.msra.mxu0 0.0
  %105 = vmatprep.subr.mxu0 0.0
  %106 = vmatpush2.msra.mxu0 0.0
  %107 = vmatprep.subr.mxu0 0.0
  %108 = vmatpush2.msra.mxu0 0.0
  %109 = vmatprep.subr.mxu0 0.0
  %110 = vmatpush2.msra.mxu0 0.0
  %111 = vmatprep.subr.mxu0 0.0
  %112 = vmatpush2.msra.mxu0 0.0
  %113 = vmatprep.subr.mxu0 0.0
  %114 = vmatpush2.msra.mxu0 0.0
  %115 = vmatprep.subr.mxu0 0.0
  %116 = vmatpush2.msra.mxu0 0.0
  %117 = vmatprep.subr.mxu0 0.0
  %118 = vmatpush2.msra.mxu0 0.0
  %119 = vmatprep.subr.mxu0 0.0
  %120 = vmatpush2.msra.mxu0 0.0
  %121 = vmatprep.subr.mxu0 0.0
  %122 = vmatpush2.msra.mxu0 0.0
  %123 = vmatprep.subr.mxu0 0.0
  %124 = vmatpush2.msra.mxu0 0.0
  %125 = vmatprep.subr.mxu0 0.0
  %126 = vmatpush2.msra.mxu0 0.0
  %127 = vmatprep.mubr.f32.mxu0 0.0
  %128 = vmatmul.mubr.f32.gmra.mxu0 %v61
  %v129 = vpop.f32.mrf.mxu0
  %v130 = vadd.f32 %v58, %v129
  %v131 = vpop.f32.mrf.mxu0
  %132 = vdwg.mxu0
  %v133 = vxor.u32 %v130, 2147483648
  %v134 = vmul.f32 %v133, 1.442695
  %v135 = vpow.pop %v134
  %v136 = vadd.f32 %v135, 1.0
  %v137 = vrcp.pop %v136
  %v138 = vmul.f32 1.0, %v137
  %v139 = vtanh.pop %v130
  %141 = vrot.lane.b32.xlu0 %v51, 32
  %v142 = vpop.permute.xlu0 %141
  %v144 = vmul.f32 %v138, %v142
  %146 = vrot.lane.b32.xlu0 %v139, 64
  %v147 = vpop.permute.xlu0 %146
  %v149 = vmul.f32 %v138, %v147
  %151 = vrot.lane.b32.xlu0 %v149, 32
  %v152 = vpop.permute.xlu0 %151
  %v154 = vadd.f32 %v144, %v152
  %v155 = vtanh.pop %v154
  %157 = vrot.lane.b32.xlu0 %v155, 64
  %v158 = vpop.permute.xlu0 %157
  %v160 = vmul.f32 %v138, %v158
  %v161 = vld [vmem:[%s3] sm:$0xff]
  %v162 = vld [vmem:[%s3 + $0x8] sm:$0xff]
  %v163 = vld [vmem:[%s3 + $0x10] sm:$0xff]
  %v164 = vld [vmem:[%s3 + $0x18] sm:$0xff]
  %s165 = scalar_lea.vmem %s36, 56
  %v166 = vld [vmem:[%s165] sm:$0xff]
  %v168 = vsel %vm59, %v50, 0
  %170 = vmatprep.subr.mxu0 0.0
  %171 = vmatpush1.msra.mxu0 0.0
  %172 = vmatprep.subr.mxu0 0.0
  %173 = vmatpush1.msra.mxu0 0.0
  %174 = vmatprep.subr.mxu0 0.0
  %175 = vmatpush1.msra.mxu0 0.0
  %176 = vmatprep.subr.mxu0 0.0
  %177 = vmatpush1.msra.mxu0 0.0
  %178 = vmatprep.subr.mxu0 0.0
  %179 = vmatpush1.msra.mxu0 0.0
  %180 = vmatprep.subr.mxu0 0.0
  %181 = vmatpush1.msra.mxu0 0.0
  %182 = vmatprep.subr.mxu0 0.0
  %183 = vmatpush1.msra.mxu0 0.0
  %184 = vmatprep.subr.mxu0 0.0
  %185 = vmatpush1.msra.mxu0 0.0
  %186 = vmatprep.subr.mxu0 0.0
  %187 = vmatpush1.msra.mxu0 0.0
  %188 = vmatprep.subr.mxu0 0.0
  %189 = vmatpush1.msra.mxu0 0.0
  %190 = vmatprep.subr.mxu0 0.0
  %191 = vmatpush1.msra.mxu0 0.0
  %192 = vmatprep.subr.mxu0 0.0
  %193 = vmatpush1.msra.mxu0 0.0
  %194 = vmatprep.subr.mxu0 0.0
  %195 = vmatpush1.msra.mxu0 %v164
  %196 = vmatprep.subr.mxu0 0.0
  %197 = vmatpush1.msra.mxu0 %v163
  %198 = vmatprep.subr.mxu0 0.0
  %199 = vmatpush1.msra.mxu0 %v162
  %200 = vmatprep.subr.mxu0 0.0
  %201 = vmatpush1.msra.mxu0 %v161
  %202 = vmatprep.subr.mxu0 0.0
  %203 = vmatpush2.msra.mxu0 0.0
  %204 = vmatprep.subr.mxu0 0.0
  %205 = vmatpush2.msra.mxu0 0.0
  %206 = vmatprep.subr.mxu0 0.0
  %207 = vmatpush2.msra.mxu0 0.0
  %208 = vmatprep.subr.mxu0 0.0
  %209 = vmatpush2.msra.mxu0 0.0
  %210 = vmatprep.subr.mxu0 0.0
  %211 = vmatpush2.msra.mxu0 0.0
  %212 = vmatprep.subr.mxu0 0.0
  %213 = vmatpush2.msra.mxu0 0.0
  %214 = vmatprep.subr.mxu0 0.0
  %215 = vmatpush2.msra.mxu0 0.0
  %216 = vmatprep.subr.mxu0 0.0
  %217 = vmatpush2.msra.mxu0 0.0
  %218 = vmatprep.subr.mxu0 0.0
  %219 = vmatpush2.msra.mxu0 0.0
  %220 = vmatprep.subr.mxu0 0.0
  %221 = vmatpush2.msra.mxu0 0.0
  %222 = vmatprep.subr.mxu0 0.0
  %223 = vmatpush2.msra.mxu0 0.0
  %224 = vmatprep.subr.mxu0 0.0
  %225 = vmatpush2.msra.mxu0 0.0
  %226 = vmatprep.subr.mxu0 0.0
  %227 = vmatpush2.msra.mxu0 0.0
  %228 = vmatprep.subr.mxu0 0.0
  %229 = vmatpush2.msra.mxu0 0.0
  %230 = vmatprep.subr.mxu0 0.0
  %231 = vmatpush2.msra.mxu0 0.0
  %232 = vmatprep.subr.mxu0 0.0
  %233 = vmatpush2.msra.mxu0 0.0
  %234 = vmatprep.mubr.f32.mxu0 0.0
  %235 = vmatmul.mubr.f32.gmra.mxu0 %v168
  %v236 = vpop.f32.mrf.mxu0
  %v237 = vadd.f32 %v166, %v236
  %v238 = vpop.f32.mrf.mxu0
  %239 = vdwg.mxu0
  %v240 = vxor.u32 %v237, 2147483648
  %v241 = vmul.f32 %v240, 1.442695
  %v242 = vpow.pop %v241
  %v243 = vadd.f32 %v242, 1.0
  %v244 = vrcp.pop %v243
  %v245 = vmul.f32 1.0, %v244
  %v246 = vtanh.pop %v237
  %248 = vrot.lane.b32.xlu0 %v53, 32
  %v249 = vpop.permute.xlu0 %248
  %v251 = vmul.f32 %v245, %v249
  %253 = vrot.lane.b32.xlu0 %v246, 64
  %v254 = vpop.permute.xlu0 %253
  %v256 = vmul.f32 %v245, %v254
  %258 = vrot.lane.b32.xlu0 %v256, 32
  %v259 = vpop.permute.xlu0 %258
  %v261 = vadd.f32 %v251, %v259
  %v262 = vtanh.pop %v261
  %264 = vrot.lane.b32.xlu0 %v262, 64
  %v265 = vpop.permute.xlu0 %264
  %v267 = vmul.f32 %v245, %v265
  %s268 = scalar_lea.vmem %s0, 8
  %v269 = vld [vmem:[%s268] sm:$0xff]
  %271 = vrot.lane.b32.xlu0 %v160, 32
  %v272 = vpop.permute.xlu0 %271
  %v273 = vsel %vm59, %v272, 0
  %275 = vmatprep.subr.mxu0 0.0
  %276 = vmatpush1.msra.mxu0 0.0
  %277 = vmatprep.subr.mxu0 0.0
  %278 = vmatpush1.msra.mxu0 0.0
  %279 = vmatprep.subr.mxu0 0.0
  %280 = vmatpush1.msra.mxu0 0.0
  %281 = vmatprep.subr.mxu0 0.0
  %282 = vmatpush1.msra.mxu0 0.0
  %283 = vmatprep.subr.mxu0 0.0
  %284 = vmatpush1.msra.mxu0 0.0
  %285 = vmatprep.subr.mxu0 0.0
  %286 = vmatpush1.msra.mxu0 0.0
  %287 = vmatprep.subr.mxu0 0.0
  %288 = vmatpush1.msra.mxu0 0.0
  %289 = vmatprep.subr.mxu0 0.0
  %290 = vmatpush1.msra.mxu0 0.0
  %291 = vmatprep.subr.mxu0 0.0
  %292 = vmatpush1.msra.mxu0 0.0
  %293 = vmatprep.subr.mxu0 0.0
  %294 = vmatpush1.msra.mxu0 0.0
  %295 = vmatprep.subr.mxu0 0.0
  %296 = vmatpush1.msra.mxu0 0.0
  %297 = vmatprep.subr.mxu0 0.0
  %298 = vmatpush1.msra.mxu0 0.0
  %299 = vmatprep.subr.mxu0 0.0
  %300 = vmatpush1.msra.mxu0 %v57
  %301 = vmatprep.subr.mxu0 0.0
  %302 = vmatpush1.msra.mxu0 %v56
  %303 = vmatprep.subr.mxu0 0.0
  %304 = vmatpush1.msra.mxu0 %v55
  %305 = vmatprep.subr.mxu0 0.0
  %306 = vmatpush1.msra.mxu0 %v54
  %307 = vmatprep.subr.mxu0 0.0
  %308 = vmatpush2.msra.mxu0 0.0
  %309 = vmatprep.subr.mxu0 0.0
  %310 = vmatpush2.msra.mxu0 0.0
  %311 = vmatprep.subr.mxu0 0.0
  %312 = vmatpush2.msra.mxu0 0.0
  %313 = vmatprep.subr.mxu0 0.0
  %314 = vmatpush2.msra.mxu0 0.0
  %315 = vmatprep.subr.mxu0 0.0
  %316 = vmatpush2.msra.mxu0 0.0
  %317 = vmatprep.subr.mxu0 0.0
  %318 = vmatpush2.msra.mxu0 0.0
  %319 = vmatprep.subr.mxu0 0.0
  %320 = vmatpush2.msra.mxu0 0.0
  %321 = vmatprep.subr.mxu0 0.0
  %322 = vmatpush2.msra.mxu0 0.0
  %323 = vmatprep.subr.mxu0 0.0
  %324 = vmatpush2.msra.mxu0 0.0
  %325 = vmatprep.subr.mxu0 0.0
  %326 = vmatpush2.msra.mxu0 0.0
  %327 = vmatprep.subr.mxu0 0.0
  %328 = vmatpush2.msra.mxu0 0.0
  %329 = vmatprep.subr.mxu0 0.0
  %330 = vmatpush2.msra.mxu0 0.0
  %331 = vmatprep.subr.mxu0 0.0
  %332 = vmatpush2.msra.mxu0 0.0
  %333 = vmatprep.subr.mxu0 0.0
  %334 = vmatpush2.msra.mxu0 0.0
  %335 = vmatprep.subr.mxu0 0.0
  %336 = vmatpush2.msra.mxu0 0.0
  %337 = vmatprep.subr.mxu0 0.0
  %338 = vmatpush2.msra.mxu0 0.0
  %339 = vmatprep.mubr.f32.mxu0 0.0
  %340 = vmatmul.mubr.f32.gmra.mxu0 %v273
  %v341 = vpop.f32.mrf.mxu0
  %v342 = vadd.f32 %v269, %v341
  %v343 = vpop.f32.mrf.mxu0
  %344 = vdwg.mxu0
  %v345 = vxor.u32 %v342, 2147483648
  %v346 = vmul.f32 %v345, 1.442695
  %v347 = vpow.pop %v346
  %v348 = vadd.f32 %v347, 1.0
  %v349 = vrcp.pop %v348
  %v350 = vmul.f32 1.0, %v349
  %v351 = vtanh.pop %v342
  %v352 = vmul.f32 %v350, %v154
  %354 = vrot.lane.b32.xlu0 %v351, 64
  %v355 = vpop.permute.xlu0 %354
  %v357 = vmul.f32 %v350, %v355
  %359 = vrot.lane.b32.xlu0 %v357, 32
  %v360 = vpop.permute.xlu0 %359
  %v362 = vadd.f32 %v352, %v360
  %v363 = vtanh.pop %v362
  %365 = vrot.lane.b32.xlu0 %v363, 64
  %v366 = vpop.permute.xlu0 %365
  %v368 = vmul.f32 %v350, %v366
  %s369 = scalar_lea.vmem %s36, 48
  %v370 = vld [vmem:[%s369] sm:$0xff]
  %372 = vrot.lane.b32.xlu0 %v267, 32
  %v373 = vpop.permute.xlu0 %372
  %v374 = vsel %vm59, %v373, 0
  %376 = vmatprep.subr.mxu0 0.0
  %377 = vmatpush1.msra.mxu0 0.0
  %378 = vmatprep.subr.mxu0 0.0
  %379 = vmatpush1.msra.mxu0 0.0
  %380 = vmatprep.subr.mxu0 0.0
  %381 = vmatpush1.msra.mxu0 0.0
  %382 = vmatprep.subr.mxu0 0.0
  %383 = vmatpush1.msra.mxu0 0.0
  %384 = vmatprep.subr.mxu0 0.0
  %385 = vmatpush1.msra.mxu0 0.0
  %386 = vmatprep.subr.mxu0 0.0
  %387 = vmatpush1.msra.mxu0 0.0
  %388 = vmatprep.subr.mxu0 0.0
  %389 = vmatpush1.msra.mxu0 0.0
  %390 = vmatprep.subr.mxu0 0.0
  %391 = vmatpush1.msra.mxu0 0.0
  %392 = vmatprep.subr.mxu0 0.0
  %393 = vmatpush1.msra.mxu0 0.0
  %394 = vmatprep.subr.mxu0 0.0
  %395 = vmatpush1.msra.mxu0 0.0
  %396 = vmatprep.subr.mxu0 0.0
  %397 = vmatpush1.msra.mxu0 0.0
  %398 = vmatprep.subr.mxu0 0.0
  %399 = vmatpush1.msra.mxu0 0.0
  %400 = vmatprep.subr.mxu0 0.0
  %401 = vmatpush1.msra.mxu0 %v164
  %402 = vmatprep.subr.mxu0 0.0
  %403 = vmatpush1.msra.mxu0 %v163
  %404 = vmatprep.subr.mxu0 0.0
  %405 = vmatpush1.msra.mxu0 %v162
  %406 = vmatprep.subr.mxu0 0.0
  %407 = vmatpush1.msra.mxu0 %v161
  %408 = vmatprep.subr.mxu0 0.0
  %409 = vmatpush2.msra.mxu0 0.0
  %410 = vmatprep.subr.mxu0 0.0
  %411 = vmatpush2.msra.mxu0 0.0
  %412 = vmatprep.subr.mxu0 0.0
  %413 = vmatpush2.msra.mxu0 0.0
  %414 = vmatprep.subr.mxu0 0.0
  %415 = vmatpush2.msra.mxu0 0.0
  %416 = vmatprep.subr.mxu0 0.0
  %417 = vmatpush2.msra.mxu0 0.0
  %418 = vmatprep.subr.mxu0 0.0
  %419 = vmatpush2.msra.mxu0 0.0
  %420 = vmatprep.subr.mxu0 0.0
  %421 = vmatpush2.msra.mxu0 0.0
  %422 = vmatprep.subr.mxu0 0.0
  %423 = vmatpush2.msra.mxu0 0.0
  %424 = vmatprep.subr.mxu0 0.0
  %425 = vmatpush2.msra.mxu0 0.0
  %426 = vmatprep.subr.mxu0 0.0
  %427 = vmatpush2.msra.mxu0 0.0
  %428 = vmatprep.subr.mxu0 0.0
  %429 = vmatpush2.msra.mxu0 0.0
  %430 = vmatprep.subr.mxu0 0.0
  %431 = vmatpush2.msra.mxu0 0.0
  %432 = vmatprep.subr.mxu0 0.0
  %433 = vmatpush2.msra.mxu0 0.0
  %434 = vmatprep.subr.mxu0 0.0
  %435 = vmatpush2.msra.mxu0 0.0
  %436 = vmatprep.subr.mxu0 0.0
  %437 = vmatpush2.msra.mxu0 0.0
  %438 = vmatprep.subr.mxu0 0.0
  %439 = vmatpush2.msra.mxu0 0.0
  %440 = vmatprep.mubr.f32.mxu0 0.0
  %441 = vmatmul.mubr.f32.gmra.mxu0 %v374
  %v442 = vpop.f32.mrf.mxu0
  %v443 = vadd.f32 %v370, %v442
  %v444 = vpop.f32.mrf.mxu0
  %445 = vdwg.mxu0
  %v446 = vxor.u32 %v443, 2147483648
  %v447 = vmul.f32 %v446, 1.442695
  %v448 = vpow.pop %v447
  %v449 = vadd.f32 %v448, 1.0
  %v450 = vrcp.pop %v449
  %v451 = vmul.f32 1.0, %v450
  %v452 = vtanh.pop %v443
  %v453 = vmul.f32 %v451, %v261
  %455 = vrot.lane.b32.xlu0 %v452, 64
  %v456 = vpop.permute.xlu0 %455
  %v458 = vmul.f32 %v451, %v456
  %460 = vrot.lane.b32.xlu0 %v458, 32
  %v461 = vpop.permute.xlu0 %460
  %v463 = vadd.f32 %v453, %v461
  %v464 = vtanh.pop %v463
  %466 = vrot.lane.b32.xlu0 %v464, 64
  %v467 = vpop.permute.xlu0 %466
  %v469 = vmul.f32 %v451, %v467
  %s470 = scalar_lea.vmem %s0, 16
  %v471 = vld [vmem:[%s470] sm:$0xff]
  %473 = vrot.lane.b32.xlu0 %v368, 32
  %v474 = vpop.permute.xlu0 %473
  %v475 = vsel %vm59, %v474, 0
  %477 = vmatprep.subr.mxu0 0.0
  %478 = vmatpush1.msra.mxu0 0.0
  %479 = vmatprep.subr.mxu0 0.0
  %480 = vmatpush1.msra.mxu0 0.0
  %481 = vmatprep.subr.mxu0 0.0
  %482 = vmatpush1.msra.mxu0 0.0
  %483 = vmatprep.subr.mxu0 0.0
  %484 = vmatpush1.msra.mxu0 0.0
  %485 = vmatprep.subr.mxu0 0.0
  %486 = vmatpush1.msra.mxu0 0.0
  %487 = vmatprep.subr.mxu0 0.0
  %488 = vmatpush1.msra.mxu0 0.0
  %489 = vmatprep.subr.mxu0 0.0
  %490 = vmatpush1.msra.mxu0 0.0
  %491 = vmatprep.subr.mxu0 0.0
  %492 = vmatpush1.msra.mxu0 0.0
  %493 = vmatprep.subr.mxu0 0.0
  %494 = vmatpush1.msra.mxu0 0.0
  %495 = vmatprep.subr.mxu0 0.0
  %496 = vmatpush1.msra.mxu0 0.0
  %497 = vmatprep.subr.mxu0 0.0
  %498 = vmatpush1.msra.mxu0 0.0
  %499 = vmatprep.subr.mxu0 0.0
  %500 = vmatpush1.msra.mxu0 0.0
  %501 = vmatprep.subr.mxu0 0.0
  %502 = vmatpush1.msra.mxu0 %v57
  %503 = vmatprep.subr.mxu0 0.0
  %504 = vmatpush1.msra.mxu0 %v56
  %505 = vmatprep.subr.mxu0 0.0
  %506 = vmatpush1.msra.mxu0 %v55
  %507 = vmatprep.subr.mxu0 0.0
  %508 = vmatpush1.msra.mxu0 %v54
  %509 = vmatprep.subr.mxu0 0.0
  %510 = vmatpush2.msra.mxu0 0.0
  %511 = vmatprep.subr.mxu0 0.0
  %512 = vmatpush2.msra.mxu0 0.0
  %513 = vmatprep.subr.mxu0 0.0
  %514 = vmatpush2.msra.mxu0 0.0
  %515 = vmatprep.subr.mxu0 0.0
  %516 = vmatpush2.msra.mxu0 0.0
  %517 = vmatprep.subr.mxu0 0.0
  %518 = vmatpush2.msra.mxu0 0.0
  %519 = vmatprep.subr.mxu0 0.0
  %520 = vmatpush2.msra.mxu0 0.0
  %521 = vmatprep.subr.mxu0 0.0
  %522 = vmatpush2.msra.mxu0 0.0
  %523 = vmatprep.subr.mxu0 0.0
  %524 = vmatpush2.msra.mxu0 0.0
  %525 = vmatprep.subr.mxu0 0.0
  %526 = vmatpush2.msra.mxu0 0.0
  %527 = vmatprep.subr.mxu0 0.0
  %528 = vmatpush2.msra.mxu0 0.0
  %529 = vmatprep.subr.mxu0 0.0
  %530 = vmatpush2.msra.mxu0 0.0
  %531 = vmatprep.subr.mxu0 0.0
  %532 = vmatpush2.msra.mxu0 0.0
  %533 = vmatprep.subr.mxu0 0.0
  %534 = vmatpush2.msra.mxu0 0.0
  %535 = vmatprep.subr.mxu0 0.0
  %536 = vmatpush2.msra.mxu0 0.0
  %537 = vmatprep.subr.mxu0 0.0
  %538 = vmatpush2.msra.mxu0 0.0
  %539 = vmatprep.subr.mxu0 0.0
  %540 = vmatpush2.msra.mxu0 0.0
  %541 = vmatprep.mubr.f32.mxu0 0.0
  %542 = vmatmul.mubr.f32.gmra.mxu0 %v475
  %v543 = vpop.f32.mrf.mxu0
  %v544 = vadd.f32 %v471, %v543
  %v545 = vpop.f32.mrf.mxu0
  %546 = vdwg.mxu0
  %v547 = vxor.u32 %v544, 2147483648
  %v548 = vmul.f32 %v547, 1.442695
  %v549 = vpow.pop %v548
  %v550 = vadd.f32 %v549, 1.0
  %v551 = vrcp.pop %v550
  %v552 = vmul.f32 1.0, %v551
  %v553 = vtanh.pop %v544
  %v554 = vmul.f32 %v552, %v362
  %556 = vrot.lane.b32.xlu0 %v553, 64
  %v557 = vpop.permute.xlu0 %556
  %v559 = vmul.f32 %v552, %v557
  %561 = vrot.lane.b32.xlu0 %v559, 32
  %v562 = vpop.permute.xlu0 %561
  %v564 = vadd.f32 %v554, %v562
  %v565 = vtanh.pop %v564
  %567 = vrot.lane.b32.xlu0 %v565, 64
  %v568 = vpop.permute.xlu0 %567
  %v570 = vmul.f32 %v552, %v568
  %s571 = scalar_lea.vmem %s36, 40
  %v572 = vld [vmem:[%s571] sm:$0xff]
  %574 = vrot.lane.b32.xlu0 %v469, 32
  %v575 = vpop.permute.xlu0 %574
  %v576 = vsel %vm59, %v575, 0
  %578 = vmatprep.subr.mxu0 0.0
  %579 = vmatpush1.msra.mxu0 0.0
  %580 = vmatprep.subr.mxu0 0.0
  %581 = vmatpush1.msra.mxu0 0.0
  %582 = vmatprep.subr.mxu0 0.0
  %583 = vmatpush1.msra.mxu0 0.0
  %584 = vmatprep.subr.mxu0 0.0
  %585 = vmatpush1.msra.mxu0 0.0
  %586 = vmatprep.subr.mxu0 0.0
  %587 = vmatpush1.msra.mxu0 0.0
  %588 = vmatprep.subr.mxu0 0.0
  %589 = vmatpush1.msra.mxu0 0.0
  %590 = vmatprep.subr.mxu0 0.0
  %591 = vmatpush1.msra.mxu0 0.0
  %592 = vmatprep.subr.mxu0 0.0
  %593 = vmatpush1.msra.mxu0 0.0
  %594 = vmatprep.subr.mxu0 0.0
  %595 = vmatpush1.msra.mxu0 0.0
  %596 = vmatprep.subr.mxu0 0.0
  %597 = vmatpush1.msra.mxu0 0.0
  %598 = vmatprep.subr.mxu0 0.0
  %599 = vmatpush1.msra.mxu0 0.0
  %600 = vmatprep.subr.mxu0 0.0
  %601 = vmatpush1.msra.mxu0 0.0
  %602 = vmatprep.subr.mxu0 0.0
  %603 = vmatpush1.msra.mxu0 %v164
  %604 = vmatprep.subr.mxu0 0.0
  %605 = vmatpush1.msra.mxu0 %v163
  %606 = vmatprep.subr.mxu0 0.0
  %607 = vmatpush1.msra.mxu0 %v162
  %608 = vmatprep.subr.mxu0 0.0
  %609 = vmatpush1.msra.mxu0 %v161
  %610 = vmatprep.subr.mxu0 0.0
  %611 = vmatpush2.msra.mxu0 0.0
  %612 = vmatprep.subr.mxu0 0.0
  %613 = vmatpush2.msra.mxu0 0.0
  %614 = vmatprep.subr.mxu0 0.0
  %615 = vmatpush2.msra.mxu0 0.0
  %616 = vmatprep.subr.mxu0 0.0
  %617 = vmatpush2.msra.mxu0 0.0
  %618 = vmatprep.subr.mxu0 0.0
  %619 = vmatpush2.msra.mxu0 0.0
  %620 = vmatprep.subr.mxu0 0.0
  %621 = vmatpush2.msra.mxu0 0.0
  %622 = vmatprep.subr.mxu0 0.0
  %623 = vmatpush2.msra.mxu0 0.0
  %624 = vmatprep.subr.mxu0 0.0
  %625 = vmatpush2.msra.mxu0 0.0
  %626 = vmatprep.subr.mxu0 0.0
  %627 = vmatpush2.msra.mxu0 0.0
  %628 = vmatprep.subr.mxu0 0.0
  %629 = vmatpush2.msra.mxu0 0.0
  %630 = vmatprep.subr.mxu0 0.0
  %631 = vmatpush2.msra.mxu0 0.0
  %632 = vmatprep.subr.mxu0 0.0
  %633 = vmatpush2.msra.mxu0 0.0
  %634 = vmatprep.subr.mxu0 0.0
  %635 = vmatpush2.msra.mxu0 0.0
  %636 = vmatprep.subr.mxu0 0.0
  %637 = vmatpush2.msra.mxu0 0.0
  %638 = vmatprep.subr.mxu0 0.0
  %639 = vmatpush2.msra.mxu0 0.0
  %640 = vmatprep.subr.mxu0 0.0
  %641 = vmatpush2.msra.mxu0 0.0
  %642 = vmatprep.mubr.f32.mxu0 0.0
  %643 = vmatmul.mubr.f32.gmra.mxu0 %v576
  %v644 = vpop.f32.mrf.mxu0
  %v645 = vadd.f32 %v572, %v644
  %v646 = vpop.f32.mrf.mxu0
  %647 = vdwg.mxu0
  %v648 = vxor.u32 %v645, 2147483648
  %v649 = vmul.f32 %v648, 1.442695
  %v650 = vpow.pop %v649
  %v651 = vadd.f32 %v650, 1.0
  %v652 = vrcp.pop %v651
  %v653 = vmul.f32 1.0, %v652
  %v654 = vtanh.pop %v645
  %v655 = vmul.f32 %v653, %v463
  %657 = vrot.lane.b32.xlu0 %v654, 64
  %v658 = vpop.permute.xlu0 %657
  %v660 = vmul.f32 %v653, %v658
  %662 = vrot.lane.b32.xlu0 %v660, 32
  %v663 = vpop.permute.xlu0 %662
  %v665 = vadd.f32 %v655, %v663
  %v666 = vtanh.pop %v665
  %668 = vrot.lane.b32.xlu0 %v666, 64
  %v669 = vpop.permute.xlu0 %668
  %v671 = vmul.f32 %v653, %v669
  %s672 = scalar_lea.vmem %s0, 24
  %v673 = vld [vmem:[%s672] sm:$0xff]
  %675 = vrot.lane.b32.xlu0 %v570, 32
  %v676 = vpop.permute.xlu0 %675
  %v677 = vsel %vm59, %v676, 0
  %679 = vmatprep.subr.mxu0 0.0
  %680 = vmatpush1.msra.mxu0 0.0
  %681 = vmatprep.subr.mxu0 0.0
  %682 = vmatpush1.msra.mxu0 0.0
  %683 = vmatprep.subr.mxu0 0.0
  %684 = vmatpush1.msra.mxu0 0.0
  %685 = vmatprep.subr.mxu0 0.0
  %686 = vmatpush1.msra.mxu0 0.0
  %687 = vmatprep.subr.mxu0 0.0
  %688 = vmatpush1.msra.mxu0 0.0
  %689 = vmatprep.subr.mxu0 0.0
  %690 = vmatpush1.msra.mxu0 0.0
  %691 = vmatprep.subr.mxu0 0.0
  %692 = vmatpush1.msra.mxu0 0.0
  %693 = vmatprep.subr.mxu0 0.0
  %694 = vmatpush1.msra.mxu0 0.0
  %695 = vmatprep.subr.mxu0 0.0
  %696 = vmatpush1.msra.mxu0 0.0
  %697 = vmatprep.subr.mxu0 0.0
  %698 = vmatpush1.msra.mxu0 0.0
  %699 = vmatprep.subr.mxu0 0.0
  %700 = vmatpush1.msra.mxu0 0.0
  %701 = vmatprep.subr.mxu0 0.0
  %702 = vmatpush1.msra.mxu0 0.0
  %703 = vmatprep.subr.mxu0 0.0
  %704 = vmatpush1.msra.mxu0 %v57
  %705 = vmatprep.subr.mxu0 0.0
  %706 = vmatpush1.msra.mxu0 %v56
  %707 = vmatprep.subr.mxu0 0.0
  %708 = vmatpush1.msra.mxu0 %v55
  %709 = vmatprep.subr.mxu0 0.0
  %710 = vmatpush1.msra.mxu0 %v54
  %711 = vmatprep.subr.mxu0 0.0
  %712 = vmatpush2.msra.mxu0 0.0
  %713 = vmatprep.subr.mxu0 0.0
  %714 = vmatpush2.msra.mxu0 0.0
  %715 = vmatprep.subr.mxu0 0.0
  %716 = vmatpush2.msra.mxu0 0.0
  %717 = vmatprep.subr.mxu0 0.0
  %718 = vmatpush2.msra.mxu0 0.0
  %719 = vmatprep.subr.mxu0 0.0
  %720 = vmatpush2.msra.mxu0 0.0
  %721 = vmatprep.subr.mxu0 0.0
  %722 = vmatpush2.msra.mxu0 0.0
  %723 = vmatprep.subr.mxu0 0.0
  %724 = vmatpush2.msra.mxu0 0.0
  %725 = vmatprep.subr.mxu0 0.0
  %726 = vmatpush2.msra.mxu0 0.0
  %727 = vmatprep.subr.mxu0 0.0
  %728 = vmatpush2.msra.mxu0 0.0
  %729 = vmatprep.subr.mxu0 0.0
  %730 = vmatpush2.msra.mxu0 0.0
  %731 = vmatprep.subr.mxu0 0.0
  %732 = vmatpush2.msra.mxu0 0.0
  %733 = vmatprep.subr.mxu0 0.0
  %734 = vmatpush2.msra.mxu0 0.0
  %735 = vmatprep.subr.mxu0 0.0
  %736 = vmatpush2.msra.mxu0 0.0
  %737 = vmatprep.subr.mxu0 0.0
  %738 = vmatpush2.msra.mxu0 0.0
  %739 = vmatprep.subr.mxu0 0.0
  %740 = vmatpush2.msra.mxu0 0.0
  %741 = vmatprep.subr.mxu0 0.0
  %742 = vmatpush2.msra.mxu0 0.0
  %743 = vmatprep.mubr.f32.mxu0 0.0
  %744 = vmatmul.mubr.f32.gmra.mxu0 %v677
  %v745 = vpop.f32.mrf.mxu0
  %v746 = vadd.f32 %v673, %v745
  %v747 = vpop.f32.mrf.mxu0
  %748 = vdwg.mxu0
  %v749 = vxor.u32 %v746, 2147483648
  %v750 = vmul.f32 %v749, 1.442695
  %v751 = vpow.pop %v750
  %v752 = vadd.f32 %v751, 1.0
  %v753 = vrcp.pop %v752
  %v754 = vmul.f32 1.0, %v753
  %v755 = vtanh.pop %v746
  %v756 = vmul.f32 %v754, %v564
  %758 = vrot.lane.b32.xlu0 %v755, 64
  %v759 = vpop.permute.xlu0 %758
  %v761 = vmul.f32 %v754, %v759
  %763 = vrot.lane.b32.xlu0 %v761, 32
  %v764 = vpop.permute.xlu0 %763
  %v766 = vadd.f32 %v756, %v764
  %v767 = vtanh.pop %v766
  %769 = vrot.lane.b32.xlu0 %v767, 64
  %v770 = vpop.permute.xlu0 %769
  %v772 = vmul.f32 %v754, %v770
  %s773 = scalar_lea.vmem %s36, 32
  %v774 = vld [vmem:[%s773] sm:$0xff]
  %776 = vrot.lane.b32.xlu0 %v671, 32
  %v777 = vpop.permute.xlu0 %776
  %v778 = vsel %vm59, %v777, 0
  %780 = vmatprep.subr.mxu0 0.0
  %781 = vmatpush1.msra.mxu0 0.0
  %782 = vmatprep.subr.mxu0 0.0
  %783 = vmatpush1.msra.mxu0 0.0
  %784 = vmatprep.subr.mxu0 0.0
  %785 = vmatpush1.msra.mxu0 0.0
  %786 = vmatprep.subr.mxu0 0.0
  %787 = vmatpush1.msra.mxu0 0.0
  %788 = vmatprep.subr.mxu0 0.0
  %789 = vmatpush1.msra.mxu0 0.0
  %790 = vmatprep.subr.mxu0 0.0
  %791 = vmatpush1.msra.mxu0 0.0
  %792 = vmatprep.subr.mxu0 0.0
  %793 = vmatpush1.msra.mxu0 0.0
  %794 = vmatprep.subr.mxu0 0.0
  %795 = vmatpush1.msra.mxu0 0.0
  %796 = vmatprep.subr.mxu0 0.0
  %797 = vmatpush1.msra.mxu0 0.0
  %798 = vmatprep.subr.mxu0 0.0
  %799 = vmatpush1.msra.mxu0 0.0
  %800 = vmatprep.subr.mxu0 0.0
  %801 = vmatpush1.msra.mxu0 0.0
  %802 = vmatprep.subr.mxu0 0.0
  %803 = vmatpush1.msra.mxu0 0.0
  %804 = vmatprep.subr.mxu0 0.0
  %805 = vmatpush1.msra.mxu0 %v164
  %806 = vmatprep.subr.mxu0 0.0
  %807 = vmatpush1.msra.mxu0 %v163
  %808 = vmatprep.subr.mxu0 0.0
  %809 = vmatpush1.msra.mxu0 %v162
  %810 = vmatprep.subr.mxu0 0.0
  %811 = vmatpush1.msra.mxu0 %v161
  %812 = vmatprep.subr.mxu0 0.0
  %813 = vmatpush2.msra.mxu0 0.0
  %814 = vmatprep.subr.mxu0 0.0
  %815 = vmatpush2.msra.mxu0 0.0
  %816 = vmatprep.subr.mxu0 0.0
  %817 = vmatpush2.msra.mxu0 0.0
  %818 = vmatprep.subr.mxu0 0.0
  %819 = vmatpush2.msra.mxu0 0.0
  %820 = vmatprep.subr.mxu0 0.0
  %821 = vmatpush2.msra.mxu0 0.0
  %822 = vmatprep.subr.mxu0 0.0
  %823 = vmatpush2.msra.mxu0 0.0
  %824 = vmatprep.subr.mxu0 0.0
  %825 = vmatpush2.msra.mxu0 0.0
  %826 = vmatprep.subr.mxu0 0.0
  %827 = vmatpush2.msra.mxu0 0.0
  %828 = vmatprep.subr.mxu0 0.0
  %829 = vmatpush2.msra.mxu0 0.0
  %830 = vmatprep.subr.mxu0 0.0
  %831 = vmatpush2.msra.mxu0 0.0
  %832 = vmatprep.subr.mxu0 0.0
  %833 = vmatpush2.msra.mxu0 0.0
  %834 = vmatprep.subr.mxu0 0.0
  %835 = vmatpush2.msra.mxu0 0.0
  %836 = vmatprep.subr.mxu0 0.0
  %837 = vmatpush2.msra.mxu0 0.0
  %838 = vmatprep.subr.mxu0 0.0
  %839 = vmatpush2.msra.mxu0 0.0
  %840 = vmatprep.subr.mxu0 0.0
  %841 = vmatpush2.msra.mxu0 0.0
  %842 = vmatprep.subr.mxu0 0.0
  %843 = vmatpush2.msra.mxu0 0.0
  %844 = vmatprep.mubr.f32.mxu0 0.0
  %845 = vmatmul.mubr.f32.gmra.mxu0 %v778
  %v846 = vpop.f32.mrf.mxu0
  %v847 = vadd.f32 %v774, %v846
  %v848 = vpop.f32.mrf.mxu0
  %849 = vdwg.mxu0
  %v850 = vxor.u32 %v847, 2147483648
  %v851 = vmul.f32 %v850, 1.442695
  %v852 = vpow.pop %v851
  %v853 = vadd.f32 %v852, 1.0
  %v854 = vrcp.pop %v853
  %v855 = vmul.f32 1.0, %v854
  %v856 = vtanh.pop %v847
  %v857 = vmul.f32 %v855, %v665
  %859 = vrot.lane.b32.xlu0 %v856, 64
  %v860 = vpop.permute.xlu0 %859
  %v862 = vmul.f32 %v855, %v860
  %864 = vrot.lane.b32.xlu0 %v862, 32
  %v865 = vpop.permute.xlu0 %864
  %v867 = vadd.f32 %v857, %v865
  %v868 = vtanh.pop %v867
  %870 = vrot.lane.b32.xlu0 %v868, 64
  %v871 = vpop.permute.xlu0 %870
  %v873 = vmul.f32 %v855, %v871
  %s874 = scalar_lea.vmem %s0, 32
  %v875 = vld [vmem:[%s874] sm:$0xff]
  %877 = vrot.lane.b32.xlu0 %v772, 32
  %v878 = vpop.permute.xlu0 %877
  %v879 = vsel %vm59, %v878, 0
  %881 = vmatprep.subr.mxu0 0.0
  %882 = vmatpush1.msra.mxu0 0.0
  %883 = vmatprep.subr.mxu0 0.0
  %884 = vmatpush1.msra.mxu0 0.0
  %885 = vmatprep.subr.mxu0 0.0
  %886 = vmatpush1.msra.mxu0 0.0
  %887 = vmatprep.subr.mxu0 0.0
  %888 = vmatpush1.msra.mxu0 0.0
  %889 = vmatprep.subr.mxu0 0.0
  %890 = vmatpush1.msra.mxu0 0.0
  %891 = vmatprep.subr.mxu0 0.0
  %892 = vmatpush1.msra.mxu0 0.0
  %893 = vmatprep.subr.mxu0 0.0
  %894 = vmatpush1.msra.mxu0 0.0
  %895 = vmatprep.subr.mxu0 0.0
  %896 = vmatpush1.msra.mxu0 0.0
  %897 = vmatprep.subr.mxu0 0.0
  %898 = vmatpush1.msra.mxu0 0.0
  %899 = vmatprep.subr.mxu0 0.0
  %900 = vmatpush1.msra.mxu0 0.0
  %901 = vmatprep.subr.mxu0 0.0
  %902 = vmatpush1.msra.mxu0 0.0
  %903 = vmatprep.subr.mxu0 0.0
  %904 = vmatpush1.msra.mxu0 0.0
  %905 = vmatprep.subr.mxu0 0.0
  %906 = vmatpush1.msra.mxu0 %v57
  %907 = vmatprep.subr.mxu0 0.0
  %908 = vmatpush1.msra.mxu0 %v56
  %909 = vmatprep.subr.mxu0 0.0
  %910 = vmatpush1.msra.mxu0 %v55
  %911 = vmatprep.subr.mxu0 0.0
  %912 = vmatpush1.msra.mxu0 %v54
  %913 = vmatprep.subr.mxu0 0.0
  %914 = vmatpush2.msra.mxu0 0.0
  %915 = vmatprep.subr.mxu0 0.0
  %916 = vmatpush2.msra.mxu0 0.0
  %917 = vmatprep.subr.mxu0 0.0
  %918 = vmatpush2.msra.mxu0 0.0
  %919 = vmatprep.subr.mxu0 0.0
  %920 = vmatpush2.msra.mxu0 0.0
  %921 = vmatprep.subr.mxu0 0.0
  %922 = vmatpush2.msra.mxu0 0.0
  %923 = vmatprep.subr.mxu0 0.0
  %924 = vmatpush2.msra.mxu0 0.0
  %925 = vmatprep.subr.mxu0 0.0
  %926 = vmatpush2.msra.mxu0 0.0
  %927 = vmatprep.subr.mxu0 0.0
  %928 = vmatpush2.msra.mxu0 0.0
  %929 = vmatprep.subr.mxu0 0.0
  %930 = vmatpush2.msra.mxu0 0.0
  %931 = vmatprep.subr.mxu0 0.0
  %932 = vmatpush2.msra.mxu0 0.0
  %933 = vmatprep.subr.mxu0 0.0
  %934 = vmatpush2.msra.mxu0 0.0
  %935 = vmatprep.subr.mxu0 0.0
  %936 = vmatpush2.msra.mxu0 0.0
  %937 = vmatprep.subr.mxu0 0.0
  %938 = vmatpush2.msra.mxu0 0.0
  %939 = vmatprep.subr.mxu0 0.0
  %940 = vmatpush2.msra.mxu0 0.0
  %941 = vmatprep.subr.mxu0 0.0
  %942 = vmatpush2.msra.mxu0 0.0
  %943 = vmatprep.subr.mxu0 0.0
  %944 = vmatpush2.msra.mxu0 0.0
  %945 = vmatprep.mubr.f32.mxu0 0.0
  %946 = vmatmul.mubr.f32.gmra.mxu0 %v879
  %v947 = vpop.f32.mrf.mxu0
  %v948 = vadd.f32 %v875, %v947
  %v949 = vpop.f32.mrf.mxu0
  %950 = vdwg.mxu0
  %v951 = vxor.u32 %v948, 2147483648
  %v952 = vmul.f32 %v951, 1.442695
  %v953 = vpow.pop %v952
  %v954 = vadd.f32 %v953, 1.0
  %v955 = vrcp.pop %v954
  %v956 = vmul.f32 1.0, %v955
  %v957 = vtanh.pop %v948
  %v958 = vmul.f32 %v956, %v766
  %960 = vrot.lane.b32.xlu0 %v957, 64
  %v961 = vpop.permute.xlu0 %960
  %v963 = vmul.f32 %v956, %v961
  %965 = vrot.lane.b32.xlu0 %v963, 32
  %v966 = vpop.permute.xlu0 %965
  %v968 = vadd.f32 %v958, %v966
  %v969 = vtanh.pop %v968
  %971 = vrot.lane.b32.xlu0 %v969, 64
  %v972 = vpop.permute.xlu0 %971
  %v974 = vmul.f32 %v956, %v972
  %s975 = scalar_lea.vmem %s36, 24
  %v976 = vld [vmem:[%s975] sm:$0xff]
  %978 = vrot.lane.b32.xlu0 %v873, 32
  %v979 = vpop.permute.xlu0 %978
  %v980 = vsel %vm59, %v979, 0
  %982 = vmatprep.subr.mxu0 0.0
  %983 = vmatpush1.msra.mxu0 0.0
  %984 = vmatprep.subr.mxu0 0.0
  %985 = vmatpush1.msra.mxu0 0.0
  %986 = vmatprep.subr.mxu0 0.0
  %987 = vmatpush1.msra.mxu0 0.0
  %988 = vmatprep.subr.mxu0 0.0
  %989 = vmatpush1.msra.mxu0 0.0
  %990 = vmatprep.subr.mxu0 0.0
  %991 = vmatpush1.msra.mxu0 0.0
  %992 = vmatprep.subr.mxu0 0.0
  %993 = vmatpush1.msra.mxu0 0.0
  %994 = vmatprep.subr.mxu0 0.0
  %995 = vmatpush1.msra.mxu0 0.0
  %996 = vmatprep.subr.mxu0 0.0
  %997 = vmatpush1.msra.mxu0 0.0
  %998 = vmatprep.subr.mxu0 0.0
  %999 = vmatpush1.msra.mxu0 0.0
  %1000 = vmatprep.subr.mxu0 0.0
  %1001 = vmatpush1.msra.mxu0 0.0
  %1002 = vmatprep.subr.mxu0 0.0
  %1003 = vmatpush1.msra.mxu0 0.0
  %1004 = vmatprep.subr.mxu0 0.0
  %1005 = vmatpush1.msra.mxu0 0.0
  %1006 = vmatprep.subr.mxu0 0.0
  %1007 = vmatpush1.msra.mxu0 %v164
  %1008 = vmatprep.subr.mxu0 0.0
  %1009 = vmatpush1.msra.mxu0 %v163
  %1010 = vmatprep.subr.mxu0 0.0
  %1011 = vmatpush1.msra.mxu0 %v162
  %1012 = vmatprep.subr.mxu0 0.0
  %1013 = vmatpush1.msra.mxu0 %v161
  %1014 = vmatprep.subr.mxu0 0.0
  %1015 = vmatpush2.msra.mxu0 0.0
  %1016 = vmatprep.subr.mxu0 0.0
  %1017 = vmatpush2.msra.mxu0 0.0
  %1018 = vmatprep.subr.mxu0 0.0
  %1019 = vmatpush2.msra.mxu0 0.0
  %1020 = vmatprep.subr.mxu0 0.0
  %1021 = vmatpush2.msra.mxu0 0.0
  %1022 = vmatprep.subr.mxu0 0.0
  %1023 = vmatpush2.msra.mxu0 0.0
  %1024 = vmatprep.subr.mxu0 0.0
  %1025 = vmatpush2.msra.mxu0 0.0
  %1026 = vmatprep.subr.mxu0 0.0
  %1027 = vmatpush2.msra.mxu0 0.0
  %1028 = vmatprep.subr.mxu0 0.0
  %1029 = vmatpush2.msra.mxu0 0.0
  %1030 = vmatprep.subr.mxu0 0.0
  %1031 = vmatpush2.msra.mxu0 0.0
  %1032 = vmatprep.subr.mxu0 0.0
  %1033 = vmatpush2.msra.mxu0 0.0
  %1034 = vmatprep.subr.mxu0 0.0
  %1035 = vmatpush2.msra.mxu0 0.0
  %1036 = vmatprep.subr.mxu0 0.0
  %1037 = vmatpush2.msra.mxu0 0.0
  %1038 = vmatprep.subr.mxu0 0.0
  %1039 = vmatpush2.msra.mxu0 0.0
  %1040 = vmatprep.subr.mxu0 0.0
  %1041 = vmatpush2.msra.mxu0 0.0
  %1042 = vmatprep.subr.mxu0 0.0
  %1043 = vmatpush2.msra.mxu0 0.0
  %1044 = vmatprep.subr.mxu0 0.0
  %1045 = vmatpush2.msra.mxu0 0.0
  %1046 = vmatprep.mubr.f32.mxu0 0.0
  %1047 = vmatmul.mubr.f32.gmra.mxu0 %v980
  %v1048 = vpop.f32.mrf.mxu0
  %v1049 = vadd.f32 %v976, %v1048
  %v1050 = vpop.f32.mrf.mxu0
  %1051 = vdwg.mxu0
  %v1052 = vxor.u32 %v1049, 2147483648
  %v1053 = vmul.f32 %v1052, 1.442695
  %v1054 = vpow.pop %v1053
  %v1055 = vadd.f32 %v1054, 1.0
  %v1056 = vrcp.pop %v1055
  %v1057 = vmul.f32 1.0, %v1056
  %v1058 = vtanh.pop %v1049
  %v1059 = vmul.f32 %v1057, %v867
  %1061 = vrot.lane.b32.xlu0 %v1058, 64
  %v1062 = vpop.permute.xlu0 %1061
  %v1064 = vmul.f32 %v1057, %v1062
  %1066 = vrot.lane.b32.xlu0 %v1064, 32
  %v1067 = vpop.permute.xlu0 %1066
  %v1069 = vadd.f32 %v1059, %v1067
  %v1070 = vtanh.pop %v1069
  %1072 = vrot.lane.b32.xlu0 %v1070, 64
  %v1073 = vpop.permute.xlu0 %1072
  %v1075 = vmul.f32 %v1057, %v1073
  %s1076 = scalar_lea.vmem %s0, 40
  %v1077 = vld [vmem:[%s1076] sm:$0xff]
  %1079 = vrot.lane.b32.xlu0 %v974, 32
  %v1080 = vpop.permute.xlu0 %1079
  %v1081 = vsel %vm59, %v1080, 0
  %1083 = vmatprep.subr.mxu0 0.0
  %1084 = vmatpush1.msra.mxu0 0.0
  %1085 = vmatprep.subr.mxu0 0.0
  %1086 = vmatpush1.msra.mxu0 0.0
  %1087 = vmatprep.subr.mxu0 0.0
  %1088 = vmatpush1.msra.mxu0 0.0
  %1089 = vmatprep.subr.mxu0 0.0
  %1090 = vmatpush1.msra.mxu0 0.0
  %1091 = vmatprep.subr.mxu0 0.0
  %1092 = vmatpush1.msra.mxu0 0.0
  %1093 = vmatprep.subr.mxu0 0.0
  %1094 = vmatpush1.msra.mxu0 0.0
  %1095 = vmatprep.subr.mxu0 0.0
  %1096 = vmatpush1.msra.mxu0 0.0
  %1097 = vmatprep.subr.mxu0 0.0
  %1098 = vmatpush1.msra.mxu0 0.0
  %1099 = vmatprep.subr.mxu0 0.0
  %1100 = vmatpush1.msra.mxu0 0.0
  %1101 = vmatprep.subr.mxu0 0.0
  %1102 = vmatpush1.msra.mxu0 0.0
  %1103 = vmatprep.subr.mxu0 0.0
  %1104 = vmatpush1.msra.mxu0 0.0
  %1105 = vmatprep.subr.mxu0 0.0
  %1106 = vmatpush1.msra.mxu0 0.0
  %1107 = vmatprep.subr.mxu0 0.0
  %1108 = vmatpush1.msra.mxu0 %v57
  %1109 = vmatprep.subr.mxu0 0.0
  %1110 = vmatpush1.msra.mxu0 %v56
  %1111 = vmatprep.subr.mxu0 0.0
  %1112 = vmatpush1.msra.mxu0 %v55
  %1113 = vmatprep.subr.mxu0 0.0
  %1114 = vmatpush1.msra.mxu0 %v54
  %1115 = vmatprep.subr.mxu0 0.0
  %1116 = vmatpush2.msra.mxu0 0.0
  %1117 = vmatprep.subr.mxu0 0.0
  %1118 = vmatpush2.msra.mxu0 0.0
  %1119 = vmatprep.subr.mxu0 0.0
  %1120 = vmatpush2.msra.mxu0 0.0
  %1121 = vmatprep.subr.mxu0 0.0
  %1122 = vmatpush2.msra.mxu0 0.0
  %1123 = vmatprep.subr.mxu0 0.0
  %1124 = vmatpush2.msra.mxu0 0.0
  %1125 = vmatprep.subr.mxu0 0.0
  %1126 = vmatpush2.msra.mxu0 0.0
  %1127 = vmatprep.subr.mxu0 0.0
  %1128 = vmatpush2.msra.mxu0 0.0
  %1129 = vmatprep.subr.mxu0 0.0
  %1130 = vmatpush2.msra.mxu0 0.0
  %1131 = vmatprep.subr.mxu0 0.0
  %1132 = vmatpush2.msra.mxu0 0.0
  %1133 = vmatprep.subr.mxu0 0.0
  %1134 = vmatpush2.msra.mxu0 0.0
  %1135 = vmatprep.subr.mxu0 0.0
  %1136 = vmatpush2.msra.mxu0 0.0
  %1137 = vmatprep.subr.mxu0 0.0
  %1138 = vmatpush2.msra.mxu0 0.0
  %1139 = vmatprep.subr.mxu0 0.0
  %1140 = vmatpush2.msra.mxu0 0.0
  %1141 = vmatprep.subr.mxu0 0.0
  %1142 = vmatpush2.msra.mxu0 0.0
  %1143 = vmatprep.subr.mxu0 0.0
  %1144 = vmatpush2.msra.mxu0 0.0
  %1145 = vmatprep.subr.mxu0 0.0
  %1146 = vmatpush2.msra.mxu0 0.0
  %1147 = vmatprep.mubr.f32.mxu0 0.0
  %1148 = vmatmul.mubr.f32.gmra.mxu0 %v1081
  %v1149 = vpop.f32.mrf.mxu0
  %v1150 = vadd.f32 %v1077, %v1149
  %v1151 = vpop.f32.mrf.mxu0
  %1152 = vdwg.mxu0
  %v1153 = vxor.u32 %v1150, 2147483648
  %v1154 = vmul.f32 %v1153, 1.442695
  %v1155 = vpow.pop %v1154
  %v1156 = vadd.f32 %v1155, 1.0
  %v1157 = vrcp.pop %v1156
  %v1158 = vmul.f32 1.0, %v1157
  %v1159 = vtanh.pop %v1150
  %v1160 = vmul.f32 %v1158, %v968
  %1162 = vrot.lane.b32.xlu0 %v1159, 64
  %v1163 = vpop.permute.xlu0 %1162
  %v1165 = vmul.f32 %v1158, %v1163
  %1167 = vrot.lane.b32.xlu0 %v1165, 32
  %v1168 = vpop.permute.xlu0 %1167
  %v1170 = vadd.f32 %v1160, %v1168
  %v1171 = vtanh.pop %v1170
  %1173 = vrot.lane.b32.xlu0 %v1171, 64
  %v1174 = vpop.permute.xlu0 %1173
  %v1176 = vmul.f32 %v1158, %v1174
  %s1177 = scalar_lea.vmem %s36, 16
  %v1178 = vld [vmem:[%s1177] sm:$0xff]
  %1180 = vrot.lane.b32.xlu0 %v1075, 32
  %v1181 = vpop.permute.xlu0 %1180
  %v1182 = vsel %vm59, %v1181, 0
  %1184 = vmatprep.subr.mxu0 0.0
  %1185 = vmatpush1.msra.mxu0 0.0
  %1186 = vmatprep.subr.mxu0 0.0
  %1187 = vmatpush1.msra.mxu0 0.0
  %1188 = vmatprep.subr.mxu0 0.0
  %1189 = vmatpush1.msra.mxu0 0.0
  %1190 = vmatprep.subr.mxu0 0.0
  %1191 = vmatpush1.msra.mxu0 0.0
  %1192 = vmatprep.subr.mxu0 0.0
  %1193 = vmatpush1.msra.mxu0 0.0
  %1194 = vmatprep.subr.mxu0 0.0
  %1195 = vmatpush1.msra.mxu0 0.0
  %1196 = vmatprep.subr.mxu0 0.0
  %1197 = vmatpush1.msra.mxu0 0.0
  %1198 = vmatprep.subr.mxu0 0.0
  %1199 = vmatpush1.msra.mxu0 0.0
  %1200 = vmatprep.subr.mxu0 0.0
  %1201 = vmatpush1.msra.mxu0 0.0
  %1202 = vmatprep.subr.mxu0 0.0
  %1203 = vmatpush1.msra.mxu0 0.0
  %1204 = vmatprep.subr.mxu0 0.0
  %1205 = vmatpush1.msra.mxu0 0.0
  %1206 = vmatprep.subr.mxu0 0.0
  %1207 = vmatpush1.msra.mxu0 0.0
  %1208 = vmatprep.subr.mxu0 0.0
  %1209 = vmatpush1.msra.mxu0 %v164
  %1210 = vmatprep.subr.mxu0 0.0
  %1211 = vmatpush1.msra.mxu0 %v163
  %1212 = vmatprep.subr.mxu0 0.0
  %1213 = vmatpush1.msra.mxu0 %v162
  %1214 = vmatprep.subr.mxu0 0.0
  %1215 = vmatpush1.msra.mxu0 %v161
  %1216 = vmatprep.subr.mxu0 0.0
  %1217 = vmatpush2.msra.mxu0 0.0
  %1218 = vmatprep.subr.mxu0 0.0
  %1219 = vmatpush2.msra.mxu0 0.0
  %1220 = vmatprep.subr.mxu0 0.0
  %1221 = vmatpush2.msra.mxu0 0.0
  %1222 = vmatprep.subr.mxu0 0.0
  %1223 = vmatpush2.msra.mxu0 0.0
  %1224 = vmatprep.subr.mxu0 0.0
  %1225 = vmatpush2.msra.mxu0 0.0
  %1226 = vmatprep.subr.mxu0 0.0
  %1227 = vmatpush2.msra.mxu0 0.0
  %1228 = vmatprep.subr.mxu0 0.0
  %1229 = vmatpush2.msra.mxu0 0.0
  %1230 = vmatprep.subr.mxu0 0.0
  %1231 = vmatpush2.msra.mxu0 0.0
  %1232 = vmatprep.subr.mxu0 0.0
  %1233 = vmatpush2.msra.mxu0 0.0
  %1234 = vmatprep.subr.mxu0 0.0
  %1235 = vmatpush2.msra.mxu0 0.0
  %1236 = vmatprep.subr.mxu0 0.0
  %1237 = vmatpush2.msra.mxu0 0.0
  %1238 = vmatprep.subr.mxu0 0.0
  %1239 = vmatpush2.msra.mxu0 0.0
  %1240 = vmatprep.subr.mxu0 0.0
  %1241 = vmatpush2.msra.mxu0 0.0
  %1242 = vmatprep.subr.mxu0 0.0
  %1243 = vmatpush2.msra.mxu0 0.0
  %1244 = vmatprep.subr.mxu0 0.0
  %1245 = vmatpush2.msra.mxu0 0.0
  %1246 = vmatprep.subr.mxu0 0.0
  %1247 = vmatpush2.msra.mxu0 0.0
  %1248 = vmatprep.mubr.f32.mxu0 0.0
  %1249 = vmatmul.mubr.f32.gmra.mxu0 %v1182
  %v1250 = vpop.f32.mrf.mxu0
  %v1251 = vadd.f32 %v1178, %v1250
  %v1252 = vpop.f32.mrf.mxu0
  %1253 = vdwg.mxu0
  %v1254 = vxor.u32 %v1251, 2147483648
  %v1255 = vmul.f32 %v1254, 1.442695
  %v1256 = vpow.pop %v1255
  %v1257 = vadd.f32 %v1256, 1.0
  %v1258 = vrcp.pop %v1257
  %v1259 = vmul.f32 1.0, %v1258
  %v1260 = vtanh.pop %v1251
  %v1261 = vmul.f32 %v1259, %v1069
  %1263 = vrot.lane.b32.xlu0 %v1260, 64
  %v1264 = vpop.permute.xlu0 %1263
  %v1266 = vmul.f32 %v1259, %v1264
  %1268 = vrot.lane.b32.xlu0 %v1266, 32
  %v1269 = vpop.permute.xlu0 %1268
  %v1271 = vadd.f32 %v1261, %v1269
  %v1272 = vtanh.pop %v1271
  %1274 = vrot.lane.b32.xlu0 %v1272, 64
  %v1275 = vpop.permute.xlu0 %1274
  %v1277 = vmul.f32 %v1259, %v1275
  %s1278 = scalar_lea.vmem %s0, 48
  %v1279 = vld [vmem:[%s1278] sm:$0xff]
  %1281 = vrot.lane.b32.xlu0 %v1176, 32
  %v1282 = vpop.permute.xlu0 %1281
  %v1283 = vsel %vm59, %v1282, 0
  %1285 = vmatprep.subr.mxu0 0.0
  %1286 = vmatpush1.msra.mxu0 0.0
  %1287 = vmatprep.subr.mxu0 0.0
  %1288 = vmatpush1.msra.mxu0 0.0
  %1289 = vmatprep.subr.mxu0 0.0
  %1290 = vmatpush1.msra.mxu0 0.0
  %1291 = vmatprep.subr.mxu0 0.0
  %1292 = vmatpush1.msra.mxu0 0.0
  %1293 = vmatprep.subr.mxu0 0.0
  %1294 = vmatpush1.msra.mxu0 0.0
  %1295 = vmatprep.subr.mxu0 0.0
  %1296 = vmatpush1.msra.mxu0 0.0
  %1297 = vmatprep.subr.mxu0 0.0
  %1298 = vmatpush1.msra.mxu0 0.0
  %1299 = vmatprep.subr.mxu0 0.0
  %1300 = vmatpush1.msra.mxu0 0.0
  %1301 = vmatprep.subr.mxu0 0.0
  %1302 = vmatpush1.msra.mxu0 0.0
  %1303 = vmatprep.subr.mxu0 0.0
  %1304 = vmatpush1.msra.mxu0 0.0
  %1305 = vmatprep.subr.mxu0 0.0
  %1306 = vmatpush1.msra.mxu0 0.0
  %1307 = vmatprep.subr.mxu0 0.0
  %1308 = vmatpush1.msra.mxu0 0.0
  %1309 = vmatprep.subr.mxu0 0.0
  %1310 = vmatpush1.msra.mxu0 %v57
  %1311 = vmatprep.subr.mxu0 0.0
  %1312 = vmatpush1.msra.mxu0 %v56
  %1313 = vmatprep.subr.mxu0 0.0
  %1314 = vmatpush1.msra.mxu0 %v55
  %1315 = vmatprep.subr.mxu0 0.0
  %1316 = vmatpush1.msra.mxu0 %v54
  %1317 = vmatprep.subr.mxu0 0.0
  %1318 = vmatpush2.msra.mxu0 0.0
  %1319 = vmatprep.subr.mxu0 0.0
  %1320 = vmatpush2.msra.mxu0 0.0
  %1321 = vmatprep.subr.mxu0 0.0
  %1322 = vmatpush2.msra.mxu0 0.0
  %1323 = vmatprep.subr.mxu0 0.0
  %1324 = vmatpush2.msra.mxu0 0.0
  %1325 = vmatprep.subr.mxu0 0.0
  %1326 = vmatpush2.msra.mxu0 0.0
  %1327 = vmatprep.subr.mxu0 0.0
  %1328 = vmatpush2.msra.mxu0 0.0
  %1329 = vmatprep.subr.mxu0 0.0
  %1330 = vmatpush2.msra.mxu0 0.0
  %1331 = vmatprep.subr.mxu0 0.0
  %1332 = vmatpush2.msra.mxu0 0.0
  %1333 = vmatprep.subr.mxu0 0.0
  %1334 = vmatpush2.msra.mxu0 0.0
  %1335 = vmatprep.subr.mxu0 0.0
  %1336 = vmatpush2.msra.mxu0 0.0
  %1337 = vmatprep.subr.mxu0 0.0
  %1338 = vmatpush2.msra.mxu0 0.0
  %1339 = vmatprep.subr.mxu0 0.0
  %1340 = vmatpush2.msra.mxu0 0.0
  %1341 = vmatprep.subr.mxu0 0.0
  %1342 = vmatpush2.msra.mxu0 0.0
  %1343 = vmatprep.subr.mxu0 0.0
  %1344 = vmatpush2.msra.mxu0 0.0
  %1345 = vmatprep.subr.mxu0 0.0
  %1346 = vmatpush2.msra.mxu0 0.0
  %1347 = vmatprep.subr.mxu0 0.0
  %1348 = vmatpush2.msra.mxu0 0.0
  %1349 = vmatprep.mubr.f32.mxu0 0.0
  %1350 = vmatmul.mubr.f32.gmra.mxu0 %v1283
  %v1351 = vpop.f32.mrf.mxu0
  %v1352 = vadd.f32 %v1279, %v1351
  %v1353 = vpop.f32.mrf.mxu0
  %1354 = vdwg.mxu0
  %v1355 = vxor.u32 %v1352, 2147483648
  %v1356 = vmul.f32 %v1355, 1.442695
  %v1357 = vpow.pop %v1356
  %v1358 = vadd.f32 %v1357, 1.0
  %v1359 = vrcp.pop %v1358
  %v1360 = vmul.f32 1.0, %v1359
  %v1361 = vtanh.pop %v1352
  %v1362 = vmul.f32 %v1360, %v1170
  %1364 = vrot.lane.b32.xlu0 %v1361, 64
  %v1365 = vpop.permute.xlu0 %1364
  %v1367 = vmul.f32 %v1360, %v1365
  %1369 = vrot.lane.b32.xlu0 %v1367, 32
  %v1370 = vpop.permute.xlu0 %1369
  %v1372 = vadd.f32 %v1362, %v1370
  %v1373 = vtanh.pop %v1372
  %1375 = vrot.lane.b32.xlu0 %v1373, 64
  %v1376 = vpop.permute.xlu0 %1375
  %v1378 = vmul.f32 %v1360, %v1376
  %s1379 = scalar_lea.vmem %s36, 8
  %v1380 = vld [vmem:[%s1379] sm:$0xff]
  %1382 = vrot.lane.b32.xlu0 %v1277, 32
  %v1383 = vpop.permute.xlu0 %1382
  %v1384 = vsel %vm59, %v1383, 0
  %1386 = vmatprep.subr.mxu0 0.0
  %1387 = vmatpush1.msra.mxu0 0.0
  %1388 = vmatprep.subr.mxu0 0.0
  %1389 = vmatpush1.msra.mxu0 0.0
  %1390 = vmatprep.subr.mxu0 0.0
  %1391 = vmatpush1.msra.mxu0 0.0
  %1392 = vmatprep.subr.mxu0 0.0
  %1393 = vmatpush1.msra.mxu0 0.0
  %1394 = vmatprep.subr.mxu0 0.0
  %1395 = vmatpush1.msra.mxu0 0.0
  %1396 = vmatprep.subr.mxu0 0.0
  %1397 = vmatpush1.msra.mxu0 0.0
  %1398 = vmatprep.subr.mxu0 0.0
  %1399 = vmatpush1.msra.mxu0 0.0
  %1400 = vmatprep.subr.mxu0 0.0
  %1401 = vmatpush1.msra.mxu0 0.0
  %1402 = vmatprep.subr.mxu0 0.0
  %1403 = vmatpush1.msra.mxu0 0.0
  %1404 = vmatprep.subr.mxu0 0.0
  %1405 = vmatpush1.msra.mxu0 0.0
  %1406 = vmatprep.subr.mxu0 0.0
  %1407 = vmatpush1.msra.mxu0 0.0
  %1408 = vmatprep.subr.mxu0 0.0
  %1409 = vmatpush1.msra.mxu0 0.0
  %1410 = vmatprep.subr.mxu0 0.0
  %1411 = vmatpush1.msra.mxu0 %v164
  %1412 = vmatprep.subr.mxu0 0.0
  %1413 = vmatpush1.msra.mxu0 %v163
  %1414 = vmatprep.subr.mxu0 0.0
  %1415 = vmatpush1.msra.mxu0 %v162
  %1416 = vmatprep.subr.mxu0 0.0
  %1417 = vmatpush1.msra.mxu0 %v161
  %1418 = vmatprep.subr.mxu0 0.0
  %1419 = vmatpush2.msra.mxu0 0.0
  %1420 = vmatprep.subr.mxu0 0.0
  %1421 = vmatpush2.msra.mxu0 0.0
  %1422 = vmatprep.subr.mxu0 0.0
  %1423 = vmatpush2.msra.mxu0 0.0
  %1424 = vmatprep.subr.mxu0 0.0
  %1425 = vmatpush2.msra.mxu0 0.0
  %1426 = vmatprep.subr.mxu0 0.0
  %1427 = vmatpush2.msra.mxu0 0.0
  %1428 = vmatprep.subr.mxu0 0.0
  %1429 = vmatpush2.msra.mxu0 0.0
  %1430 = vmatprep.subr.mxu0 0.0
  %1431 = vmatpush2.msra.mxu0 0.0
  %1432 = vmatprep.subr.mxu0 0.0
  %1433 = vmatpush2.msra.mxu0 0.0
  %1434 = vmatprep.subr.mxu0 0.0
  %1435 = vmatpush2.msra.mxu0 0.0
  %1436 = vmatprep.subr.mxu0 0.0
  %1437 = vmatpush2.msra.mxu0 0.0
  %1438 = vmatprep.subr.mxu0 0.0
  %1439 = vmatpush2.msra.mxu0 0.0
  %1440 = vmatprep.subr.mxu0 0.0
  %1441 = vmatpush2.msra.mxu0 0.0
  %1442 = vmatprep.subr.mxu0 0.0
  %1443 = vmatpush2.msra.mxu0 0.0
  %1444 = vmatprep.subr.mxu0 0.0
  %1445 = vmatpush2.msra.mxu0 0.0
  %1446 = vmatprep.subr.mxu0 0.0
  %1447 = vmatpush2.msra.mxu0 0.0
  %1448 = vmatprep.subr.mxu0 0.0
  %1449 = vmatpush2.msra.mxu0 0.0
  %1450 = vmatprep.mubr.f32.mxu0 0.0
  %1451 = vmatmul.mubr.f32.gmra.mxu0 %v1384
  %v1452 = vpop.f32.mrf.mxu0
  %v1453 = vadd.f32 %v1380, %v1452
  %v1454 = vpop.f32.mrf.mxu0
  %1455 = vdwg.mxu0
  %v1456 = vxor.u32 %v1453, 2147483648
  %v1457 = vmul.f32 %v1456, 1.442695
  %v1458 = vpow.pop %v1457
  %v1459 = vadd.f32 %v1458, 1.0
  %v1460 = vrcp.pop %v1459
  %v1461 = vmul.f32 1.0, %v1460
  %v1462 = vtanh.pop %v1453
  %v1463 = vmul.f32 %v1461, %v1271
  %1465 = vrot.lane.b32.xlu0 %v1462, 64
  %v1466 = vpop.permute.xlu0 %1465
  %v1468 = vmul.f32 %v1461, %v1466
  %1470 = vrot.lane.b32.xlu0 %v1468, 32
  %v1471 = vpop.permute.xlu0 %1470
  %v1473 = vadd.f32 %v1463, %v1471
  %v1474 = vtanh.pop %v1473
  %1476 = vrot.lane.b32.xlu0 %v1474, 64
  %v1477 = vpop.permute.xlu0 %1476
  %v1479 = vmul.f32 %v1461, %v1477
  %s1480 = scalar_lea.vmem %s0, 56
  %v1481 = vld [vmem:[%s1480] sm:$0xff]
  %1483 = vrot.lane.b32.xlu0 %v1378, 32
  %v1484 = vpop.permute.xlu0 %1483
  %v1485 = vsel %vm59, %v1484, 0
  %1487 = vmatprep.subr.mxu0 0.0
  %1488 = vmatpush1.msra.mxu0 0.0
  %1489 = vmatprep.subr.mxu0 0.0
  %1490 = vmatpush1.msra.mxu0 0.0
  %1491 = vmatprep.subr.mxu0 0.0
  %1492 = vmatpush1.msra.mxu0 0.0
  %1493 = vmatprep.subr.mxu0 0.0
  %1494 = vmatpush1.msra.mxu0 0.0
  %1495 = vmatprep.subr.mxu0 0.0
  %1496 = vmatpush1.msra.mxu0 0.0
  %1497 = vmatprep.subr.mxu0 0.0
  %1498 = vmatpush1.msra.mxu0 0.0
  %1499 = vmatprep.subr.mxu0 0.0
  %1500 = vmatpush1.msra.mxu0 0.0
  %1501 = vmatprep.subr.mxu0 0.0
  %1502 = vmatpush1.msra.mxu0 0.0
  %1503 = vmatprep.subr.mxu0 0.0
  %1504 = vmatpush1.msra.mxu0 0.0
  %1505 = vmatprep.subr.mxu0 0.0
  %1506 = vmatpush1.msra.mxu0 0.0
  %1507 = vmatprep.subr.mxu0 0.0
  %1508 = vmatpush1.msra.mxu0 0.0
  %1509 = vmatprep.subr.mxu0 0.0
  %1510 = vmatpush1.msra.mxu0 0.0
  %1511 = vmatprep.subr.mxu0 0.0
  %1512 = vmatpush1.msra.mxu0 %v57
  %1513 = vmatprep.subr.mxu0 0.0
  %1514 = vmatpush1.msra.mxu0 %v56
  %1515 = vmatprep.subr.mxu0 0.0
  %1516 = vmatpush1.msra.mxu0 %v55
  %1517 = vmatprep.subr.mxu0 0.0
  %1518 = vmatpush1.msra.mxu0 %v54
  %1519 = vmatprep.subr.mxu0 0.0
  %1520 = vmatpush2.msra.mxu0 0.0
  %1521 = vmatprep.subr.mxu0 0.0
  %1522 = vmatpush2.msra.mxu0 0.0
  %1523 = vmatprep.subr.mxu0 0.0
  %1524 = vmatpush2.msra.mxu0 0.0
  %1525 = vmatprep.subr.mxu0 0.0
  %1526 = vmatpush2.msra.mxu0 0.0
  %1527 = vmatprep.subr.mxu0 0.0
  %1528 = vmatpush2.msra.mxu0 0.0
  %1529 = vmatprep.subr.mxu0 0.0
  %1530 = vmatpush2.msra.mxu0 0.0
  %1531 = vmatprep.subr.mxu0 0.0
  %1532 = vmatpush2.msra.mxu0 0.0
  %1533 = vmatprep.subr.mxu0 0.0
  %1534 = vmatpush2.msra.mxu0 0.0
  %1535 = vmatprep.subr.mxu0 0.0
  %1536 = vmatpush2.msra.mxu0 0.0
  %1537 = vmatprep.subr.mxu0 0.0
  %1538 = vmatpush2.msra.mxu0 0.0
  %1539 = vmatprep.subr.mxu0 0.0
  %1540 = vmatpush2.msra.mxu0 0.0
  %1541 = vmatprep.subr.mxu0 0.0
  %1542 = vmatpush2.msra.mxu0 0.0
  %1543 = vmatprep.subr.mxu0 0.0
  %1544 = vmatpush2.msra.mxu0 0.0
  %1545 = vmatprep.subr.mxu0 0.0
  %1546 = vmatpush2.msra.mxu0 0.0
  %1547 = vmatprep.subr.mxu0 0.0
  %1548 = vmatpush2.msra.mxu0 0.0
  %1549 = vmatprep.subr.mxu0 0.0
  %1550 = vmatpush2.msra.mxu0 0.0
  %1551 = vmatprep.mubr.f32.mxu0 0.0
  %1552 = vmatmul.mubr.f32.gmra.mxu0 %v1485
  %v1553 = vpop.f32.mrf.mxu0
  %v1554 = vadd.f32 %v1481, %v1553
  %v1555 = vpop.f32.mrf.mxu0
  %1556 = vdwg.mxu0
  %v1557 = vxor.u32 %v1554, 2147483648
  %v1558 = vmul.f32 %v1557, 1.442695
  %v1559 = vpow.pop %v1558
  %v1560 = vadd.f32 %v1559, 1.0
  %v1561 = vrcp.pop %v1560
  %v1562 = vmul.f32 1.0, %v1561
  %v1563 = vtanh.pop %v1554
  %v1564 = vmul.f32 %v1562, %v1372
  %1566 = vrot.lane.b32.xlu0 %v1563, 64
  %v1567 = vpop.permute.xlu0 %1566
  %v1569 = vmul.f32 %v1562, %v1567
  %1571 = vrot.lane.b32.xlu0 %v1569, 32
  %v1572 = vpop.permute.xlu0 %1571
  %v1574 = vadd.f32 %v1564, %v1572
  %v1575 = vtanh.pop %v1574
  %1577 = vrot.lane.b32.xlu0 %v1575, 64
  %v1578 = vpop.permute.xlu0 %1577
  %v1580 = vmul.f32 %v1562, %v1578
  %v1581 = vld [vmem:[%s36] sm:$0xff]
  %1583 = vrot.lane.b32.xlu0 %v1479, 32
  %v1584 = vpop.permute.xlu0 %1583
  %v1585 = vsel %vm59, %v1584, 0
  %1587 = vmatprep.subr.mxu0 0.0
  %1588 = vmatpush1.msra.mxu0 0.0
  %1589 = vmatprep.subr.mxu0 0.0
  %1590 = vmatpush1.msra.mxu0 0.0
  %1591 = vmatprep.subr.mxu0 0.0
  %1592 = vmatpush1.msra.mxu0 0.0
  %1593 = vmatprep.subr.mxu0 0.0
  %1594 = vmatpush1.msra.mxu0 0.0
  %1595 = vmatprep.subr.mxu0 0.0
  %1596 = vmatpush1.msra.mxu0 0.0
  %1597 = vmatprep.subr.mxu0 0.0
  %1598 = vmatpush1.msra.mxu0 0.0
  %1599 = vmatprep.subr.mxu0 0.0
  %1600 = vmatpush1.msra.mxu0 0.0
  %1601 = vmatprep.subr.mxu0 0.0
  %1602 = vmatpush1.msra.mxu0 0.0
  %1603 = vmatprep.subr.mxu0 0.0
  %1604 = vmatpush1.msra.mxu0 0.0
  %1605 = vmatprep.subr.mxu0 0.0
  %1606 = vmatpush1.msra.mxu0 0.0
  %1607 = vmatprep.subr.mxu0 0.0
  %1608 = vmatpush1.msra.mxu0 0.0
  %1609 = vmatprep.subr.mxu0 0.0
  %1610 = vmatpush1.msra.mxu0 0.0
  %1611 = vmatprep.subr.mxu0 0.0
  %1612 = vmatpush1.msra.mxu0 %v164
  %1613 = vmatprep.subr.mxu0 0.0
  %1614 = vmatpush1.msra.mxu0 %v163
  %1615 = vmatprep.subr.mxu0 0.0
  %1616 = vmatpush1.msra.mxu0 %v162
  %1617 = vmatprep.subr.mxu0 0.0
  %1618 = vmatpush1.msra.mxu0 %v161
  %1619 = vmatprep.subr.mxu0 0.0
  %1620 = vmatpush2.msra.mxu0 0.0
  %1621 = vmatprep.subr.mxu0 0.0
  %1622 = vmatpush2.msra.mxu0 0.0
  %1623 = vmatprep.subr.mxu0 0.0
  %1624 = vmatpush2.msra.mxu0 0.0
  %1625 = vmatprep.subr.mxu0 0.0
  %1626 = vmatpush2.msra.mxu0 0.0
  %1627 = vmatprep.subr.mxu0 0.0
  %1628 = vmatpush2.msra.mxu0 0.0
  %1629 = vmatprep.subr.mxu0 0.0
  %1630 = vmatpush2.msra.mxu0 0.0
  %1631 = vmatprep.subr.mxu0 0.0
  %1632 = vmatpush2.msra.mxu0 0.0
  %1633 = vmatprep.subr.mxu0 0.0
  %1634 = vmatpush2.msra.mxu0 0.0
  %1635 = vmatprep.subr.mxu0 0.0
  %1636 = vmatpush2.msra.mxu0 0.0
  %1637 = vmatprep.subr.mxu0 0.0
  %1638 = vmatpush2.msra.mxu0 0.0
  %1639 = vmatprep.subr.mxu0 0.0
  %1640 = vmatpush2.msra.mxu0 0.0
  %1641 = vmatprep.subr.mxu0 0.0
  %1642 = vmatpush2.msra.mxu0 0.0
  %1643 = vmatprep.subr.mxu0 0.0
  %1644 = vmatpush2.msra.mxu0 0.0
  %1645 = vmatprep.subr.mxu0 0.0
  %1646 = vmatpush2.msra.mxu0 0.0
  %1647 = vmatprep.subr.mxu0 0.0
  %1648 = vmatpush2.msra.mxu0 0.0
  %1649 = vmatprep.subr.mxu0 0.0
  %1650 = vmatpush2.msra.mxu0 0.0
  %1651 = vmatprep.mubr.f32.mxu0 0.0
  %1652 = vmatmul.mubr.f32.gmra.mxu0 %v1585
  %v1653 = vpop.f32.mrf.mxu0
  %v1654 = vadd.f32 %v1581, %v1653
  %v1655 = vpop.f32.mrf.mxu0
  %1656 = vdwg.mxu0
  %v1657 = vxor.u32 %v1654, 2147483648
  %v1658 = vmul.f32 %v1657, 1.442695
  %v1659 = vpow.pop %v1658
  %v1660 = vadd.f32 %v1659, 1.0
  %v1661 = vrcp.pop %v1660
  %v1662 = vmul.f32 1.0, %v1661
  %v1663 = vtanh.pop %v1654
  %v1664 = vmul.f32 %v1662, %v1473
  %1666 = vrot.lane.b32.xlu0 %v1663, 64
  %v1667 = vpop.permute.xlu0 %1666
  %v1669 = vmul.f32 %v1662, %v1667
  %1671 = vrot.lane.b32.xlu0 %v1669, 32
  %v1672 = vpop.permute.xlu0 %1671
  %v1674 = vadd.f32 %v1664, %v1672
  %v1675 = vtanh.pop %v1674
  %1677 = vrot.lane.b32.xlu0 %v1675, 64
  %v1678 = vpop.permute.xlu0 %1677
  %v1680 = vmul.f32 %v1662, %v1678
  %1682 = vrot.lane.b32.xlu0 %v1580, 32
  %v1683 = vpop.permute.xlu0 %1682
  %1685 = vst.msk [vmem:[#allocation2] sm:$0xff] %vm59, %v1683
  %1687 = vrot.lane.b32.xlu0 %v1574, 96
  %v1688 = vpop.permute.xlu0 %1687
  %1690 = vst.msk [vmem:[#allocation3] sm:$0xff] %vm59, %v1688
  %1692 = vrot.lane.b32.xlu0 %v1680, 32
  %v1693 = vpop.permute.xlu0 %1692
  %1695 = vst.msk [vmem:[%s49] sm:$0xff] %vm59, %v1693
  %1697 = vrot.lane.b32.xlu0 %v1674, 96
  %v1698 = vpop.permute.xlu0 %1697
  %1700 = vst.msk [vmem:[%s52] sm:$0xff] %vm59, %v1698
  // Predicated region
  $region22: #{variable_lstm_net_forward.3} parent=0 // pred_check
    %p1701 = pneg %p39
  $region23: #{variable_lstm_net_forward.3} parent=0 // pred_check_branch
    %1703 = sbr.rel (%p1701) target = $region25
  $region24: #{variable_lstm_net_forward.3} parent=0 // pred_region
    %1704 = vst.msk [vmem:[%s4] sm:$0xff] %vm59, %v1683
    %s1705 = scalar_lea.vmem %s4, 8
    %1706 = vst.msk [vmem:[%s1705] sm:$0xff] %vm59, %v1693
  $region25: #{variable_lstm_net_forward.3} parent=0 // pred_fallthru
    _
  // Predicated region
  $region26: #{variable_lstm_net_forward.3} parent=0 // pred_check
    _
  $region27: #{variable_lstm_net_forward.3} parent=0 // pred_check_branch
    %1708 = sbr.rel (0) target = $region29
  $region28: #{variable_lstm_net_forward.3} parent=0 // pred_region
    _
  $region29: #{variable_lstm_net_forward.3} parent=0 // pred_fallthru
    _
  // Predicated region
  $region30: #{variable_lstm_net_forward.3} parent=0 // pred_check
    _
  $region31: #{variable_lstm_net_forward.3} parent=0 // pred_check_branch
    %1710 = sbr.rel (0) target = $region33
  $region32: #{variable_lstm_net_forward.3} parent=0 // pred_region
    _
  $region33: #{variable_lstm_net_forward.3} parent=0 // pred_fallthru
    _

// kernel: variable_lstm_net_forward.2
$region0: #{variable_lstm_net_forward.2}
  #allocation0 [shape = 'u32[]', space=smem, size = 0x4, offset = 0x4, fixed_abs, tag = 'smem constant byte address 0x4 - core index']
  #allocation1 [shape = 'u32[144,128]{1,0:T(1,128)}', space=vmem, size = 0x12000, scoped, tag = 'internal scratch']
  #allocation2 [shape = 'f32[2,8,32]{2,1,0:T(8,128)}', space=vmem, size = 0x2000, scoped, tag = 'scratch operand']
  #allocation3 [shape = 'f32[2,8,32]{2,1,0:T(8,128)}', space=vmem, size = 0x2000, scoped, tag = 'scratch operand']
  %s0 = inlined_call_operand.vmem [shape: f32[8,8,128], index: 0, kind: input, shape index: {}]
  %s1 = inlined_call_operand.vmem [shape: f32[8,8,128], index: 1, kind: input, shape index: {}]
  %s2 = inlined_call_operand.vmem [shape: f32[32,128], index: 2, kind: input, shape index: {}]
  %s3 = inlined_call_operand.vmem [shape: f32[32,128], index: 3, kind: input, shape index: {}]
  %s4 = inlined_call_operand.vmem [shape: f32[8,8,32], index: 4, kind: output, shape index: {0}]
  %s5 = inlined_call_operand.vmem [shape: f32[8,8,32], index: 5, kind: output, shape index: {1}]
  %s6 = inlined_call_operand.vmem [shape: f32[2,8,32], index: 6, kind: output, shape index: {2}]
  %7 = xla_tuple %s4, %s5, %s6
  %s8 = sld [smem:[#allocation0]]
  $region50: #{variable_lstm_net_forward.2} parent=0
    _
  %s10 = ssub.s32 1, %s8
  %s11 = scalar_select 0, %s10, %s8
  // Predicated region
  $region2: #{variable_lstm_net_forward.2} parent=0 // pred_check
    _
  $region3: #{variable_lstm_net_forward.2} parent=0 // pred_check_branch
    %13 = sbr.rel (0) target = $region5
  $region4: #{variable_lstm_net_forward.2} parent=0 // pred_region
    _
  $region5: #{variable_lstm_net_forward.2} parent=0 // pred_fallthru
    _
  // Predicated region
  $region6: #{variable_lstm_net_forward.2} parent=0 // pred_check
    _
  $region7: #{variable_lstm_net_forward.2} parent=0 // pred_check_branch
    %15 = sbr.rel (0) target = $region9
  $region8: #{variable_lstm_net_forward.2} parent=0 // pred_region
    %s16 = ssub.s32 0, 0
    %s17 = smul.u32 8, %s16
    %p18 = scmp.lt.s32.totalorder %s17, 7
    %s19 = scalar_select %p18, %s17, 7
    %s20 = smul.addr %s19, 8
    %s21 = scalar_lea.vmem %s1, %s20
    %s22 = ssub.s32 0, 0
    %s23 = smul.u32 8, %s22
  $region9: #{variable_lstm_net_forward.2} parent=0 // pred_fallthru
    _
  // Predicated region
  $region10: #{variable_lstm_net_forward.2} parent=0 // pred_check
    _
  $region11: #{variable_lstm_net_forward.2} parent=0 // pred_check_branch
    %25 = sbr.rel (0) target = $region13
  $region12: #{variable_lstm_net_forward.2} parent=0 // pred_region
    _
  $region13: #{variable_lstm_net_forward.2} parent=0 // pred_fallthru
    _
  // Predicated region
  $region14: #{variable_lstm_net_forward.2} parent=0 // pred_check
    _
  $region15: #{variable_lstm_net_forward.2} parent=0 // pred_check_branch
    %27 = sbr.rel (0) target = $region17
  $region16: #{variable_lstm_net_forward.2} parent=0 // pred_region
    _
  $region17: #{variable_lstm_net_forward.2} parent=0 // pred_fallthru
    _
  %s28 = ssub.s32 0, 0
  %s29 = smul.u32 8, %s28
  %p30 = scmp.lt.s32.totalorder %s29, 7
  %s31 = scalar_select %p30, %s29, 7
  %s32 = smul.addr %s31, 8
  %s33 = scalar_lea.vmem %s1, %s32
  %s34 = ssub.s32 0, 0
  %s35 = smul.u32 8, %s34
  %p36 = scmp.lt.s32.totalorder %s35, 7
  %s37 = scalar_select %p36, %s35, 7
  %s38 = smul.addr %s37, 8
  %s39 = scalar_lea.vmem %s5, %s38
  %s40 = ssub.s32 0, 0
  %s41 = smul.u32 8, %s40
  %p42 = scmp.lt.s32.totalorder %s41, 7
  %s43 = scalar_select %p42, %s41, 7
  %s44 = smul.addr %s43, 8
  %s45 = scalar_lea.vmem %s1, %s44
  %s46 = ssub.s32 0, 0
  %s47 = smul.u32 8, %s46
  %s48 = ssub.s32 0, 0
  %s49 = smul.u32 8, %s48
  %p50 = scmp.lt.s32.totalorder %s49, 7
  %s51 = scalar_select %p50, %s49, 7
  %s52 = smul.addr %s51, 8
  %s53 = scalar_lea.vmem %s5, %s52
  %s54 = ssub.s32 0, 0
  %s55 = smul.u32 8, %s54
  %p56 = scmp.eq.s32.totalorder 0, 0
  // Predicated region
  $region18: #{variable_lstm_net_forward.2} parent=0 // pred_check
    %p57 = pneg %p56
  $region19: #{variable_lstm_net_forward.2} parent=0 // pred_check_branch
    %59 = sbr.rel (%p57) target = $region21
  $region20: #{variable_lstm_net_forward.2} parent=0 // pred_region
    %vm60 = vcmask 261120
    %61 = vst.msk [vmem:[#allocation2] sm:$0xff] %vm60, 0.0
    %62 = vst.msk [vmem:[#allocation2 + $0x8] sm:$0xff] %vm60, 0.0
    %63 = vst.msk [vmem:[#allocation3] sm:$0xff] %vm60, 0.0
    %64 = vst.msk [vmem:[#allocation3 + $0x8] sm:$0xff] %vm60, 0.0
  $region21: #{variable_lstm_net_forward.2} parent=0 // pred_fallthru
    _
  %v65 = vld [vmem:[#allocation2] sm:$0xff]
  %s66 = scalar_lea.vmem [#allocation2], 8
  %v67 = vld [vmem:[%s66] sm:$0xff]
  %v68 = vld [vmem:[#allocation3] sm:$0xff]
  %s69 = scalar_lea.vmem [#allocation3], 8
  %v70 = vld [vmem:[%s69] sm:$0xff]
  %v71 = vld [vmem:[%s2] sm:$0xff]
  %v72 = vld [vmem:[%s2 + $0x8] sm:$0xff]
  %v73 = vld [vmem:[%s2 + $0x10] sm:$0xff]
  %v74 = vld [vmem:[%s2 + $0x18] sm:$0xff]
  %v75 = vld [vmem:[%s0] sm:$0xff]
  %vm76 = vcmask 261120
  %v78 = vsel %vm76, %v65, 0
  %80 = vmatprep.subr.mxu0 0.0
  %81 = vmatpush1.msra.mxu0 0.0
  %82 = vmatprep.subr.mxu0 0.0
  %83 = vmatpush1.msra.mxu0 0.0
  %84 = vmatprep.subr.mxu0 0.0
  %85 = vmatpush1.msra.mxu0 0.0
  %86 = vmatprep.subr.mxu0 0.0
  %87 = vmatpush1.msra.mxu0 0.0
  %88 = vmatprep.subr.mxu0 0.0
  %89 = vmatpush1.msra.mxu0 0.0
  %90 = vmatprep.subr.mxu0 0.0
  %91 = vmatpush1.msra.mxu0 0.0
  %92 = vmatprep.subr.mxu0 0.0
  %93 = vmatpush1.msra.mxu0 0.0
  %94 = vmatprep.subr.mxu0 0.0
  %95 = vmatpush1.msra.mxu0 0.0
  %96 = vmatprep.subr.mxu0 0.0
  %97 = vmatpush1.msra.mxu0 0.0
  %98 = vmatprep.subr.mxu0 0.0
  %99 = vmatpush1.msra.mxu0 0.0
  %100 = vmatprep.subr.mxu0 0.0
  %101 = vmatpush1.msra.mxu0 0.0
  %102 = vmatprep.subr.mxu0 0.0
  %103 = vmatpush1.msra.mxu0 0.0
  %104 = vmatprep.subr.mxu0 0.0
  %105 = vmatpush1.msra.mxu0 %v74
  %106 = vmatprep.subr.mxu0 0.0
  %107 = vmatpush1.msra.mxu0 %v73
  %108 = vmatprep.subr.mxu0 0.0
  %109 = vmatpush1.msra.mxu0 %v72
  %110 = vmatprep.subr.mxu0 0.0
  %111 = vmatpush1.msra.mxu0 %v71
  %112 = vmatprep.subr.mxu0 0.0
  %113 = vmatpush2.msra.mxu0 0.0
  %114 = vmatprep.subr.mxu0 0.0
  %115 = vmatpush2.msra.mxu0 0.0
  %116 = vmatprep.subr.mxu0 0.0
  %117 = vmatpush2.msra.mxu0 0.0
  %118 = vmatprep.subr.mxu0 0.0
  %119 = vmatpush2.msra.mxu0 0.0
  %120 = vmatprep.subr.mxu0 0.0
  %121 = vmatpush2.msra.mxu0 0.0
  %122 = vmatprep.subr.mxu0 0.0
  %123 = vmatpush2.msra.mxu0 0.0
  %124 = vmatprep.subr.mxu0 0.0
  %125 = vmatpush2.msra.mxu0 0.0
  %126 = vmatprep.subr.mxu0 0.0
  %127 = vmatpush2.msra.mxu0 0.0
  %128 = vmatprep.subr.mxu0 0.0
  %129 = vmatpush2.msra.mxu0 0.0
  %130 = vmatprep.subr.mxu0 0.0
  %131 = vmatpush2.msra.mxu0 0.0
  %132 = vmatprep.subr.mxu0 0.0
  %133 = vmatpush2.msra.mxu0 0.0
  %134 = vmatprep.subr.mxu0 0.0
  %135 = vmatpush2.msra.mxu0 0.0
  %136 = vmatprep.subr.mxu0 0.0
  %137 = vmatpush2.msra.mxu0 0.0
  %138 = vmatprep.subr.mxu0 0.0
  %139 = vmatpush2.msra.mxu0 0.0
  %140 = vmatprep.subr.mxu0 0.0
  %141 = vmatpush2.msra.mxu0 0.0
  %142 = vmatprep.subr.mxu0 0.0
  %143 = vmatpush2.msra.mxu0 0.0
  %144 = vmatprep.mubr.f32.mxu0 0.0
  %145 = vmatmul.mubr.f32.gmra.mxu0 %v78
  %v146 = vpop.f32.mrf.mxu0
  %v147 = vadd.f32 %v75, %v146
  %v148 = vpop.f32.mrf.mxu0
  %149 = vdwg.mxu0
  %v150 = vxor.u32 %v147, 2147483648
  %v151 = vmul.f32 %v150, 1.442695
  %v152 = vpow.pop %v151
  %v153 = vadd.f32 %v152, 1.0
  %v154 = vrcp.pop %v153
  %v155 = vmul.f32 1.0, %v154
  %v156 = vtanh.pop %v147
  %158 = vrot.lane.b32.xlu0 %v68, 32
  %v159 = vpop.permute.xlu0 %158
  %v161 = vmul.f32 %v155, %v159
  %163 = vrot.lane.b32.xlu0 %v156, 64
  %v164 = vpop.permute.xlu0 %163
  %v166 = vmul.f32 %v155, %v164
  %168 = vrot.lane.b32.xlu0 %v166, 32
  %v169 = vpop.permute.xlu0 %168
  %v171 = vadd.f32 %v161, %v169
  %v172 = vtanh.pop %v171
  %174 = vrot.lane.b32.xlu0 %v172, 64
  %v175 = vpop.permute.xlu0 %174
  %v177 = vmul.f32 %v155, %v175
  %179 = vrot.lane.b32.xlu0 %v177, 32
  %v180 = vpop.permute.xlu0 %179
  %182 = vst.msk [vmem:[%s4] sm:$0xff] %vm76, %v180
  %v183 = vld [vmem:[%s3] sm:$0xff]
  %v184 = vld [vmem:[%s3 + $0x8] sm:$0xff]
  %v185 = vld [vmem:[%s3 + $0x10] sm:$0xff]
  %v186 = vld [vmem:[%s3 + $0x18] sm:$0xff]
  %s187 = scalar_lea.vmem %s45, 56
  %v188 = vld [vmem:[%s187] sm:$0xff]
  %v190 = vsel %vm76, %v67, 0
  %192 = vmatprep.subr.mxu0 0.0
  %193 = vmatpush1.msra.mxu0 0.0
  %194 = vmatprep.subr.mxu0 0.0
  %195 = vmatpush1.msra.mxu0 0.0
  %196 = vmatprep.subr.mxu0 0.0
  %197 = vmatpush1.msra.mxu0 0.0
  %198 = vmatprep.subr.mxu0 0.0
  %199 = vmatpush1.msra.mxu0 0.0
  %200 = vmatprep.subr.mxu0 0.0
  %201 = vmatpush1.msra.mxu0 0.0
  %202 = vmatprep.subr.mxu0 0.0
  %203 = vmatpush1.msra.mxu0 0.0
  %204 = vmatprep.subr.mxu0 0.0
  %205 = vmatpush1.msra.mxu0 0.0
  %206 = vmatprep.subr.mxu0 0.0
  %207 = vmatpush1.msra.mxu0 0.0
  %208 = vmatprep.subr.mxu0 0.0
  %209 = vmatpush1.msra.mxu0 0.0
  %210 = vmatprep.subr.mxu0 0.0
  %211 = vmatpush1.msra.mxu0 0.0
  %212 = vmatprep.subr.mxu0 0.0
  %213 = vmatpush1.msra.mxu0 0.0
  %214 = vmatprep.subr.mxu0 0.0
  %215 = vmatpush1.msra.mxu0 0.0
  %216 = vmatprep.subr.mxu0 0.0
  %217 = vmatpush1.msra.mxu0 %v186
  %218 = vmatprep.subr.mxu0 0.0
  %219 = vmatpush1.msra.mxu0 %v185
  %220 = vmatprep.subr.mxu0 0.0
  %221 = vmatpush1.msra.mxu0 %v184
  %222 = vmatprep.subr.mxu0 0.0
  %223 = vmatpush1.msra.mxu0 %v183
  %224 = vmatprep.subr.mxu0 0.0
  %225 = vmatpush2.msra.mxu0 0.0
  %226 = vmatprep.subr.mxu0 0.0
  %227 = vmatpush2.msra.mxu0 0.0
  %228 = vmatprep.subr.mxu0 0.0
  %229 = vmatpush2.msra.mxu0 0.0
  %230 = vmatprep.subr.mxu0 0.0
  %231 = vmatpush2.msra.mxu0 0.0
  %232 = vmatprep.subr.mxu0 0.0
  %233 = vmatpush2.msra.mxu0 0.0
  %234 = vmatprep.subr.mxu0 0.0
  %235 = vmatpush2.msra.mxu0 0.0
  %236 = vmatprep.subr.mxu0 0.0
  %237 = vmatpush2.msra.mxu0 0.0
  %238 = vmatprep.subr.mxu0 0.0
  %239 = vmatpush2.msra.mxu0 0.0
  %240 = vmatprep.subr.mxu0 0.0
  %241 = vmatpush2.msra.mxu0 0.0
  %242 = vmatprep.subr.mxu0 0.0
  %243 = vmatpush2.msra.mxu0 0.0
  %244 = vmatprep.subr.mxu0 0.0
  %245 = vmatpush2.msra.mxu0 0.0
  %246 = vmatprep.subr.mxu0 0.0
  %247 = vmatpush2.msra.mxu0 0.0
  %248 = vmatprep.subr.mxu0 0.0
  %249 = vmatpush2.msra.mxu0 0.0
  %250 = vmatprep.subr.mxu0 0.0
  %251 = vmatpush2.msra.mxu0 0.0
  %252 = vmatprep.subr.mxu0 0.0
  %253 = vmatpush2.msra.mxu0 0.0
  %254 = vmatprep.subr.mxu0 0.0
  %255 = vmatpush2.msra.mxu0 0.0
  %256 = vmatprep.mubr.f32.mxu0 0.0
  %257 = vmatmul.mubr.f32.gmra.mxu0 %v190
  %v258 = vpop.f32.mrf.mxu0
  %v259 = vadd.f32 %v188, %v258
  %v260 = vpop.f32.mrf.mxu0
  %261 = vdwg.mxu0
  %v262 = vxor.u32 %v259, 2147483648
  %v263 = vmul.f32 %v262, 1.442695
  %v264 = vpow.pop %v263
  %v265 = vadd.f32 %v264, 1.0
  %v266 = vrcp.pop %v265
  %v267 = vmul.f32 1.0, %v266
  %v268 = vtanh.pop %v259
  %270 = vrot.lane.b32.xlu0 %v70, 32
  %v271 = vpop.permute.xlu0 %270
  %v273 = vmul.f32 %v267, %v271
  %275 = vrot.lane.b32.xlu0 %v268, 64
  %v276 = vpop.permute.xlu0 %275
  %v278 = vmul.f32 %v267, %v276
  %280 = vrot.lane.b32.xlu0 %v278, 32
  %v281 = vpop.permute.xlu0 %280
  %v283 = vadd.f32 %v273, %v281
  %v284 = vtanh.pop %v283
  %286 = vrot.lane.b32.xlu0 %v284, 64
  %v287 = vpop.permute.xlu0 %286
  %v289 = vmul.f32 %v267, %v287
  %291 = vrot.lane.b32.xlu0 %v289, 32
  %v292 = vpop.permute.xlu0 %291
  %s294 = scalar_lea.vmem %s53, 56
  %295 = vst.msk [vmem:[%s294] sm:$0xff] %vm76, %v292
  %v296 = vld [vmem:[%s2] sm:$0xff]
  %v297 = vld [vmem:[%s2 + $0x8] sm:$0xff]
  %v298 = vld [vmem:[%s2 + $0x10] sm:$0xff]
  %v299 = vld [vmem:[%s2 + $0x18] sm:$0xff]
  %s300 = scalar_lea.vmem %s0, 8
  %v301 = vld [vmem:[%s300] sm:$0xff]
  %v302 = vsel %vm76, %v180, 0
  %304 = vmatprep.subr.mxu0 0.0
  %305 = vmatpush1.msra.mxu0 0.0
  %306 = vmatprep.subr.mxu0 0.0
  %307 = vmatpush1.msra.mxu0 0.0
  %308 = vmatprep.subr.mxu0 0.0
  %309 = vmatpush1.msra.mxu0 0.0
  %310 = vmatprep.subr.mxu0 0.0
  %311 = vmatpush1.msra.mxu0 0.0
  %312 = vmatprep.subr.mxu0 0.0
  %313 = vmatpush1.msra.mxu0 0.0
  %314 = vmatprep.subr.mxu0 0.0
  %315 = vmatpush1.msra.mxu0 0.0
  %316 = vmatprep.subr.mxu0 0.0
  %317 = vmatpush1.msra.mxu0 0.0
  %318 = vmatprep.subr.mxu0 0.0
  %319 = vmatpush1.msra.mxu0 0.0
  %320 = vmatprep.subr.mxu0 0.0
  %321 = vmatpush1.msra.mxu0 0.0
  %322 = vmatprep.subr.mxu0 0.0
  %323 = vmatpush1.msra.mxu0 0.0
  %324 = vmatprep.subr.mxu0 0.0
  %325 = vmatpush1.msra.mxu0 0.0
  %326 = vmatprep.subr.mxu0 0.0
  %327 = vmatpush1.msra.mxu0 0.0
  %328 = vmatprep.subr.mxu0 0.0
  %329 = vmatpush1.msra.mxu0 %v299
  %330 = vmatprep.subr.mxu0 0.0
  %331 = vmatpush1.msra.mxu0 %v298
  %332 = vmatprep.subr.mxu0 0.0
  %333 = vmatpush1.msra.mxu0 %v297
  %334 = vmatprep.subr.mxu0 0.0
  %335 = vmatpush1.msra.mxu0 %v296
  %336 = vmatprep.subr.mxu0 0.0
  %337 = vmatpush2.msra.mxu0 0.0
  %338 = vmatprep.subr.mxu0 0.0
  %339 = vmatpush2.msra.mxu0 0.0
  %340 = vmatprep.subr.mxu0 0.0
  %341 = vmatpush2.msra.mxu0 0.0
  %342 = vmatprep.subr.mxu0 0.0
  %343 = vmatpush2.msra.mxu0 0.0
  %344 = vmatprep.subr.mxu0 0.0
  %345 = vmatpush2.msra.mxu0 0.0
  %346 = vmatprep.subr.mxu0 0.0
  %347 = vmatpush2.msra.mxu0 0.0
  %348 = vmatprep.subr.mxu0 0.0
  %349 = vmatpush2.msra.mxu0 0.0
  %350 = vmatprep.subr.mxu0 0.0
  %351 = vmatpush2.msra.mxu0 0.0
  %352 = vmatprep.subr.mxu0 0.0
  %353 = vmatpush2.msra.mxu0 0.0
  %354 = vmatprep.subr.mxu0 0.0
  %355 = vmatpush2.msra.mxu0 0.0
  %356 = vmatprep.subr.mxu0 0.0
  %357 = vmatpush2.msra.mxu0 0.0
  %358 = vmatprep.subr.mxu0 0.0
  %359 = vmatpush2.msra.mxu0 0.0
  %360 = vmatprep.subr.mxu0 0.0
  %361 = vmatpush2.msra.mxu0 0.0
  %362 = vmatprep.subr.mxu0 0.0
  %363 = vmatpush2.msra.mxu0 0.0
  %364 = vmatprep.subr.mxu0 0.0
  %365 = vmatpush2.msra.mxu0 0.0
  %366 = vmatprep.subr.mxu0 0.0
  %367 = vmatpush2.msra.mxu0 0.0
  %368 = vmatprep.mubr.f32.mxu0 0.0
  %369 = vmatmul.mubr.f32.gmra.mxu0 %v302
  %v370 = vpop.f32.mrf.mxu0
  %v371 = vadd.f32 %v301, %v370
  %v372 = vpop.f32.mrf.mxu0
  %373 = vdwg.mxu0
  %v374 = vxor.u32 %v371, 2147483648
  %v375 = vmul.f32 %v374, 1.442695
  %v376 = vpow.pop %v375
  %v377 = vadd.f32 %v376, 1.0
  %v378 = vrcp.pop %v377
  %v379 = vmul.f32 1.0, %v378
  %v380 = vtanh.pop %v371
  %v381 = vmul.f32 %v379, %v171
  %383 = vrot.lane.b32.xlu0 %v380, 64
  %v384 = vpop.permute.xlu0 %383
  %v386 = vmul.f32 %v379, %v384
  %388 = vrot.lane.b32.xlu0 %v386, 32
  %v389 = vpop.permute.xlu0 %388
  %v391 = vadd.f32 %v381, %v389
  %v392 = vtanh.pop %v391
  %394 = vrot.lane.b32.xlu0 %v392, 64
  %v395 = vpop.permute.xlu0 %394
  %v397 = vmul.f32 %v379, %v395
  %399 = vrot.lane.b32.xlu0 %v397, 32
  %v400 = vpop.permute.xlu0 %399
  %s402 = scalar_lea.vmem %s4, 8
  %403 = vst.msk [vmem:[%s402] sm:$0xff] %vm76, %v400
  %v404 = vld [vmem:[%s3] sm:$0xff]
  %v405 = vld [vmem:[%s3 + $0x8] sm:$0xff]
  %v406 = vld [vmem:[%s3 + $0x10] sm:$0xff]
  %v407 = vld [vmem:[%s3 + $0x18] sm:$0xff]
  %s408 = scalar_lea.vmem %s45, 48
  %v409 = vld [vmem:[%s408] sm:$0xff]
  %v410 = vsel %vm76, %v292, 0
  %412 = vmatprep.subr.mxu0 0.0
  %413 = vmatpush1.msra.mxu0 0.0
  %414 = vmatprep.subr.mxu0 0.0
  %415 = vmatpush1.msra.mxu0 0.0
  %416 = vmatprep.subr.mxu0 0.0
  %417 = vmatpush1.msra.mxu0 0.0
  %418 = vmatprep.subr.mxu0 0.0
  %419 = vmatpush1.msra.mxu0 0.0
  %420 = vmatprep.subr.mxu0 0.0
  %421 = vmatpush1.msra.mxu0 0.0
  %422 = vmatprep.subr.mxu0 0.0
  %423 = vmatpush1.msra.mxu0 0.0
  %424 = vmatprep.subr.mxu0 0.0
  %425 = vmatpush1.msra.mxu0 0.0
  %426 = vmatprep.subr.mxu0 0.0
  %427 = vmatpush1.msra.mxu0 0.0
  %428 = vmatprep.subr.mxu0 0.0
  %429 = vmatpush1.msra.mxu0 0.0
  %430 = vmatprep.subr.mxu0 0.0
  %431 = vmatpush1.msra.mxu0 0.0
  %432 = vmatprep.subr.mxu0 0.0
  %433 = vmatpush1.msra.mxu0 0.0
  %434 = vmatprep.subr.mxu0 0.0
  %435 = vmatpush1.msra.mxu0 0.0
  %436 = vmatprep.subr.mxu0 0.0
  %437 = vmatpush1.msra.mxu0 %v407
  %438 = vmatprep.subr.mxu0 0.0
  %439 = vmatpush1.msra.mxu0 %v406
  %440 = vmatprep.subr.mxu0 0.0
  %441 = vmatpush1.msra.mxu0 %v405
  %442 = vmatprep.subr.mxu0 0.0
  %443 = vmatpush1.msra.mxu0 %v404
  %444 = vmatprep.subr.mxu0 0.0
  %445 = vmatpush2.msra.mxu0 0.0
  %446 = vmatprep.subr.mxu0 0.0
  %447 = vmatpush2.msra.mxu0 0.0
  %448 = vmatprep.subr.mxu0 0.0
  %449 = vmatpush2.msra.mxu0 0.0
  %450 = vmatprep.subr.mxu0 0.0
  %451 = vmatpush2.msra.mxu0 0.0
  %452 = vmatprep.subr.mxu0 0.0
  %453 = vmatpush2.msra.mxu0 0.0
  %454 = vmatprep.subr.mxu0 0.0
  %455 = vmatpush2.msra.mxu0 0.0
  %456 = vmatprep.subr.mxu0 0.0
  %457 = vmatpush2.msra.mxu0 0.0
  %458 = vmatprep.subr.mxu0 0.0
  %459 = vmatpush2.msra.mxu0 0.0
  %460 = vmatprep.subr.mxu0 0.0
  %461 = vmatpush2.msra.mxu0 0.0
  %462 = vmatprep.subr.mxu0 0.0
  %463 = vmatpush2.msra.mxu0 0.0
  %464 = vmatprep.subr.mxu0 0.0
  %465 = vmatpush2.msra.mxu0 0.0
  %466 = vmatprep.subr.mxu0 0.0
  %467 = vmatpush2.msra.mxu0 0.0
  %468 = vmatprep.subr.mxu0 0.0
  %469 = vmatpush2.msra.mxu0 0.0
  %470 = vmatprep.subr.mxu0 0.0
  %471 = vmatpush2.msra.mxu0 0.0
  %472 = vmatprep.subr.mxu0 0.0
  %473 = vmatpush2.msra.mxu0 0.0
  %474 = vmatprep.subr.mxu0 0.0
  %475 = vmatpush2.msra.mxu0 0.0
  %476 = vmatprep.mubr.f32.mxu0 0.0
  %477 = vmatmul.mubr.f32.gmra.mxu0 %v410
  %v478 = vpop.f32.mrf.mxu0
  %v479 = vadd.f32 %v409, %v478
  %v480 = vpop.f32.mrf.mxu0
  %481 = vdwg.mxu0
  %v482 = vxor.u32 %v479, 2147483648
  %v483 = vmul.f32 %v482, 1.442695
  %v484 = vpow.pop %v483
  %v485 = vadd.f32 %v484, 1.0
  %v486 = vrcp.pop %v485
  %v487 = vmul.f32 1.0, %v486
  %v488 = vtanh.pop %v479
  %v489 = vmul.f32 %v487, %v283
  %491 = vrot.lane.b32.xlu0 %v488, 64
  %v492 = vpop.permute.xlu0 %491
  %v494 = vmul.f32 %v487, %v492
  %496 = vrot.lane.b32.xlu0 %v494, 32
  %v497 = vpop.permute.xlu0 %496
  %v499 = vadd.f32 %v489, %v497
  %v500 = vtanh.pop %v499
  %502 = vrot.lane.b32.xlu0 %v500, 64
  %v503 = vpop.permute.xlu0 %502
  %v505 = vmul.f32 %v487, %v503
  %507 = vrot.lane.b32.xlu0 %v505, 32
  %v508 = vpop.permute.xlu0 %507
  %s510 = scalar_lea.vmem %s53, 48
  %511 = vst.msk [vmem:[%s510] sm:$0xff] %vm76, %v508
  %v512 = vld [vmem:[%s2] sm:$0xff]
  %v513 = vld [vmem:[%s2 + $0x8] sm:$0xff]
  %v514 = vld [vmem:[%s2 + $0x10] sm:$0xff]
  %v515 = vld [vmem:[%s2 + $0x18] sm:$0xff]
  %s516 = scalar_lea.vmem %s0, 16
  %v517 = vld [vmem:[%s516] sm:$0xff]
  %v518 = vsel %vm76, %v400, 0
  %520 = vmatprep.subr.mxu0 0.0
  %521 = vmatpush1.msra.mxu0 0.0
  %522 = vmatprep.subr.mxu0 0.0
  %523 = vmatpush1.msra.mxu0 0.0
  %524 = vmatprep.subr.mxu0 0.0
  %525 = vmatpush1.msra.mxu0 0.0
  %526 = vmatprep.subr.mxu0 0.0
  %527 = vmatpush1.msra.mxu0 0.0
  %528 = vmatprep.subr.mxu0 0.0
  %529 = vmatpush1.msra.mxu0 0.0
  %530 = vmatprep.subr.mxu0 0.0
  %531 = vmatpush1.msra.mxu0 0.0
  %532 = vmatprep.subr.mxu0 0.0
  %533 = vmatpush1.msra.mxu0 0.0
  %534 = vmatprep.subr.mxu0 0.0
  %535 = vmatpush1.msra.mxu0 0.0
  %536 = vmatprep.subr.mxu0 0.0
  %537 = vmatpush1.msra.mxu0 0.0
  %538 = vmatprep.subr.mxu0 0.0
  %539 = vmatpush1.msra.mxu0 0.0
  %540 = vmatprep.subr.mxu0 0.0
  %541 = vmatpush1.msra.mxu0 0.0
  %542 = vmatprep.subr.mxu0 0.0
  %543 = vmatpush1.msra.mxu0 0.0
  %544 = vmatprep.subr.mxu0 0.0
  %545 = vmatpush1.msra.mxu0 %v515
  %546 = vmatprep.subr.mxu0 0.0
  %547 = vmatpush1.msra.mxu0 %v514
  %548 = vmatprep.subr.mxu0 0.0
  %549 = vmatpush1.msra.mxu0 %v513
  %550 = vmatprep.subr.mxu0 0.0
  %551 = vmatpush1.msra.mxu0 %v512
  %552 = vmatprep.subr.mxu0 0.0
  %553 = vmatpush2.msra.mxu0 0.0
  %554 = vmatprep.subr.mxu0 0.0
  %555 = vmatpush2.msra.mxu0 0.0
  %556 = vmatprep.subr.mxu0 0.0
  %557 = vmatpush2.msra.mxu0 0.0
  %558 = vmatprep.subr.mxu0 0.0
  %559 = vmatpush2.msra.mxu0 0.0
  %560 = vmatprep.subr.mxu0 0.0
  %561 = vmatpush2.msra.mxu0 0.0
  %562 = vmatprep.subr.mxu0 0.0
  %563 = vmatpush2.msra.mxu0 0.0
  %564 = vmatprep.subr.mxu0 0.0
  %565 = vmatpush2.msra.mxu0 0.0
  %566 = vmatprep.subr.mxu0 0.0
  %567 = vmatpush2.msra.mxu0 0.0
  %568 = vmatprep.subr.mxu0 0.0
  %569 = vmatpush2.msra.mxu0 0.0
  %570 = vmatprep.subr.mxu0 0.0
  %571 = vmatpush2.msra.mxu0 0.0
  %572 = vmatprep.subr.mxu0 0.0
  %573 = vmatpush2.msra.mxu0 0.0
  %574 = vmatprep.subr.mxu0 0.0
  %575 = vmatpush2.msra.mxu0 0.0
  %576 = vmatprep.subr.mxu0 0.0
  %577 = vmatpush2.msra.mxu0 0.0
  %578 = vmatprep.subr.mxu0 0.0
  %579 = vmatpush2.msra.mxu0 0.0
  %580 = vmatprep.subr.mxu0 0.0
  %581 = vmatpush2.msra.mxu0 0.0
  %582 = vmatprep.subr.mxu0 0.0
  %583 = vmatpush2.msra.mxu0 0.0
  %584 = vmatprep.mubr.f32.mxu0 0.0
  %585 = vmatmul.mubr.f32.gmra.mxu0 %v518
  %v586 = vpop.f32.mrf.mxu0
  %v587 = vadd.f32 %v517, %v586
  %v588 = vpop.f32.mrf.mxu0
  %589 = vdwg.mxu0
  %v590 = vxor.u32 %v587, 2147483648
  %v591 = vmul.f32 %v590, 1.442695
  %v592 = vpow.pop %v591
  %v593 = vadd.f32 %v592, 1.0
  %v594 = vrcp.pop %v593
  %v595 = vmul.f32 1.0, %v594
  %v596 = vtanh.pop %v587
  %v597 = vmul.f32 %v595, %v391
  %599 = vrot.lane.b32.xlu0 %v596, 64
  %v600 = vpop.permute.xlu0 %599
  %v602 = vmul.f32 %v595, %v600
  %604 = vrot.lane.b32.xlu0 %v602, 32
  %v605 = vpop.permute.xlu0 %604
  %v607 = vadd.f32 %v597, %v605
  %v608 = vtanh.pop %v607
  %610 = vrot.lane.b32.xlu0 %v608, 64
  %v611 = vpop.permute.xlu0 %610
  %v613 = vmul.f32 %v595, %v611
  %615 = vrot.lane.b32.xlu0 %v613, 32
  %v616 = vpop.permute.xlu0 %615
  %s618 = scalar_lea.vmem %s4, 16
  %619 = vst.msk [vmem:[%s618] sm:$0xff] %vm76, %v616
  %v620 = vld [vmem:[%s3] sm:$0xff]
  %v621 = vld [vmem:[%s3 + $0x8] sm:$0xff]
  %v622 = vld [vmem:[%s3 + $0x10] sm:$0xff]
  %v623 = vld [vmem:[%s3 + $0x18] sm:$0xff]
  %s624 = scalar_lea.vmem %s45, 40
  %v625 = vld [vmem:[%s624] sm:$0xff]
  %v626 = vsel %vm76, %v508, 0
  %628 = vmatprep.subr.mxu0 0.0
  %629 = vmatpush1.msra.mxu0 0.0
  %630 = vmatprep.subr.mxu0 0.0
  %631 = vmatpush1.msra.mxu0 0.0
  %632 = vmatprep.subr.mxu0 0.0
  %633 = vmatpush1.msra.mxu0 0.0
  %634 = vmatprep.subr.mxu0 0.0
  %635 = vmatpush1.msra.mxu0 0.0
  %636 = vmatprep.subr.mxu0 0.0
  %637 = vmatpush1.msra.mxu0 0.0
  %638 = vmatprep.subr.mxu0 0.0
  %639 = vmatpush1.msra.mxu0 0.0
  %640 = vmatprep.subr.mxu0 0.0
  %641 = vmatpush1.msra.mxu0 0.0
  %642 = vmatprep.subr.mxu0 0.0
  %643 = vmatpush1.msra.mxu0 0.0
  %644 = vmatprep.subr.mxu0 0.0
  %645 = vmatpush1.msra.mxu0 0.0
  %646 = vmatprep.subr.mxu0 0.0
  %647 = vmatpush1.msra.mxu0 0.0
  %648 = vmatprep.subr.mxu0 0.0
  %649 = vmatpush1.msra.mxu0 0.0
  %650 = vmatprep.subr.mxu0 0.0
  %651 = vmatpush1.msra.mxu0 0.0
  %652 = vmatprep.subr.mxu0 0.0
  %653 = vmatpush1.msra.mxu0 %v623
  %654 = vmatprep.subr.mxu0 0.0
  %655 = vmatpush1.msra.mxu0 %v622
  %656 = vmatprep.subr.mxu0 0.0
  %657 = vmatpush1.msra.mxu0 %v621
  %658 = vmatprep.subr.mxu0 0.0
  %659 = vmatpush1.msra.mxu0 %v620
  %660 = vmatprep.subr.mxu0 0.0
  %661 = vmatpush2.msra.mxu0 0.0
  %662 = vmatprep.subr.mxu0 0.0
  %663 = vmatpush2.msra.mxu0 0.0
  %664 = vmatprep.subr.mxu0 0.0
  %665 = vmatpush2.msra.mxu0 0.0
  %666 = vmatprep.subr.mxu0 0.0
  %667 = vmatpush2.msra.mxu0 0.0
  %668 = vmatprep.subr.mxu0 0.0
  %669 = vmatpush2.msra.mxu0 0.0
  %670 = vmatprep.subr.mxu0 0.0
  %671 = vmatpush2.msra.mxu0 0.0
  %672 = vmatprep.subr.mxu0 0.0
  %673 = vmatpush2.msra.mxu0 0.0
  %674 = vmatprep.subr.mxu0 0.0
  %675 = vmatpush2.msra.mxu0 0.0
  %676 = vmatprep.subr.mxu0 0.0
  %677 = vmatpush2.msra.mxu0 0.0
  %678 = vmatprep.subr.mxu0 0.0
  %679 = vmatpush2.msra.mxu0 0.0
  %680 = vmatprep.subr.mxu0 0.0
  %681 = vmatpush2.msra.mxu0 0.0
  %682 = vmatprep.subr.mxu0 0.0
  %683 = vmatpush2.msra.mxu0 0.0
  %684 = vmatprep.subr.mxu0 0.0
  %685 = vmatpush2.msra.mxu0 0.0
  %686 = vmatprep.subr.mxu0 0.0
  %687 = vmatpush2.msra.mxu0 0.0
  %688 = vmatprep.subr.mxu0 0.0
  %689 = vmatpush2.msra.mxu0 0.0
  %690 = vmatprep.subr.mxu0 0.0
  %691 = vmatpush2.msra.mxu0 0.0
  %692 = vmatprep.mubr.f32.mxu0 0.0
  %693 = vmatmul.mubr.f32.gmra.mxu0 %v626
  %v694 = vpop.f32.mrf.mxu0
  %v695 = vadd.f32 %v625, %v694
  %v696 = vpop.f32.mrf.mxu0
  %697 = vdwg.mxu0
  %v698 = vxor.u32 %v695, 2147483648
  %v699 = vmul.f32 %v698, 1.442695
  %v700 = vpow.pop %v699
  %v701 = vadd.f32 %v700, 1.0
  %v702 = vrcp.pop %v701
  %v703 = vmul.f32 1.0, %v702
  %v704 = vtanh.pop %v695
  %v705 = vmul.f32 %v703, %v499
  %707 = vrot.lane.b32.xlu0 %v704, 64
  %v708 = vpop.permute.xlu0 %707
  %v710 = vmul.f32 %v703, %v708
  %712 = vrot.lane.b32.xlu0 %v710, 32
  %v713 = vpop.permute.xlu0 %712
  %v715 = vadd.f32 %v705, %v713
  %v716 = vtanh.pop %v715
  %718 = vrot.lane.b32.xlu0 %v716, 64
  %v719 = vpop.permute.xlu0 %718
  %v721 = vmul.f32 %v703, %v719
  %723 = vrot.lane.b32.xlu0 %v721, 32
  %v724 = vpop.permute.xlu0 %723
  %s726 = scalar_lea.vmem %s53, 40
  %727 = vst.msk [vmem:[%s726] sm:$0xff] %vm76, %v724
  %v728 = vld [vmem:[%s2] sm:$0xff]
  %v729 = vld [vmem:[%s2 + $0x8] sm:$0xff]
  %v730 = vld [vmem:[%s2 + $0x10] sm:$0xff]
  %v731 = vld [vmem:[%s2 + $0x18] sm:$0xff]
  %s732 = scalar_lea.vmem %s0, 24
  %v733 = vld [vmem:[%s732] sm:$0xff]
  %v734 = vsel %vm76, %v616, 0
  %736 = vmatprep.subr.mxu0 0.0
  %737 = vmatpush1.msra.mxu0 0.0
  %738 = vmatprep.subr.mxu0 0.0
  %739 = vmatpush1.msra.mxu0 0.0
  %740 = vmatprep.subr.mxu0 0.0
  %741 = vmatpush1.msra.mxu0 0.0
  %742 = vmatprep.subr.mxu0 0.0
  %743 = vmatpush1.msra.mxu0 0.0
  %744 = vmatprep.subr.mxu0 0.0
  %745 = vmatpush1.msra.mxu0 0.0
  %746 = vmatprep.subr.mxu0 0.0
  %747 = vmatpush1.msra.mxu0 0.0
  %748 = vmatprep.subr.mxu0 0.0
  %749 = vmatpush1.msra.mxu0 0.0
  %750 = vmatprep.subr.mxu0 0.0
  %751 = vmatpush1.msra.mxu0 0.0
  %752 = vmatprep.subr.mxu0 0.0
  %753 = vmatpush1.msra.mxu0 0.0
  %754 = vmatprep.subr.mxu0 0.0
  %755 = vmatpush1.msra.mxu0 0.0
  %756 = vmatprep.subr.mxu0 0.0
  %757 = vmatpush1.msra.mxu0 0.0
  %758 = vmatprep.subr.mxu0 0.0
  %759 = vmatpush1.msra.mxu0 0.0
  %760 = vmatprep.subr.mxu0 0.0
  %761 = vmatpush1.msra.mxu0 %v731
  %762 = vmatprep.subr.mxu0 0.0
  %763 = vmatpush1.msra.mxu0 %v730
  %764 = vmatprep.subr.mxu0 0.0
  %765 = vmatpush1.msra.mxu0 %v729
  %766 = vmatprep.subr.mxu0 0.0
  %767 = vmatpush1.msra.mxu0 %v728
  %768 = vmatprep.subr.mxu0 0.0
  %769 = vmatpush2.msra.mxu0 0.0
  %770 = vmatprep.subr.mxu0 0.0
  %771 = vmatpush2.msra.mxu0 0.0
  %772 = vmatprep.subr.mxu0 0.0
  %773 = vmatpush2.msra.mxu0 0.0
  %774 = vmatprep.subr.mxu0 0.0
  %775 = vmatpush2.msra.mxu0 0.0
  %776 = vmatprep.subr.mxu0 0.0
  %777 = vmatpush2.msra.mxu0 0.0
  %778 = vmatprep.subr.mxu0 0.0
  %779 = vmatpush2.msra.mxu0 0.0
  %780 = vmatprep.subr.mxu0 0.0
  %781 = vmatpush2.msra.mxu0 0.0
  %782 = vmatprep.subr.mxu0 0.0
  %783 = vmatpush2.msra.mxu0 0.0
  %784 = vmatprep.subr.mxu0 0.0
  %785 = vmatpush2.msra.mxu0 0.0
  %786 = vmatprep.subr.mxu0 0.0
  %787 = vmatpush2.msra.mxu0 0.0
  %788 = vmatprep.subr.mxu0 0.0
  %789 = vmatpush2.msra.mxu0 0.0
  %790 = vmatprep.subr.mxu0 0.0
  %791 = vmatpush2.msra.mxu0 0.0
  %792 = vmatprep.subr.mxu0 0.0
  %793 = vmatpush2.msra.mxu0 0.0
  %794 = vmatprep.subr.mxu0 0.0
  %795 = vmatpush2.msra.mxu0 0.0
  %796 = vmatprep.subr.mxu0 0.0
  %797 = vmatpush2.msra.mxu0 0.0
  %798 = vmatprep.subr.mxu0 0.0
  %799 = vmatpush2.msra.mxu0 0.0
  %800 = vmatprep.mubr.f32.mxu0 0.0
  %801 = vmatmul.mubr.f32.gmra.mxu0 %v734
  %v802 = vpop.f32.mrf.mxu0
  %v803 = vadd.f32 %v733, %v802
  %v804 = vpop.f32.mrf.mxu0
  %805 = vdwg.mxu0
  %v806 = vxor.u32 %v803, 2147483648
  %v807 = vmul.f32 %v806, 1.442695
  %v808 = vpow.pop %v807
  %v809 = vadd.f32 %v808, 1.0
  %v810 = vrcp.pop %v809
  %v811 = vmul.f32 1.0, %v810
  %v812 = vtanh.pop %v803
  %v813 = vmul.f32 %v811, %v607
  %815 = vrot.lane.b32.xlu0 %v812, 64
  %v816 = vpop.permute.xlu0 %815
  %v818 = vmul.f32 %v811, %v816
  %820 = vrot.lane.b32.xlu0 %v818, 32
  %v821 = vpop.permute.xlu0 %820
  %v823 = vadd.f32 %v813, %v821
  %v824 = vtanh.pop %v823
  %826 = vrot.lane.b32.xlu0 %v824, 64
  %v827 = vpop.permute.xlu0 %826
  %v829 = vmul.f32 %v811, %v827
  %831 = vrot.lane.b32.xlu0 %v829, 32
  %v832 = vpop.permute.xlu0 %831
  %s834 = scalar_lea.vmem %s4, 24
  %835 = vst.msk [vmem:[%s834] sm:$0xff] %vm76, %v832
  %v836 = vld [vmem:[%s3] sm:$0xff]
  %v837 = vld [vmem:[%s3 + $0x8] sm:$0xff]
  %v838 = vld [vmem:[%s3 + $0x10] sm:$0xff]
  %v839 = vld [vmem:[%s3 + $0x18] sm:$0xff]
  %s840 = scalar_lea.vmem %s45, 32
  %v841 = vld [vmem:[%s840] sm:$0xff]
  %v842 = vsel %vm76, %v724, 0
  %844 = vmatprep.subr.mxu0 0.0
  %845 = vmatpush1.msra.mxu0 0.0
  %846 = vmatprep.subr.mxu0 0.0
  %847 = vmatpush1.msra.mxu0 0.0
  %848 = vmatprep.subr.mxu0 0.0
  %849 = vmatpush1.msra.mxu0 0.0
  %850 = vmatprep.subr.mxu0 0.0
  %851 = vmatpush1.msra.mxu0 0.0
  %852 = vmatprep.subr.mxu0 0.0
  %853 = vmatpush1.msra.mxu0 0.0
  %854 = vmatprep.subr.mxu0 0.0
  %855 = vmatpush1.msra.mxu0 0.0
  %856 = vmatprep.subr.mxu0 0.0
  %857 = vmatpush1.msra.mxu0 0.0
  %858 = vmatprep.subr.mxu0 0.0
  %859 = vmatpush1.msra.mxu0 0.0
  %860 = vmatprep.subr.mxu0 0.0
  %861 = vmatpush1.msra.mxu0 0.0
  %862 = vmatprep.subr.mxu0 0.0
  %863 = vmatpush1.msra.mxu0 0.0
  %864 = vmatprep.subr.mxu0 0.0
  %865 = vmatpush1.msra.mxu0 0.0
  %866 = vmatprep.subr.mxu0 0.0
  %867 = vmatpush1.msra.mxu0 0.0
  %868 = vmatprep.subr.mxu0 0.0
  %869 = vmatpush1.msra.mxu0 %v839
  %870 = vmatprep.subr.mxu0 0.0
  %871 = vmatpush1.msra.mxu0 %v838
  %872 = vmatprep.subr.mxu0 0.0
  %873 = vmatpush1.msra.mxu0 %v837
  %874 = vmatprep.subr.mxu0 0.0
  %875 = vmatpush1.msra.mxu0 %v836
  %876 = vmatprep.subr.mxu0 0.0
  %877 = vmatpush2.msra.mxu0 0.0
  %878 = vmatprep.subr.mxu0 0.0
  %879 = vmatpush2.msra.mxu0 0.0
  %880 = vmatprep.subr.mxu0 0.0
  %881 = vmatpush2.msra.mxu0 0.0
  %882 = vmatprep.subr.mxu0 0.0
  %883 = vmatpush2.msra.mxu0 0.0
  %884 = vmatprep.subr.mxu0 0.0
  %885 = vmatpush2.msra.mxu0 0.0
  %886 = vmatprep.subr.mxu0 0.0
  %887 = vmatpush2.msra.mxu0 0.0
  %888 = vmatprep.subr.mxu0 0.0
  %889 = vmatpush2.msra.mxu0 0.0
  %890 = vmatprep.subr.mxu0 0.0
  %891 = vmatpush2.msra.mxu0 0.0
  %892 = vmatprep.subr.mxu0 0.0
  %893 = vmatpush2.msra.mxu0 0.0
  %894 = vmatprep.subr.mxu0 0.0
  %895 = vmatpush2.msra.mxu0 0.0
  %896 = vmatprep.subr.mxu0 0.0
  %897 = vmatpush2.msra.mxu0 0.0
  %898 = vmatprep.subr.mxu0 0.0
  %899 = vmatpush2.msra.mxu0 0.0
  %900 = vmatprep.subr.mxu0 0.0
  %901 = vmatpush2.msra.mxu0 0.0
  %902 = vmatprep.subr.mxu0 0.0
  %903 = vmatpush2.msra.mxu0 0.0
  %904 = vmatprep.subr.mxu0 0.0
  %905 = vmatpush2.msra.mxu0 0.0
  %906 = vmatprep.subr.mxu0 0.0
  %907 = vmatpush2.msra.mxu0 0.0
  %908 = vmatprep.mubr.f32.mxu0 0.0
  %909 = vmatmul.mubr.f32.gmra.mxu0 %v842
  %v910 = vpop.f32.mrf.mxu0
  %v911 = vadd.f32 %v841, %v910
  %v912 = vpop.f32.mrf.mxu0
  %913 = vdwg.mxu0
  %v914 = vxor.u32 %v911, 2147483648
  %v915 = vmul.f32 %v914, 1.442695
  %v916 = vpow.pop %v915
  %v917 = vadd.f32 %v916, 1.0
  %v918 = vrcp.pop %v917
  %v919 = vmul.f32 1.0, %v918
  %v920 = vtanh.pop %v911
  %v921 = vmul.f32 %v919, %v715
  %923 = vrot.lane.b32.xlu0 %v920, 64
  %v924 = vpop.permute.xlu0 %923
  %v926 = vmul.f32 %v919, %v924
  %928 = vrot.lane.b32.xlu0 %v926, 32
  %v929 = vpop.permute.xlu0 %928
  %v931 = vadd.f32 %v921, %v929
  %v932 = vtanh.pop %v931
  %934 = vrot.lane.b32.xlu0 %v932, 64
  %v935 = vpop.permute.xlu0 %934
  %v937 = vmul.f32 %v919, %v935
  %939 = vrot.lane.b32.xlu0 %v937, 32
  %v940 = vpop.permute.xlu0 %939
  %s942 = scalar_lea.vmem %s53, 32
  %943 = vst.msk [vmem:[%s942] sm:$0xff] %vm76, %v940
  %v944 = vld [vmem:[%s2] sm:$0xff]
  %v945 = vld [vmem:[%s2 + $0x8] sm:$0xff]
  %v946 = vld [vmem:[%s2 + $0x10] sm:$0xff]
  %v947 = vld [vmem:[%s2 + $0x18] sm:$0xff]
  %s948 = scalar_lea.vmem %s0, 32
  %v949 = vld [vmem:[%s948] sm:$0xff]
  %v950 = vsel %vm76, %v832, 0
  %952 = vmatprep.subr.mxu0 0.0
  %953 = vmatpush1.msra.mxu0 0.0
  %954 = vmatprep.subr.mxu0 0.0
  %955 = vmatpush1.msra.mxu0 0.0
  %956 = vmatprep.subr.mxu0 0.0
  %957 = vmatpush1.msra.mxu0 0.0
  %958 = vmatprep.subr.mxu0 0.0
  %959 = vmatpush1.msra.mxu0 0.0
  %960 = vmatprep.subr.mxu0 0.0
  %961 = vmatpush1.msra.mxu0 0.0
  %962 = vmatprep.subr.mxu0 0.0
  %963 = vmatpush1.msra.mxu0 0.0
  %964 = vmatprep.subr.mxu0 0.0
  %965 = vmatpush1.msra.mxu0 0.0
  %966 = vmatprep.subr.mxu0 0.0
  %967 = vmatpush1.msra.mxu0 0.0
  %968 = vmatprep.subr.mxu0 0.0
  %969 = vmatpush1.msra.mxu0 0.0
  %970 = vmatprep.subr.mxu0 0.0
  %971 = vmatpush1.msra.mxu0 0.0
  %972 = vmatprep.subr.mxu0 0.0
  %973 = vmatpush1.msra.mxu0 0.0
  %974 = vmatprep.subr.mxu0 0.0
  %975 = vmatpush1.msra.mxu0 0.0
  %976 = vmatprep.subr.mxu0 0.0
  %977 = vmatpush1.msra.mxu0 %v947
  %978 = vmatprep.subr.mxu0 0.0
  %979 = vmatpush1.msra.mxu0 %v946
  %980 = vmatprep.subr.mxu0 0.0
  %981 = vmatpush1.msra.mxu0 %v945
  %982 = vmatprep.subr.mxu0 0.0
  %983 = vmatpush1.msra.mxu0 %v944
  %984 = vmatprep.subr.mxu0 0.0
  %985 = vmatpush2.msra.mxu0 0.0
  %986 = vmatprep.subr.mxu0 0.0
  %987 = vmatpush2.msra.mxu0 0.0
  %988 = vmatprep.subr.mxu0 0.0
  %989 = vmatpush2.msra.mxu0 0.0
  %990 = vmatprep.subr.mxu0 0.0
  %991 = vmatpush2.msra.mxu0 0.0
  %992 = vmatprep.subr.mxu0 0.0
  %993 = vmatpush2.msra.mxu0 0.0
  %994 = vmatprep.subr.mxu0 0.0
  %995 = vmatpush2.msra.mxu0 0.0
  %996 = vmatprep.subr.mxu0 0.0
  %997 = vmatpush2.msra.mxu0 0.0
  %998 = vmatprep.subr.mxu0 0.0
  %999 = vmatpush2.msra.mxu0 0.0
  %1000 = vmatprep.subr.mxu0 0.0
  %1001 = vmatpush2.msra.mxu0 0.0
  %1002 = vmatprep.subr.mxu0 0.0
  %1003 = vmatpush2.msra.mxu0 0.0
  %1004 = vmatprep.subr.mxu0 0.0
  %1005 = vmatpush2.msra.mxu0 0.0
  %1006 = vmatprep.subr.mxu0 0.0
  %1007 = vmatpush2.msra.mxu0 0.0
  %1008 = vmatprep.subr.mxu0 0.0
  %1009 = vmatpush2.msra.mxu0 0.0
  %1010 = vmatprep.subr.mxu0 0.0
  %1011 = vmatpush2.msra.mxu0 0.0
  %1012 = vmatprep.subr.mxu0 0.0
  %1013 = vmatpush2.msra.mxu0 0.0
  %1014 = vmatprep.subr.mxu0 0.0
  %1015 = vmatpush2.msra.mxu0 0.0
  %1016 = vmatprep.mubr.f32.mxu0 0.0
  %1017 = vmatmul.mubr.f32.gmra.mxu0 %v950
  %v1018 = vpop.f32.mrf.mxu0
  %v1019 = vadd.f32 %v949, %v1018
  %v1020 = vpop.f32.mrf.mxu0
  %1021 = vdwg.mxu0
  %v1022 = vxor.u32 %v1019, 2147483648
  %v1023 = vmul.f32 %v1022, 1.442695
  %v1024 = vpow.pop %v1023
  %v1025 = vadd.f32 %v1024, 1.0
  %v1026 = vrcp.pop %v1025
  %v1027 = vmul.f32 1.0, %v1026
  %v1028 = vtanh.pop %v1019
  %v1029 = vmul.f32 %v1027, %v823
  %1031 = vrot.lane.b32.xlu0 %v1028, 64
  %v1032 = vpop.permute.xlu0 %1031
  %v1034 = vmul.f32 %v1027, %v1032
  %1036 = vrot.lane.b32.xlu0 %v1034, 32
  %v1037 = vpop.permute.xlu0 %1036
  %v1039 = vadd.f32 %v1029, %v1037
  %v1040 = vtanh.pop %v1039
  %1042 = vrot.lane.b32.xlu0 %v1040, 64
  %v1043 = vpop.permute.xlu0 %1042
  %v1045 = vmul.f32 %v1027, %v1043
  %1047 = vrot.lane.b32.xlu0 %v1045, 32
  %v1048 = vpop.permute.xlu0 %1047
  %s1050 = scalar_lea.vmem %s4, 32
  %1051 = vst.msk [vmem:[%s1050] sm:$0xff] %vm76, %v1048
  %v1052 = vld [vmem:[%s3] sm:$0xff]
  %v1053 = vld [vmem:[%s3 + $0x8] sm:$0xff]
  %v1054 = vld [vmem:[%s3 + $0x10] sm:$0xff]
  %v1055 = vld [vmem:[%s3 + $0x18] sm:$0xff]
  %s1056 = scalar_lea.vmem %s45, 24
  %v1057 = vld [vmem:[%s1056] sm:$0xff]
  %v1058 = vsel %vm76, %v940, 0
  %1060 = vmatprep.subr.mxu0 0.0
  %1061 = vmatpush1.msra.mxu0 0.0
  %1062 = vmatprep.subr.mxu0 0.0
  %1063 = vmatpush1.msra.mxu0 0.0
  %1064 = vmatprep.subr.mxu0 0.0
  %1065 = vmatpush1.msra.mxu0 0.0
  %1066 = vmatprep.subr.mxu0 0.0
  %1067 = vmatpush1.msra.mxu0 0.0
  %1068 = vmatprep.subr.mxu0 0.0
  %1069 = vmatpush1.msra.mxu0 0.0
  %1070 = vmatprep.subr.mxu0 0.0
  %1071 = vmatpush1.msra.mxu0 0.0
  %1072 = vmatprep.subr.mxu0 0.0
  %1073 = vmatpush1.msra.mxu0 0.0
  %1074 = vmatprep.subr.mxu0 0.0
  %1075 = vmatpush1.msra.mxu0 0.0
  %1076 = vmatprep.subr.mxu0 0.0
  %1077 = vmatpush1.msra.mxu0 0.0
  %1078 = vmatprep.subr.mxu0 0.0
  %1079 = vmatpush1.msra.mxu0 0.0
  %1080 = vmatprep.subr.mxu0 0.0
  %1081 = vmatpush1.msra.mxu0 0.0
  %1082 = vmatprep.subr.mxu0 0.0
  %1083 = vmatpush1.msra.mxu0 0.0
  %1084 = vmatprep.subr.mxu0 0.0
  %1085 = vmatpush1.msra.mxu0 %v1055
  %1086 = vmatprep.subr.mxu0 0.0
  %1087 = vmatpush1.msra.mxu0 %v1054
  %1088 = vmatprep.subr.mxu0 0.0
  %1089 = vmatpush1.msra.mxu0 %v1053
  %1090 = vmatprep.subr.mxu0 0.0
  %1091 = vmatpush1.msra.mxu0 %v1052
  %1092 = vmatprep.subr.mxu0 0.0
  %1093 = vmatpush2.msra.mxu0 0.0
  %1094 = vmatprep.subr.mxu0 0.0
  %1095 = vmatpush2.msra.mxu0 0.0
  %1096 = vmatprep.subr.mxu0 0.0
  %1097 = vmatpush2.msra.mxu0 0.0
  %1098 = vmatprep.subr.mxu0 0.0
  %1099 = vmatpush2.msra.mxu0 0.0
  %1100 = vmatprep.subr.mxu0 0.0
  %1101 = vmatpush2.msra.mxu0 0.0
  %1102 = vmatprep.subr.mxu0 0.0
  %1103 = vmatpush2.msra.mxu0 0.0
  %1104 = vmatprep.subr.mxu0 0.0
  %1105 = vmatpush2.msra.mxu0 0.0
  %1106 = vmatprep.subr.mxu0 0.0
  %1107 = vmatpush2.msra.mxu0 0.0
  %1108 = vmatprep.subr.mxu0 0.0
  %1109 = vmatpush2.msra.mxu0 0.0
  %1110 = vmatprep.subr.mxu0 0.0
  %1111 = vmatpush2.msra.mxu0 0.0
  %1112 = vmatprep.subr.mxu0 0.0
  %1113 = vmatpush2.msra.mxu0 0.0
  %1114 = vmatprep.subr.mxu0 0.0
  %1115 = vmatpush2.msra.mxu0 0.0
  %1116 = vmatprep.subr.mxu0 0.0
  %1117 = vmatpush2.msra.mxu0 0.0
  %1118 = vmatprep.subr.mxu0 0.0
  %1119 = vmatpush2.msra.mxu0 0.0
  %1120 = vmatprep.subr.mxu0 0.0
  %1121 = vmatpush2.msra.mxu0 0.0
  %1122 = vmatprep.subr.mxu0 0.0
  %1123 = vmatpush2.msra.mxu0 0.0
  %1124 = vmatprep.mubr.f32.mxu0 0.0
  %1125 = vmatmul.mubr.f32.gmra.mxu0 %v1058
  %v1126 = vpop.f32.mrf.mxu0
  %v1127 = vadd.f32 %v1057, %v1126
  %v1128 = vpop.f32.mrf.mxu0
  %1129 = vdwg.mxu0
  %v1130 = vxor.u32 %v1127, 2147483648
  %v1131 = vmul.f32 %v1130, 1.442695
  %v1132 = vpow.pop %v1131
  %v1133 = vadd.f32 %v1132, 1.0
  %v1134 = vrcp.pop %v1133
  %v1135 = vmul.f32 1.0, %v1134
  %v1136 = vtanh.pop %v1127
  %v1137 = vmul.f32 %v1135, %v931
  %1139 = vrot.lane.b32.xlu0 %v1136, 64
  %v1140 = vpop.permute.xlu0 %1139
  %v1142 = vmul.f32 %v1135, %v1140
  %1144 = vrot.lane.b32.xlu0 %v1142, 32
  %v1145 = vpop.permute.xlu0 %1144
  %v1147 = vadd.f32 %v1137, %v1145
  %v1148 = vtanh.pop %v1147
  %1150 = vrot.lane.b32.xlu0 %v1148, 64
  %v1151 = vpop.permute.xlu0 %1150
  %v1153 = vmul.f32 %v1135, %v1151
  %1155 = vrot.lane.b32.xlu0 %v1153, 32
  %v1156 = vpop.permute.xlu0 %1155
  %s1158 = scalar_lea.vmem %s53, 24
  %1159 = vst.msk [vmem:[%s1158] sm:$0xff] %vm76, %v1156
  %v1160 = vld [vmem:[%s2] sm:$0xff]
  %v1161 = vld [vmem:[%s2 + $0x8] sm:$0xff]
  %v1162 = vld [vmem:[%s2 + $0x10] sm:$0xff]
  %v1163 = vld [vmem:[%s2 + $0x18] sm:$0xff]
  %s1164 = scalar_lea.vmem %s0, 40
  %v1165 = vld [vmem:[%s1164] sm:$0xff]
  %v1166 = vsel %vm76, %v1048, 0
  %1168 = vmatprep.subr.mxu0 0.0
  %1169 = vmatpush1.msra.mxu0 0.0
  %1170 = vmatprep.subr.mxu0 0.0
  %1171 = vmatpush1.msra.mxu0 0.0
  %1172 = vmatprep.subr.mxu0 0.0
  %1173 = vmatpush1.msra.mxu0 0.0
  %1174 = vmatprep.subr.mxu0 0.0
  %1175 = vmatpush1.msra.mxu0 0.0
  %1176 = vmatprep.subr.mxu0 0.0
  %1177 = vmatpush1.msra.mxu0 0.0
  %1178 = vmatprep.subr.mxu0 0.0
  %1179 = vmatpush1.msra.mxu0 0.0
  %1180 = vmatprep.subr.mxu0 0.0
  %1181 = vmatpush1.msra.mxu0 0.0
  %1182 = vmatprep.subr.mxu0 0.0
  %1183 = vmatpush1.msra.mxu0 0.0
  %1184 = vmatprep.subr.mxu0 0.0
  %1185 = vmatpush1.msra.mxu0 0.0
  %1186 = vmatprep.subr.mxu0 0.0
  %1187 = vmatpush1.msra.mxu0 0.0
  %1188 = vmatprep.subr.mxu0 0.0
  %1189 = vmatpush1.msra.mxu0 0.0
  %1190 = vmatprep.subr.mxu0 0.0
  %1191 = vmatpush1.msra.mxu0 0.0
  %1192 = vmatprep.subr.mxu0 0.0
  %1193 = vmatpush1.msra.mxu0 %v1163
  %1194 = vmatprep.subr.mxu0 0.0
  %1195 = vmatpush1.msra.mxu0 %v1162
  %1196 = vmatprep.subr.mxu0 0.0
  %1197 = vmatpush1.msra.mxu0 %v1161
  %1198 = vmatprep.subr.mxu0 0.0
  %1199 = vmatpush1.msra.mxu0 %v1160
  %1200 = vmatprep.subr.mxu0 0.0
  %1201 = vmatpush2.msra.mxu0 0.0
  %1202 = vmatprep.subr.mxu0 0.0
  %1203 = vmatpush2.msra.mxu0 0.0
  %1204 = vmatprep.subr.mxu0 0.0
  %1205 = vmatpush2.msra.mxu0 0.0
  %1206 = vmatprep.subr.mxu0 0.0
  %1207 = vmatpush2.msra.mxu0 0.0
  %1208 = vmatprep.subr.mxu0 0.0
  %1209 = vmatpush2.msra.mxu0 0.0
  %1210 = vmatprep.subr.mxu0 0.0
  %1211 = vmatpush2.msra.mxu0 0.0
  %1212 = vmatprep.subr.mxu0 0.0
  %1213 = vmatpush2.msra.mxu0 0.0
  %1214 = vmatprep.subr.mxu0 0.0
  %1215 = vmatpush2.msra.mxu0 0.0
  %1216 = vmatprep.subr.mxu0 0.0
  %1217 = vmatpush2.msra.mxu0 0.0
  %1218 = vmatprep.subr.mxu0 0.0
  %1219 = vmatpush2.msra.mxu0 0.0
  %1220 = vmatprep.subr.mxu0 0.0
  %1221 = vmatpush2.msra.mxu0 0.0
  %1222 = vmatprep.subr.mxu0 0.0
  %1223 = vmatpush2.msra.mxu0 0.0
  %1224 = vmatprep.subr.mxu0 0.0
  %1225 = vmatpush2.msra.mxu0 0.0
  %1226 = vmatprep.subr.mxu0 0.0
  %1227 = vmatpush2.msra.mxu0 0.0
  %1228 = vmatprep.subr.mxu0 0.0
  %1229 = vmatpush2.msra.mxu0 0.0
  %1230 = vmatprep.subr.mxu0 0.0
  %1231 = vmatpush2.msra.mxu0 0.0
  %1232 = vmatprep.mubr.f32.mxu0 0.0
  %1233 = vmatmul.mubr.f32.gmra.mxu0 %v1166
  %v1234 = vpop.f32.mrf.mxu0
  %v1235 = vadd.f32 %v1165, %v1234
  %v1236 = vpop.f32.mrf.mxu0
  %1237 = vdwg.mxu0
  %v1238 = vxor.u32 %v1235, 2147483648
  %v1239 = vmul.f32 %v1238, 1.442695
  %v1240 = vpow.pop %v1239
  %v1241 = vadd.f32 %v1240, 1.0
  %v1242 = vrcp.pop %v1241
  %v1243 = vmul.f32 1.0, %v1242
  %v1244 = vtanh.pop %v1235
  %v1245 = vmul.f32 %v1243, %v1039
  %1247 = vrot.lane.b32.xlu0 %v1244, 64
  %v1248 = vpop.permute.xlu0 %1247
  %v1250 = vmul.f32 %v1243, %v1248
  %1252 = vrot.lane.b32.xlu0 %v1250, 32
  %v1253 = vpop.permute.xlu0 %1252
  %v1255 = vadd.f32 %v1245, %v1253
  %v1256 = vtanh.pop %v1255
  %1258 = vrot.lane.b32.xlu0 %v1256, 64
  %v1259 = vpop.permute.xlu0 %1258
  %v1261 = vmul.f32 %v1243, %v1259
  %1263 = vrot.lane.b32.xlu0 %v1261, 32
  %v1264 = vpop.permute.xlu0 %1263
  %s1266 = scalar_lea.vmem %s4, 40
  %1267 = vst.msk [vmem:[%s1266] sm:$0xff] %vm76, %v1264
  %v1268 = vld [vmem:[%s3] sm:$0xff]
  %v1269 = vld [vmem:[%s3 + $0x8] sm:$0xff]
  %v1270 = vld [vmem:[%s3 + $0x10] sm:$0xff]
  %v1271 = vld [vmem:[%s3 + $0x18] sm:$0xff]
  %s1272 = scalar_lea.vmem %s45, 16
  %v1273 = vld [vmem:[%s1272] sm:$0xff]
  %v1274 = vsel %vm76, %v1156, 0
  %1276 = vmatprep.subr.mxu0 0.0
  %1277 = vmatpush1.msra.mxu0 0.0
  %1278 = vmatprep.subr.mxu0 0.0
  %1279 = vmatpush1.msra.mxu0 0.0
  %1280 = vmatprep.subr.mxu0 0.0
  %1281 = vmatpush1.msra.mxu0 0.0
  %1282 = vmatprep.subr.mxu0 0.0
  %1283 = vmatpush1.msra.mxu0 0.0
  %1284 = vmatprep.subr.mxu0 0.0
  %1285 = vmatpush1.msra.mxu0 0.0
  %1286 = vmatprep.subr.mxu0 0.0
  %1287 = vmatpush1.msra.mxu0 0.0
  %1288 = vmatprep.subr.mxu0 0.0
  %1289 = vmatpush1.msra.mxu0 0.0
  %1290 = vmatprep.subr.mxu0 0.0
  %1291 = vmatpush1.msra.mxu0 0.0
  %1292 = vmatprep.subr.mxu0 0.0
  %1293 = vmatpush1.msra.mxu0 0.0
  %1294 = vmatprep.subr.mxu0 0.0
  %1295 = vmatpush1.msra.mxu0 0.0
  %1296 = vmatprep.subr.mxu0 0.0
  %1297 = vmatpush1.msra.mxu0 0.0
  %1298 = vmatprep.subr.mxu0 0.0
  %1299 = vmatpush1.msra.mxu0 0.0
  %1300 = vmatprep.subr.mxu0 0.0
  %1301 = vmatpush1.msra.mxu0 %v1271
  %1302 = vmatprep.subr.mxu0 0.0
  %1303 = vmatpush1.msra.mxu0 %v1270
  %1304 = vmatprep.subr.mxu0 0.0
  %1305 = vmatpush1.msra.mxu0 %v1269
  %1306 = vmatprep.subr.mxu0 0.0
  %1307 = vmatpush1.msra.mxu0 %v1268
  %1308 = vmatprep.subr.mxu0 0.0
  %1309 = vmatpush2.msra.mxu0 0.0
  %1310 = vmatprep.subr.mxu0 0.0
  %1311 = vmatpush2.msra.mxu0 0.0
  %1312 = vmatprep.subr.mxu0 0.0
  %1313 = vmatpush2.msra.mxu0 0.0
  %1314 = vmatprep.subr.mxu0 0.0
  %1315 = vmatpush2.msra.mxu0 0.0
  %1316 = vmatprep.subr.mxu0 0.0
  %1317 = vmatpush2.msra.mxu0 0.0
  %1318 = vmatprep.subr.mxu0 0.0
  %1319 = vmatpush2.msra.mxu0 0.0
  %1320 = vmatprep.subr.mxu0 0.0
  %1321 = vmatpush2.msra.mxu0 0.0
  %1322 = vmatprep.subr.mxu0 0.0
  %1323 = vmatpush2.msra.mxu0 0.0
  %1324 = vmatprep.subr.mxu0 0.0
  %1325 = vmatpush2.msra.mxu0 0.0
  %1326 = vmatprep.subr.mxu0 0.0
  %1327 = vmatpush2.msra.mxu0 0.0
  %1328 = vmatprep.subr.mxu0 0.0
  %1329 = vmatpush2.msra.mxu0 0.0
  %1330 = vmatprep.subr.mxu0 0.0
  %1331 = vmatpush2.msra.mxu0 0.0
  %1332 = vmatprep.subr.mxu0 0.0
  %1333 = vmatpush2.msra.mxu0 0.0
  %1334 = vmatprep.subr.mxu0 0.0
  %1335 = vmatpush2.msra.mxu0 0.0
  %1336 = vmatprep.subr.mxu0 0.0
  %1337 = vmatpush2.msra.mxu0 0.0
  %1338 = vmatprep.subr.mxu0 0.0
  %1339 = vmatpush2.msra.mxu0 0.0
  %1340 = vmatprep.mubr.f32.mxu0 0.0
  %1341 = vmatmul.mubr.f32.gmra.mxu0 %v1274
  %v1342 = vpop.f32.mrf.mxu0
  %v1343 = vadd.f32 %v1273, %v1342
  %v1344 = vpop.f32.mrf.mxu0
  %1345 = vdwg.mxu0
  %v1346 = vxor.u32 %v1343, 2147483648
  %v1347 = vmul.f32 %v1346, 1.442695
  %v1348 = vpow.pop %v1347
  %v1349 = vadd.f32 %v1348, 1.0
  %v1350 = vrcp.pop %v1349
  %v1351 = vmul.f32 1.0, %v1350
  %v1352 = vtanh.pop %v1343
  %v1353 = vmul.f32 %v1351, %v1147
  %1355 = vrot.lane.b32.xlu0 %v1352, 64
  %v1356 = vpop.permute.xlu0 %1355
  %v1358 = vmul.f32 %v1351, %v1356
  %1360 = vrot.lane.b32.xlu0 %v1358, 32
  %v1361 = vpop.permute.xlu0 %1360
  %v1363 = vadd.f32 %v1353, %v1361
  %v1364 = vtanh.pop %v1363
  %1366 = vrot.lane.b32.xlu0 %v1364, 64
  %v1367 = vpop.permute.xlu0 %1366
  %v1369 = vmul.f32 %v1351, %v1367
  %1371 = vrot.lane.b32.xlu0 %v1369, 32
  %v1372 = vpop.permute.xlu0 %1371
  %s1374 = scalar_lea.vmem %s53, 16
  %1375 = vst.msk [vmem:[%s1374] sm:$0xff] %vm76, %v1372
  %v1376 = vld [vmem:[%s2] sm:$0xff]
  %v1377 = vld [vmem:[%s2 + $0x8] sm:$0xff]
  %v1378 = vld [vmem:[%s2 + $0x10] sm:$0xff]
  %v1379 = vld [vmem:[%s2 + $0x18] sm:$0xff]
  %s1380 = scalar_lea.vmem %s0, 48
  %v1381 = vld [vmem:[%s1380] sm:$0xff]
  %v1382 = vsel %vm76, %v1264, 0
  %1384 = vmatprep.subr.mxu0 0.0
  %1385 = vmatpush1.msra.mxu0 0.0
  %1386 = vmatprep.subr.mxu0 0.0
  %1387 = vmatpush1.msra.mxu0 0.0
  %1388 = vmatprep.subr.mxu0 0.0
  %1389 = vmatpush1.msra.mxu0 0.0
  %1390 = vmatprep.subr.mxu0 0.0
  %1391 = vmatpush1.msra.mxu0 0.0
  %1392 = vmatprep.subr.mxu0 0.0
  %1393 = vmatpush1.msra.mxu0 0.0
  %1394 = vmatprep.subr.mxu0 0.0
  %1395 = vmatpush1.msra.mxu0 0.0
  %1396 = vmatprep.subr.mxu0 0.0
  %1397 = vmatpush1.msra.mxu0 0.0
  %1398 = vmatprep.subr.mxu0 0.0
  %1399 = vmatpush1.msra.mxu0 0.0
  %1400 = vmatprep.subr.mxu0 0.0
  %1401 = vmatpush1.msra.mxu0 0.0
  %1402 = vmatprep.subr.mxu0 0.0
  %1403 = vmatpush1.msra.mxu0 0.0
  %1404 = vmatprep.subr.mxu0 0.0
  %1405 = vmatpush1.msra.mxu0 0.0
  %1406 = vmatprep.subr.mxu0 0.0
  %1407 = vmatpush1.msra.mxu0 0.0
  %1408 = vmatprep.subr.mxu0 0.0
  %1409 = vmatpush1.msra.mxu0 %v1379
  %1410 = vmatprep.subr.mxu0 0.0
  %1411 = vmatpush1.msra.mxu0 %v1378
  %1412 = vmatprep.subr.mxu0 0.0
  %1413 = vmatpush1.msra.mxu0 %v1377
  %1414 = vmatprep.subr.mxu0 0.0
  %1415 = vmatpush1.msra.mxu0 %v1376
  %1416 = vmatprep.subr.mxu0 0.0
  %1417 = vmatpush2.msra.mxu0 0.0
  %1418 = vmatprep.subr.mxu0 0.0
  %1419 = vmatpush2.msra.mxu0 0.0
  %1420 = vmatprep.subr.mxu0 0.0
  %1421 = vmatpush2.msra.mxu0 0.0
  %1422 = vmatprep.subr.mxu0 0.0
  %1423 = vmatpush2.msra.mxu0 0.0
  %1424 = vmatprep.subr.mxu0 0.0
  %1425 = vmatpush2.msra.mxu0 0.0
  %1426 = vmatprep.subr.mxu0 0.0
  %1427 = vmatpush2.msra.mxu0 0.0
  %1428 = vmatprep.subr.mxu0 0.0
  %1429 = vmatpush2.msra.mxu0 0.0
  %1430 = vmatprep.subr.mxu0 0.0
  %1431 = vmatpush2.msra.mxu0 0.0
  %1432 = vmatprep.subr.mxu0 0.0
  %1433 = vmatpush2.msra.mxu0 0.0
  %1434 = vmatprep.subr.mxu0 0.0
  %1435 = vmatpush2.msra.mxu0 0.0
  %1436 = vmatprep.subr.mxu0 0.0
  %1437 = vmatpush2.msra.mxu0 0.0
  %1438 = vmatprep.subr.mxu0 0.0
  %1439 = vmatpush2.msra.mxu0 0.0
  %1440 = vmatprep.subr.mxu0 0.0
  %1441 = vmatpush2.msra.mxu0 0.0
  %1442 = vmatprep.subr.mxu0 0.0
  %1443 = vmatpush2.msra.mxu0 0.0
  %1444 = vmatprep.subr.mxu0 0.0
  %1445 = vmatpush2.msra.mxu0 0.0
  %1446 = vmatprep.subr.mxu0 0.0
  %1447 = vmatpush2.msra.mxu0 0.0
  %1448 = vmatprep.mubr.f32.mxu0 0.0
  %1449 = vmatmul.mubr.f32.gmra.mxu0 %v1382
  %v1450 = vpop.f32.mrf.mxu0
  %v1451 = vadd.f32 %v1381, %v1450
  %v1452 = vpop.f32.mrf.mxu0
  %1453 = vdwg.mxu0
  %v1454 = vxor.u32 %v1451, 2147483648
  %v1455 = vmul.f32 %v1454, 1.442695
  %v1456 = vpow.pop %v1455
  %v1457 = vadd.f32 %v1456, 1.0
  %v1458 = vrcp.pop %v1457
  %v1459 = vmul.f32 1.0, %v1458
  %v1460 = vtanh.pop %v1451
  %v1461 = vmul.f32 %v1459, %v1255
  %1463 = vrot.lane.b32.xlu0 %v1460, 64
  %v1464 = vpop.permute.xlu0 %1463
  %v1466 = vmul.f32 %v1459, %v1464
  %1468 = vrot.lane.b32.xlu0 %v1466, 32
  %v1469 = vpop.permute.xlu0 %1468
  %v1471 = vadd.f32 %v1461, %v1469
  %v1472 = vtanh.pop %v1471
  %1474 = vrot.lane.b32.xlu0 %v1472, 64
  %v1475 = vpop.permute.xlu0 %1474
  %v1477 = vmul.f32 %v1459, %v1475
  %1479 = vrot.lane.b32.xlu0 %v1477, 32
  %v1480 = vpop.permute.xlu0 %1479
  %s1482 = scalar_lea.vmem %s4, 48
  %1483 = vst.msk [vmem:[%s1482] sm:$0xff] %vm76, %v1480
  %v1484 = vld [vmem:[%s3] sm:$0xff]
  %v1485 = vld [vmem:[%s3 + $0x8] sm:$0xff]
  %v1486 = vld [vmem:[%s3 + $0x10] sm:$0xff]
  %v1487 = vld [vmem:[%s3 + $0x18] sm:$0xff]
  %s1488 = scalar_lea.vmem %s45, 8
  %v1489 = vld [vmem:[%s1488] sm:$0xff]
  %v1490 = vsel %vm76, %v1372, 0
  %1492 = vmatprep.subr.mxu0 0.0
  %1493 = vmatpush1.msra.mxu0 0.0
  %1494 = vmatprep.subr.mxu0 0.0
  %1495 = vmatpush1.msra.mxu0 0.0
  %1496 = vmatprep.subr.mxu0 0.0
  %1497 = vmatpush1.msra.mxu0 0.0
  %1498 = vmatprep.subr.mxu0 0.0
  %1499 = vmatpush1.msra.mxu0 0.0
  %1500 = vmatprep.subr.mxu0 0.0
  %1501 = vmatpush1.msra.mxu0 0.0
  %1502 = vmatprep.subr.mxu0 0.0
  %1503 = vmatpush1.msra.mxu0 0.0
  %1504 = vmatprep.subr.mxu0 0.0
  %1505 = vmatpush1.msra.mxu0 0.0
  %1506 = vmatprep.subr.mxu0 0.0
  %1507 = vmatpush1.msra.mxu0 0.0
  %1508 = vmatprep.subr.mxu0 0.0
  %1509 = vmatpush1.msra.mxu0 0.0
  %1510 = vmatprep.subr.mxu0 0.0
  %1511 = vmatpush1.msra.mxu0 0.0
  %1512 = vmatprep.subr.mxu0 0.0
  %1513 = vmatpush1.msra.mxu0 0.0
  %1514 = vmatprep.subr.mxu0 0.0
  %1515 = vmatpush1.msra.mxu0 0.0
  %1516 = vmatprep.subr.mxu0 0.0
  %1517 = vmatpush1.msra.mxu0 %v1487
  %1518 = vmatprep.subr.mxu0 0.0
  %1519 = vmatpush1.msra.mxu0 %v1486
  %1520 = vmatprep.subr.mxu0 0.0
  %1521 = vmatpush1.msra.mxu0 %v1485
  %1522 = vmatprep.subr.mxu0 0.0
  %1523 = vmatpush1.msra.mxu0 %v1484
  %1524 = vmatprep.subr.mxu0 0.0
  %1525 = vmatpush2.msra.mxu0 0.0
  %1526 = vmatprep.subr.mxu0 0.0
  %1527 = vmatpush2.msra.mxu0 0.0
  %1528 = vmatprep.subr.mxu0 0.0
  %1529 = vmatpush2.msra.mxu0 0.0
  %1530 = vmatprep.subr.mxu0 0.0
  %1531 = vmatpush2.msra.mxu0 0.0
  %1532 = vmatprep.subr.mxu0 0.0
  %1533 = vmatpush2.msra.mxu0 0.0
  %1534 = vmatprep.subr.mxu0 0.0
  %1535 = vmatpush2.msra.mxu0 0.0
  %1536 = vmatprep.subr.mxu0 0.0
  %1537 = vmatpush2.msra.mxu0 0.0
  %1538 = vmatprep.subr.mxu0 0.0
  %1539 = vmatpush2.msra.mxu0 0.0
  %1540 = vmatprep.subr.mxu0 0.0
  %1541 = vmatpush2.msra.mxu0 0.0
  %1542 = vmatprep.subr.mxu0 0.0
  %1543 = vmatpush2.msra.mxu0 0.0
  %1544 = vmatprep.subr.mxu0 0.0
  %1545 = vmatpush2.msra.mxu0 0.0
  %1546 = vmatprep.subr.mxu0 0.0
  %1547 = vmatpush2.msra.mxu0 0.0
  %1548 = vmatprep.subr.mxu0 0.0
  %1549 = vmatpush2.msra.mxu0 0.0
  %1550 = vmatprep.subr.mxu0 0.0
  %1551 = vmatpush2.msra.mxu0 0.0
  %1552 = vmatprep.subr.mxu0 0.0
  %1553 = vmatpush2.msra.mxu0 0.0
  %1554 = vmatprep.subr.mxu0 0.0
  %1555 = vmatpush2.msra.mxu0 0.0
  %1556 = vmatprep.mubr.f32.mxu0 0.0
  %1557 = vmatmul.mubr.f32.gmra.mxu0 %v1490
  %v1558 = vpop.f32.mrf.mxu0
  %v1559 = vadd.f32 %v1489, %v1558
  %v1560 = vpop.f32.mrf.mxu0
  %1561 = vdwg.mxu0
  %v1562 = vxor.u32 %v1559, 2147483648
  %v1563 = vmul.f32 %v1562, 1.442695
  %v1564 = vpow.pop %v1563
  %v1565 = vadd.f32 %v1564, 1.0
  %v1566 = vrcp.pop %v1565
  %v1567 = vmul.f32 1.0, %v1566
  %v1568 = vtanh.pop %v1559
  %v1569 = vmul.f32 %v1567, %v1363
  %1571 = vrot.lane.b32.xlu0 %v1568, 64
  %v1572 = vpop.permute.xlu0 %1571
  %v1574 = vmul.f32 %v1567, %v1572
  %1576 = vrot.lane.b32.xlu0 %v1574, 32
  %v1577 = vpop.permute.xlu0 %1576
  %v1579 = vadd.f32 %v1569, %v1577
  %v1580 = vtanh.pop %v1579
  %1582 = vrot.lane.b32.xlu0 %v1580, 64
  %v1583 = vpop.permute.xlu0 %1582
  %v1585 = vmul.f32 %v1567, %v1583
  %1587 = vrot.lane.b32.xlu0 %v1585, 32
  %v1588 = vpop.permute.xlu0 %1587
  %s1590 = scalar_lea.vmem %s53, 8
  %1591 = vst.msk [vmem:[%s1590] sm:$0xff] %vm76, %v1588
  %v1592 = vld [vmem:[%s2] sm:$0xff]
  %v1593 = vld [vmem:[%s2 + $0x8] sm:$0xff]
  %v1594 = vld [vmem:[%s2 + $0x10] sm:$0xff]
  %v1595 = vld [vmem:[%s2 + $0x18] sm:$0xff]
  %s1596 = scalar_lea.vmem %s0, 56
  %v1597 = vld [vmem:[%s1596] sm:$0xff]
  %v1598 = vsel %vm76, %v1480, 0
  %1600 = vmatprep.subr.mxu0 0.0
  %1601 = vmatpush1.msra.mxu0 0.0
  %1602 = vmatprep.subr.mxu0 0.0
  %1603 = vmatpush1.msra.mxu0 0.0
  %1604 = vmatprep.subr.mxu0 0.0
  %1605 = vmatpush1.msra.mxu0 0.0
  %1606 = vmatprep.subr.mxu0 0.0
  %1607 = vmatpush1.msra.mxu0 0.0
  %1608 = vmatprep.subr.mxu0 0.0
  %1609 = vmatpush1.msra.mxu0 0.0
  %1610 = vmatprep.subr.mxu0 0.0
  %1611 = vmatpush1.msra.mxu0 0.0
  %1612 = vmatprep.subr.mxu0 0.0
  %1613 = vmatpush1.msra.mxu0 0.0
  %1614 = vmatprep.subr.mxu0 0.0
  %1615 = vmatpush1.msra.mxu0 0.0
  %1616 = vmatprep.subr.mxu0 0.0
  %1617 = vmatpush1.msra.mxu0 0.0
  %1618 = vmatprep.subr.mxu0 0.0
  %1619 = vmatpush1.msra.mxu0 0.0
  %1620 = vmatprep.subr.mxu0 0.0
  %1621 = vmatpush1.msra.mxu0 0.0
  %1622 = vmatprep.subr.mxu0 0.0
  %1623 = vmatpush1.msra.mxu0 0.0
  %1624 = vmatprep.subr.mxu0 0.0
  %1625 = vmatpush1.msra.mxu0 %v1595
  %1626 = vmatprep.subr.mxu0 0.0
  %1627 = vmatpush1.msra.mxu0 %v1594
  %1628 = vmatprep.subr.mxu0 0.0
  %1629 = vmatpush1.msra.mxu0 %v1593
  %1630 = vmatprep.subr.mxu0 0.0
  %1631 = vmatpush1.msra.mxu0 %v1592
  %1632 = vmatprep.subr.mxu0 0.0
  %1633 = vmatpush2.msra.mxu0 0.0
  %1634 = vmatprep.subr.mxu0 0.0
  %1635 = vmatpush2.msra.mxu0 0.0
  %1636 = vmatprep.subr.mxu0 0.0
  %1637 = vmatpush2.msra.mxu0 0.0
  %1638 = vmatprep.subr.mxu0 0.0
  %1639 = vmatpush2.msra.mxu0 0.0
  %1640 = vmatprep.subr.mxu0 0.0
  %1641 = vmatpush2.msra.mxu0 0.0
  %1642 = vmatprep.subr.mxu0 0.0
  %1643 = vmatpush2.msra.mxu0 0.0
  %1644 = vmatprep.subr.mxu0 0.0
  %1645 = vmatpush2.msra.mxu0 0.0
  %1646 = vmatprep.subr.mxu0 0.0
  %1647 = vmatpush2.msra.mxu0 0.0
  %1648 = vmatprep.subr.mxu0 0.0
  %1649 = vmatpush2.msra.mxu0 0.0
  %1650 = vmatprep.subr.mxu0 0.0
  %1651 = vmatpush2.msra.mxu0 0.0
  %1652 = vmatprep.subr.mxu0 0.0
  %1653 = vmatpush2.msra.mxu0 0.0
  %1654 = vmatprep.subr.mxu0 0.0
  %1655 = vmatpush2.msra.mxu0 0.0
  %1656 = vmatprep.subr.mxu0 0.0
  %1657 = vmatpush2.msra.mxu0 0.0
  %1658 = vmatprep.subr.mxu0 0.0
  %1659 = vmatpush2.msra.mxu0 0.0
  %1660 = vmatprep.subr.mxu0 0.0
  %1661 = vmatpush2.msra.mxu0 0.0
  %1662 = vmatprep.subr.mxu0 0.0
  %1663 = vmatpush2.msra.mxu0 0.0
  %1664 = vmatprep.mubr.f32.mxu0 0.0
  %1665 = vmatmul.mubr.f32.gmra.mxu0 %v1598
  %v1666 = vpop.f32.mrf.mxu0
  %v1667 = vadd.f32 %v1597, %v1666
  %v1668 = vpop.f32.mrf.mxu0
  %1669 = vdwg.mxu0
  %v1670 = vxor.u32 %v1667, 2147483648
  %v1671 = vmul.f32 %v1670, 1.442695
  %v1672 = vpow.pop %v1671
  %v1673 = vadd.f32 %v1672, 1.0
  %v1674 = vrcp.pop %v1673
  %v1675 = vmul.f32 1.0, %v1674
  %v1676 = vtanh.pop %v1667
  %v1677 = vmul.f32 %v1675, %v1471
  %1679 = vrot.lane.b32.xlu0 %v1676, 64
  %v1680 = vpop.permute.xlu0 %1679
  %v1682 = vmul.f32 %v1675, %v1680
  %1684 = vrot.lane.b32.xlu0 %v1682, 32
  %v1685 = vpop.permute.xlu0 %1684
  %v1687 = vadd.f32 %v1677, %v1685
  %v1688 = vtanh.pop %v1687
  %1690 = vrot.lane.b32.xlu0 %v1688, 64
  %v1691 = vpop.permute.xlu0 %1690
  %v1693 = vmul.f32 %v1675, %v1691
  %1695 = vrot.lane.b32.xlu0 %v1693, 32
  %v1696 = vpop.permute.xlu0 %1695
  %s1698 = scalar_lea.vmem %s4, 56
  %1699 = vst.msk [vmem:[%s1698] sm:$0xff] %vm76, %v1696
  %v1700 = vld [vmem:[%s3] sm:$0xff]
  %v1701 = vld [vmem:[%s3 + $0x8] sm:$0xff]
  %v1702 = vld [vmem:[%s3 + $0x10] sm:$0xff]
  %v1703 = vld [vmem:[%s3 + $0x18] sm:$0xff]
  %v1704 = vld [vmem:[%s45] sm:$0xff]
  %v1705 = vsel %vm76, %v1588, 0
  %1707 = vmatprep.subr.mxu0 0.0
  %1708 = vmatpush1.msra.mxu0 0.0
  %1709 = vmatprep.subr.mxu0 0.0
  %1710 = vmatpush1.msra.mxu0 0.0
  %1711 = vmatprep.subr.mxu0 0.0
  %1712 = vmatpush1.msra.mxu0 0.0
  %1713 = vmatprep.subr.mxu0 0.0
  %1714 = vmatpush1.msra.mxu0 0.0
  %1715 = vmatprep.subr.mxu0 0.0
  %1716 = vmatpush1.msra.mxu0 0.0
  %1717 = vmatprep.subr.mxu0 0.0
  %1718 = vmatpush1.msra.mxu0 0.0
  %1719 = vmatprep.subr.mxu0 0.0
  %1720 = vmatpush1.msra.mxu0 0.0
  %1721 = vmatprep.subr.mxu0 0.0
  %1722 = vmatpush1.msra.mxu0 0.0
  %1723 = vmatprep.subr.mxu0 0.0
  %1724 = vmatpush1.msra.mxu0 0.0
  %1725 = vmatprep.subr.mxu0 0.0
  %1726 = vmatpush1.msra.mxu0 0.0
  %1727 = vmatprep.subr.mxu0 0.0
  %1728 = vmatpush1.msra.mxu0 0.0
  %1729 = vmatprep.subr.mxu0 0.0
  %1730 = vmatpush1.msra.mxu0 0.0
  %1731 = vmatprep.subr.mxu0 0.0
  %1732 = vmatpush1.msra.mxu0 %v1703
  %1733 = vmatprep.subr.mxu0 0.0
  %1734 = vmatpush1.msra.mxu0 %v1702
  %1735 = vmatprep.subr.mxu0 0.0
  %1736 = vmatpush1.msra.mxu0 %v1701
  %1737 = vmatprep.subr.mxu0 0.0
  %1738 = vmatpush1.msra.mxu0 %v1700
  %1739 = vmatprep.subr.mxu0 0.0
  %1740 = vmatpush2.msra.mxu0 0.0
  %1741 = vmatprep.subr.mxu0 0.0
  %1742 = vmatpush2.msra.mxu0 0.0
  %1743 = vmatprep.subr.mxu0 0.0
  %1744 = vmatpush2.msra.mxu0 0.0
  %1745 = vmatprep.subr.mxu0 0.0
  %1746 = vmatpush2.msra.mxu0 0.0
  %1747 = vmatprep.subr.mxu0 0.0
  %1748 = vmatpush2.msra.mxu0 0.0
  %1749 = vmatprep.subr.mxu0 0.0
  %1750 = vmatpush2.msra.mxu0 0.0
  %1751 = vmatprep.subr.mxu0 0.0
  %1752 = vmatpush2.msra.mxu0 0.0
  %1753 = vmatprep.subr.mxu0 0.0
  %1754 = vmatpush2.msra.mxu0 0.0
  %1755 = vmatprep.subr.mxu0 0.0
  %1756 = vmatpush2.msra.mxu0 0.0
  %1757 = vmatprep.subr.mxu0 0.0
  %1758 = vmatpush2.msra.mxu0 0.0
  %1759 = vmatprep.subr.mxu0 0.0
  %1760 = vmatpush2.msra.mxu0 0.0
  %1761 = vmatprep.subr.mxu0 0.0
  %1762 = vmatpush2.msra.mxu0 0.0
  %1763 = vmatprep.subr.mxu0 0.0
  %1764 = vmatpush2.msra.mxu0 0.0
  %1765 = vmatprep.subr.mxu0 0.0
  %1766 = vmatpush2.msra.mxu0 0.0
  %1767 = vmatprep.subr.mxu0 0.0
  %1768 = vmatpush2.msra.mxu0 0.0
  %1769 = vmatprep.subr.mxu0 0.0
  %1770 = vmatpush2.msra.mxu0 0.0
  %1771 = vmatprep.mubr.f32.mxu0 0.0
  %1772 = vmatmul.mubr.f32.gmra.mxu0 %v1705
  %v1773 = vpop.f32.mrf.mxu0
  %v1774 = vadd.f32 %v1704, %v1773
  %v1775 = vpop.f32.mrf.mxu0
  %1776 = vdwg.mxu0
  %v1777 = vxor.u32 %v1774, 2147483648
  %v1778 = vmul.f32 %v1777, 1.442695
  %v1779 = vpow.pop %v1778
  %v1780 = vadd.f32 %v1779, 1.0
  %v1781 = vrcp.pop %v1780
  %v1782 = vmul.f32 1.0, %v1781
  %v1783 = vtanh.pop %v1774
  %v1784 = vmul.f32 %v1782, %v1579
  %1786 = vrot.lane.b32.xlu0 %v1783, 64
  %v1787 = vpop.permute.xlu0 %1786
  %v1789 = vmul.f32 %v1782, %v1787
  %1791 = vrot.lane.b32.xlu0 %v1789, 32
  %v1792 = vpop.permute.xlu0 %1791
  %v1794 = vadd.f32 %v1784, %v1792
  %v1795 = vtanh.pop %v1794
  %1797 = vrot.lane.b32.xlu0 %v1795, 64
  %v1798 = vpop.permute.xlu0 %1797
  %v1800 = vmul.f32 %v1782, %v1798
  %1802 = vrot.lane.b32.xlu0 %v1800, 32
  %v1803 = vpop.permute.xlu0 %1802
  %1805 = vst.msk [vmem:[%s53] sm:$0xff] %vm76, %v1803
  %1806 = vst.msk [vmem:[#allocation2] sm:$0xff] %vm76, %v1696
  %1808 = vrot.lane.b32.xlu0 %v1687, 96
  %v1809 = vpop.permute.xlu0 %1808
  %1811 = vst.msk [vmem:[#allocation3] sm:$0xff] %vm76, %v1809
  %1812 = vst.msk [vmem:[%s66] sm:$0xff] %vm76, %v1803
  %1814 = vrot.lane.b32.xlu0 %v1794, 96
  %v1815 = vpop.permute.xlu0 %1814
  %1817 = vst.msk [vmem:[%s69] sm:$0xff] %vm76, %v1815
  // Predicated region
  $region22: #{variable_lstm_net_forward.2} parent=0 // pred_check
    %p1818 = pneg %p56
  $region23: #{variable_lstm_net_forward.2} parent=0 // pred_check_branch
    %1820 = sbr.rel (%p1818) target = $region25
  $region24: #{variable_lstm_net_forward.2} parent=0 // pred_region
    %1821 = vst.msk [vmem:[%s6] sm:$0xff] %vm76, %v1696
    %s1822 = scalar_lea.vmem %s6, 8
    %1823 = vst.msk [vmem:[%s1822] sm:$0xff] %vm76, %v1803
  $region25: #{variable_lstm_net_forward.2} parent=0 // pred_fallthru
    _
  %s1824 = ssub.s32 0, 0
  %s1825 = smul.u32 8, %s1824
  %p1826 = scmp.lt.s32.totalorder %s1825, 7
  %s1827 = scalar_select %p1826, %s1825, 7
  %s1828 = smul.addr %s1827, 8
  %s1829 = scalar_lea.vmem %s5, %s1828
  // Predicated region
  $region26: #{variable_lstm_net_forward.2} parent=0 // pred_check
    _
  $region27: #{variable_lstm_net_forward.2} parent=0 // pred_check_branch
    %1831 = sbr.rel (0) target = $region29
  $region28: #{variable_lstm_net_forward.2} parent=0 // pred_region
    _
  $region29: #{variable_lstm_net_forward.2} parent=0 // pred_fallthru
    _
  // Predicated region
  $region30: #{variable_lstm_net_forward.2} parent=0 // pred_check
    _
  $region31: #{variable_lstm_net_forward.2} parent=0 // pred_check_branch
    %1833 = sbr.rel (0) target = $region33
  $region32: #{variable_lstm_net_forward.2} parent=0 // pred_region
    %s1834 = ssub.s32 0, 0
    %s1835 = smul.u32 8, %s1834
  $region33: #{variable_lstm_net_forward.2} parent=0 // pred_fallthru
    _
  // Predicated region
  $region34: #{variable_lstm_net_forward.2} parent=0 // pred_check
    _
  $region35: #{variable_lstm_net_forward.2} parent=0 // pred_check_branch
    %1837 = sbr.rel (0) target = $region37
  $region36: #{variable_lstm_net_forward.2} parent=0 // pred_region
    _
  $region37: #{variable_lstm_net_forward.2} parent=0 // pred_fallthru
    _
  // Predicated region
  $region38: #{variable_lstm_net_forward.2} parent=0 // pred_check
    _
  $region39: #{variable_lstm_net_forward.2} parent=0 // pred_check_branch
    %1839 = sbr.rel (0) target = $region41
  $region40: #{variable_lstm_net_forward.2} parent=0 // pred_region
    _
  $region41: #{variable_lstm_net_forward.2} parent=0 // pred_fallthru
    _
  // Predicated region
  $region42: #{variable_lstm_net_forward.2} parent=0 // pred_check
    _
  $region43: #{variable_lstm_net_forward.2} parent=0 // pred_check_branch
    %1841 = sbr.rel (0) target = $region45
  $region44: #{variable_lstm_net_forward.2} parent=0 // pred_region
    %s1842 = ssub.s32 0, 0
    %s1843 = smul.u32 8, %s1842
    %p1844 = scmp.lt.s32.totalorder %s1843, 7
    %s1845 = scalar_select %p1844, %s1843, 7
    %s1846 = smul.addr %s1845, 8
    %s1847 = scalar_lea.vmem %s5, %s1846
  $region45: #{variable_lstm_net_forward.2} parent=0 // pred_fallthru
    _
  // Predicated region
  $region46: #{variable_lstm_net_forward.2} parent=0 // pred_check
    _
  $region47: #{variable_lstm_net_forward.2} parent=0 // pred_check_branch
    %1849 = sbr.rel (0) target = $region49
  $region48: #{variable_lstm_net_forward.2} parent=0 // pred_region
    _
  $region49: #{variable_lstm_net_forward.2} parent=0 // pred_fallthru
    _

</llo_original>
